<compile_context>
chip_gen: v7x
topology: tpu7x:2x2x1
jax: 0.10.0
libtpu: 0.0.40
codegen_flags: <defaults>
</compile_context>

<pallas_src>
import functools

import jax
import jax.numpy as jnp
from jax.experimental import pallas as pl
from jax.experimental.pallas import tpu as pltpu


# ----------------------------------------------------------------------------
# Pallas fused GEMM kernel:  O = A @ B + bias [+ residual] [ReLU]
# ----------------------------------------------------------------------------
def _round_up(x, m):
    return ((x + m - 1) // m) * m


def _gemm_kernel(*refs, relu, has_residual):
    if has_residual:
        a_ref, b_ref, bias_ref, res_ref, o_ref = refs
    else:
        a_ref, b_ref, bias_ref, o_ref = refs
        res_ref = None

    k = pl.program_id(2)

    @pl.when(k == 0)
    def _():
        o_ref[...] = jnp.zeros_like(o_ref)

    # bf16 x bf16 -> f32 accumulation directly in the (resident) output block.
    o_ref[...] += jnp.dot(a_ref[...], b_ref[...],
                          preferred_element_type=jnp.float32)

    @pl.when(k == pl.num_programs(2) - 1)
    def _():
        r = o_ref[...] + bias_ref[...]
        if has_residual:
            r = r + res_ref[...]
        if relu:
            r = jnp.maximum(r, 0.0)
        o_ref[...] = r


def _pick_tile(dim, target):
    """Full-dim block if it fits in one tile (no padding); else aligned tiles."""
    if dim <= target:
        return dim, dim
    return target, _round_up(dim, target)


def matmul_bias_act(A, B, bias, residual=None, relu=False, use_bf16=True):
    """A:(M,K) @ B:(K,N) + bias:(N,) [+ residual:(M,N)] [ReLU], via Pallas."""
    M, K = A.shape
    K2, N = B.shape
    assert K == K2

    # 512 tiles: multiple of 256 (full MXU width on v6e/v7x), ~6 MiB total
    # double-buffered footprint -> safe even for v7x's 64 MiB VMEM.
    tm, Mp = _pick_tile(M, 512)
    tn, Np = _pick_tile(N, 512)
    tk, Kp = _pick_tile(K, 512)

    cdt = jnp.bfloat16 if use_bf16 else jnp.float32
    A_c = A.astype(cdt)
    B_c = B.astype(cdt)
    if (Mp, Kp) != (M, K):
        A_c = jnp.pad(A_c, ((0, Mp - M), (0, Kp - K)))
    if (Kp, Np) != (K, N):
        B_c = jnp.pad(B_c, ((0, Kp - K), (0, Np - N)))
    bias_p = bias.astype(jnp.float32).reshape(1, N)
    if Np != N:
        bias_p = jnp.pad(bias_p, ((0, 0), (0, Np - N)))

    inputs = [A_c, B_c, bias_p]
    in_specs = [
        pl.BlockSpec((tm, tk), lambda i, j, k: (i, k)),
        pl.BlockSpec((tk, tn), lambda i, j, k: (k, j)),
        pl.BlockSpec((1, tn), lambda i, j, k: (0, j)),
    ]
    if residual is not None:
        R = residual.astype(jnp.float32)
        if (Mp, Np) != (M, N):
            R = jnp.pad(R, ((0, Mp - M), (0, Np - N)))
        inputs.append(R)
        in_specs.append(pl.BlockSpec((tm, tn), lambda i, j, k: (i, j)))

    kernel = functools.partial(_gemm_kernel, relu=relu,
                               has_residual=residual is not None)

    out = pl.pallas_call(
        kernel,
        out_shape=jax.ShapeDtypeStruct((Mp, Np), jnp.float32),
        grid=(Mp // tm, Np // tn, Kp // tk),
        in_specs=in_specs,
        out_specs=pl.BlockSpec((tm, tn), lambda i, j, k: (i, j)),
        compiler_params=pltpu.CompilerParams(
            dimension_semantics=("parallel", "parallel", "arbitrary")),
    )(*inputs)

    if (Mp, Np) != (M, N):
        out = out[:M, :N]
    return out


# ----------------------------------------------------------------------------
# Convolutions on NHWC built on the fused Pallas GEMM.
# ----------------------------------------------------------------------------
def conv1x1(x, w, bias, stride=1, relu=False, residual=None):
    """x:(N,H,W,Cin) NHWC, w:(Cout,Cin,1,1). Optional fused residual (+ReLU)."""
    if stride > 1:
        x = x[:, ::stride, ::stride, :]
    N, OH, OW, Cin = x.shape
    Cout = w.shape[0]
    A = x.reshape(N * OH * OW, Cin)
    Bm = w.reshape(Cout, Cin).T                           # (Cin, Cout)
    R = residual.reshape(N * OH * OW, Cout) if residual is not None else None
    out = matmul_bias_act(A, Bm, bias, residual=R, relu=relu)
    return out.reshape(N, OH, OW, Cout)


def conv3x3_dilated(x, w, bias, dilation=1, relu=True):
    """x:(N,H,W,Cin) NHWC, w:(Cout,Cin,3,3), stride 1, padding per Bottleneck1."""
    N, H, W, Cin = x.shape
    Cout = w.shape[0]
    padding = 1
    if dilation == 2:
        padding = 2
    elif dilation == 4:
        padding = 4
    xp = jnp.pad(x, ((0, 0), (padding, padding), (padding, padding), (0, 0)))
    OH = H + 2 * padding - 2 * dilation
    OW = W + 2 * padding - 2 * dilation
    # im2col with columns ordered (kh, kw, cin)
    patches = [xp[:, kh * dilation:kh * dilation + OH,
                  kw * dilation:kw * dilation + OW, :]
               for kh in range(3) for kw in range(3)]
    A = jnp.stack(patches, axis=3).reshape(N * OH * OW, 9 * Cin)
    Bm = w.transpose(2, 3, 1, 0).reshape(9 * Cin, Cout)   # rows in (kh,kw,cin) order
    out = matmul_bias_act(A, Bm, bias, relu=relu)
    return out.reshape(N, OH, OW, Cout)


# ----------------------------------------------------------------------------
# Parameters: conv weights + frozen (eval-mode) BatchNorm folded into them.
# ----------------------------------------------------------------------------
def fold_bn(w, gamma, beta, mean, var, eps=1e-5):
    scale = gamma / jnp.sqrt(var + eps)
    w_f = w * scale[:, None, None, None]
    b_f = beta - mean * scale
    return w_f, b_f


def init_params(key, inplanes, planes, use_downsample=False):
    expansion = 4
    ks = jax.random.split(key, 8)

    def conv_w(k, cout, cin, kh, kw):
        std = (2.0 / (cin * kh * kw)) ** 0.5
        return std * jax.random.normal(k, (cout, cin, kh, kw), jnp.float32)

    def bn(k, c):
        k1, k2, k3, k4 = jax.random.split(k, 4)
        gamma = 1.0 + 0.1 * jax.random.normal(k1, (c,), jnp.float32)
        beta = 0.1 * jax.random.normal(k2, (c,), jnp.float32)
        mean = 0.1 * jax.random.normal(k3, (c,), jnp.float32)
        var = 1.0 + 0.1 * jax.random.uniform(k4, (c,), jnp.float32)
        return gamma, beta, mean, var

    w1, b1 = fold_bn(conv_w(ks[0], planes, inplanes, 1, 1), *bn(ks[1], planes))
    w2, b2 = fold_bn(conv_w(ks[2], planes, planes, 3, 3), *bn(ks[3], planes))
    w3, b3 = fold_bn(conv_w(ks[4], planes * expansion, planes, 1, 1),
                     *bn(ks[5], planes * expansion))
    params = {'w1': w1, 'b1': b1, 'w2': w2, 'b2': b2, 'w3': w3, 'b3': b3,
              'downsample': None}
    if use_downsample:
        wd, bd = fold_bn(conv_w(ks[6], planes * expansion, inplanes, 1, 1),
                         *bn(ks[7], planes * expansion))
        params['downsample'] = (wd, bd)
    return params


# ----------------------------------------------------------------------------
# Forward pass (mirrors Bottleneck1.forward).
# Frozen BatchNorm is applied in eval mode (running stats), matching how these
# blocks are used with requires_grad=False; it is folded into the conv GEMMs.
# ----------------------------------------------------------------------------
def bottleneck1_forward(x_nchw, params, stride=1, dilation=1):
    x = jnp.transpose(x_nchw, (0, 2, 3, 1))               # NHWC internally

    if params.get('downsample') is not None:
        wd, bd = params['downsample']
        residual = conv1x1(x, wd, bd, stride=stride, relu=False)
    else:
        residual = x

    h = conv1x1(x, params['w1'], params['b1'], stride=stride, relu=True)   # conv1+bn1+relu
    h = conv3x3_dilated(h, params['w2'], params['b2'],
                        dilation=dilation, relu=True)                       # conv2+bn2+relu
    # conv3 + bn3 + residual add + final ReLU fused into one GEMM epilogue
    out = conv1x1(h, params['w3'], params['b3'], stride=1, relu=True,
                  residual=residual)
    return jnp.transpose(out, (0, 3, 1, 2))               # back to NCHW


# ----------------------------------------------------------------------------
if __name__ == "__main__":
    key = jax.random.PRNGKey(0)
    k_params, k_x = jax.random.split(key)

    # downsample=None requires inplanes == planes * expansion and stride == 1
    batch, inplanes, planes, H, W = 2, 16, 4, 16, 16
    stride, dilation = 1, 2

    params = init_params(k_params, inplanes, planes, use_downsample=False)
    x = jax.random.normal(k_x, (batch, inplanes, H, W), jnp.float32)

    fwd = jax.jit(functools.partial(bottleneck1_forward,
                                    stride=stride, dilation=dilation))
    out = jax.block_until_ready(fwd(x, params))

    assert out.shape == (batch, planes * 4, H, W), out.shape
    assert out.dtype == jnp.float32
    assert bool(jnp.all(jnp.isfinite(out)))
    assert bool(jnp.all(out >= 0.0))  # final ReLU
    print("KERNEL_OK")
</pallas_src>

<mosaic_0001>
module attributes {stable_mosaic.version = 11 : i64} {
  func.func @_gemm_kernel(%arg0: i32, %arg1: i32, %arg2: i32, %arg3: memref<512x16xbf16, #tpu.memory_space<vmem>>, %arg4: memref<16x4xbf16, #tpu.memory_space<vmem>>, %arg5: memref<1x4xf32, #tpu.memory_space<vmem>>, %arg6: memref<512x4xf32, #tpu.memory_space<vmem>>) attributes {dimension_semantics = [#tpu.dimension_semantics<parallel>, #tpu.dimension_semantics<parallel>, #tpu.dimension_semantics<arbitrary>], iteration_bounds = array<i64: 1, 1, 1>, scalar_prefetch = 0 : i64, scratch_operands = 0 : i64, tpu.core_type = #tpu.core_type<tc>, window_params = [{transform_indices = @transform_0, window_bounds = array<i64: 512, 16>}, {transform_indices = @transform_1, window_bounds = array<i64: 16, 4>}, {transform_indices = @transform_2, window_bounds = array<i64: 1, 4>}, {transform_indices = @transform_3, window_bounds = array<i64: 512, 4>}]} {
    %c0_i32 = arith.constant 0 : i32
    %0 = arith.cmpi eq, %arg2, %c0_i32 : i32
    %1 = arith.extui %0 : i1 to i32
    %c0_i32_0 = arith.constant 0 : i32
    %2 = arith.cmpi ne, %1, %c0_i32_0 : i32
    scf.if %2 {
      %cst_10 = arith.constant 0.000000e+00 : f32
      %12 = vector.broadcast %cst_10 : f32 to vector<512x4xf32>
      %c0_11 = arith.constant 0 : index
      %c0_12 = arith.constant 0 : index
      %13 = vector.load %arg6[%c0_11, %c0_12] : memref<512x4xf32, #tpu.memory_space<vmem>>, vector<512x4xf32>
      tpu.vector_store %arg6[%c0_11, %c0_12], %12 {strides = array<i32>} : memref<512x4xf32, #tpu.memory_space<vmem>>, vector<512x4xf32>,
    } else {
    }
    %c0 = arith.constant 0 : index
    %c0_1 = arith.constant 0 : index
    %3 = vector.load %arg6[%c0, %c0_1] : memref<512x4xf32, #tpu.memory_space<vmem>>, vector<512x4xf32>
    %c0_2 = arith.constant 0 : index
    %c0_3 = arith.constant 0 : index
    %4 = vector.load %arg3[%c0_2, %c0_3] : memref<512x16xbf16, #tpu.memory_space<vmem>>, vector<512x16xbf16>
    %c0_4 = arith.constant 0 : index
    %c0_5 = arith.constant 0 : index
    %5 = vector.load %arg4[%c0_4, %c0_5] : memref<16x4xbf16, #tpu.memory_space<vmem>>, vector<16x4xbf16>
    %cst = arith.constant dense<0.000000e+00> : vector<512x4xf32>
    %6 = tpu.matmul %4, %5, %cst {dimension_numbers = #tpu.dot_dimension_numbers<[1], [0], [0], [1], [0, 0, 1, 1], [], []>} : vector<512x16xbf16>, vector<16x4xbf16>, vector<512x4xf32> -> vector<512x4xf32>
    %7 = arith.addf %3, %6 : vector<512x4xf32>
    %c0_6 = arith.constant 0 : index
    %c0_7 = arith.constant 0 : index
    %8 = vector.load %arg6[%c0_6, %c0_7] : memref<512x4xf32, #tpu.memory_space<vmem>>, vector<512x4xf32>
    tpu.vector_store %arg6[%c0_6, %c0_7], %7 {strides = array<i32>} : memref<512x4xf32, #tpu.memory_space<vmem>>, vector<512x4xf32>,
    %c0_i32_8 = arith.constant 0 : i32
    %9 = arith.cmpi eq, %arg2, %c0_i32_8 : i32
    %10 = arith.extui %9 : i1 to i32
    %c0_i32_9 = arith.constant 0 : i32
    %11 = arith.cmpi ne, %10, %c0_i32_9 : i32
    scf.if %11 {
      %c0_10 = arith.constant 0 : index
      %c0_11 = arith.constant 0 : index
      %12 = vector.load %arg6[%c0_10, %c0_11] : memref<512x4xf32, #tpu.memory_space<vmem>>, vector<512x4xf32>
      %c0_12 = arith.constant 0 : index
      %c0_13 = arith.constant 0 : index
      %13 = vector.load %arg5[%c0_12, %c0_13] : memref<1x4xf32, #tpu.memory_space<vmem>>, vector<1x4xf32>
      %14 = vector.broadcast %13 : vector<1x4xf32> to vector<512x4xf32>
      %15 = arith.addf %12, %14 : vector<512x4xf32>
      %cst_14 = arith.constant 0.000000e+00 : f32
      %16 = vector.broadcast %cst_14 : f32 to vector<512x4xf32>
      %17 = arith.maximumf %15, %16 : vector<512x4xf32>
      %c0_15 = arith.constant 0 : index
      %c0_16 = arith.constant 0 : index
      %18 = vector.load %arg6[%c0_15, %c0_16] : memref<512x4xf32, #tpu.memory_space<vmem>>, vector<512x4xf32>
      tpu.vector_store %arg6[%c0_15, %c0_16], %17 {strides = array<i32>} : memref<512x4xf32, #tpu.memory_space<vmem>>, vector<512x4xf32>,
    } else {
    }
    return
  }
  func.func @transform_0(%arg0: i32, %arg1: i32, %arg2: i32) -> (i32, i32) {
    %c0_i32 = arith.constant 0 : i32
    return %arg0, %arg2 : i32, i32
  }
  func.func @transform_1(%arg0: i32, %arg1: i32, %arg2: i32) -> (i32, i32) {
    %c0_i32 = arith.constant 0 : i32
    return %arg2, %arg1 : i32, i32
  }
  func.func @transform_2(%arg0: i32, %arg1: i32, %arg2: i32) -> (i32, i32) {
    %c0_i32 = arith.constant 0 : i32
    %c0_i32_0 = arith.constant 0 : i32
    return %c0_i32, %arg1 : i32, i32
  }
  func.func @transform_3(%arg0: i32, %arg1: i32, %arg2: i32) -> (i32, i32) {
    %c0_i32 = arith.constant 0 : i32
    return %arg0, %arg1 : i32, i32
  }
}

module attributes {stable_mosaic.version = 11 : i64} {
  func.func @_gemm_kernel(%arg0: i32, %arg1: i32, %arg2: i32, %arg3: memref<512x36xbf16, #tpu.memory_space<vmem>>, %arg4: memref<36x4xbf16, #tpu.memory_space<vmem>>, %arg5: memref<1x4xf32, #tpu.memory_space<vmem>>, %arg6: memref<512x4xf32, #tpu.memory_space<vmem>>) attributes {dimension_semantics = [#tpu.dimension_semantics<parallel>, #tpu.dimension_semantics<parallel>, #tpu.dimension_semantics<arbitrary>], iteration_bounds = array<i64: 1, 1, 1>, scalar_prefetch = 0 : i64, scratch_operands = 0 : i64, tpu.core_type = #tpu.core_type<tc>, window_params = [{transform_indices = @transform_0, window_bounds = array<i64: 512, 36>}, {transform_indices = @transform_1, window_bounds = array<i64: 36, 4>}, {transform_indices = @transform_2, window_bounds = array<i64: 1, 4>}, {transform_indices = @transform_3, window_bounds = array<i64: 512, 4>}]} {
    %c0_i32 = arith.constant 0 : i32
    %0 = arith.cmpi eq, %arg2, %c0_i32 : i32
    %1 = arith.extui %0 : i1 to i32
    %c0_i32_0 = arith.constant 0 : i32
    %2 = arith.cmpi ne, %1, %c0_i32_0 : i32
    scf.if %2 {
      %cst_10 = arith.constant 0.000000e+00 : f32
      %12 = vector.broadcast %cst_10 : f32 to vector<512x4xf32>
      %c0_11 = arith.constant 0 : index
      %c0_12 = arith.constant 0 : index
      %13 = vector.load %arg6[%c0_11, %c0_12] : memref<512x4xf32, #tpu.memory_space<vmem>>, vector<512x4xf32>
      tpu.vector_store %arg6[%c0_11, %c0_12], %12 {strides = array<i32>} : memref<512x4xf32, #tpu.memory_space<vmem>>, vector<512x4xf32>,
    } else {
    }
    %c0 = arith.constant 0 : index
    %c0_1 = arith.constant 0 : index
    %3 = vector.load %arg6[%c0, %c0_1] : memref<512x4xf32, #tpu.memory_space<vmem>>, vector<512x4xf32>
    %c0_2 = arith.constant 0 : index
    %c0_3 = arith.constant 0 : index
    %4 = vector.load %arg3[%c0_2, %c0_3] : memref<512x36xbf16, #tpu.memory_space<vmem>>, vector<512x36xbf16>
    %c0_4 = arith.constant 0 : index
    %c0_5 = arith.constant 0 : index
    %5 = vector.load %arg4[%c0_4, %c0_5] : memref<36x4xbf16, #tpu.memory_space<vmem>>, vector<36x4xbf16>
    %cst = arith.constant dense<0.000000e+00> : vector<512x4xf32>
    %6 = tpu.matmul %4, %5, %cst {dimension_numbers = #tpu.dot_dimension_numbers<[1], [0], [0], [1], [0, 0, 1, 1], [], []>} : vector<512x36xbf16>, vector<36x4xbf16>, vector<512x4xf32> -> vector<512x4xf32>
    %7 = arith.addf %3, %6 : vector<512x4xf32>
    %c0_6 = arith.constant 0 : index
    %c0_7 = arith.constant 0 : index
    %8 = vector.load %arg6[%c0_6, %c0_7] : memref<512x4xf32, #tpu.memory_space<vmem>>, vector<512x4xf32>
    tpu.vector_store %arg6[%c0_6, %c0_7], %7 {strides = array<i32>} : memref<512x4xf32, #tpu.memory_space<vmem>>, vector<512x4xf32>,
    %c0_i32_8 = arith.constant 0 : i32
    %9 = arith.cmpi eq, %arg2, %c0_i32_8 : i32
    %10 = arith.extui %9 : i1 to i32
    %c0_i32_9 = arith.constant 0 : i32
    %11 = arith.cmpi ne, %10, %c0_i32_9 : i32
    scf.if %11 {
      %c0_10 = arith.constant 0 : index
      %c0_11 = arith.constant 0 : index
      %12 = vector.load %arg6[%c0_10, %c0_11] : memref<512x4xf32, #tpu.memory_space<vmem>>, vector<512x4xf32>
      %c0_12 = arith.constant 0 : index
      %c0_13 = arith.constant 0 : index
      %13 = vector.load %arg5[%c0_12, %c0_13] : memref<1x4xf32, #tpu.memory_space<vmem>>, vector<1x4xf32>
      %14 = vector.broadcast %13 : vector<1x4xf32> to vector<512x4xf32>
      %15 = arith.addf %12, %14 : vector<512x4xf32>
      %cst_14 = arith.constant 0.000000e+00 : f32
      %16 = vector.broadcast %cst_14 : f32 to vector<512x4xf32>
      %17 = arith.maximumf %15, %16 : vector<512x4xf32>
      %c0_15 = arith.constant 0 : index
      %c0_16 = arith.constant 0 : index
      %18 = vector.load %arg6[%c0_15, %c0_16] : memref<512x4xf32, #tpu.memory_space<vmem>>, vector<512x4xf32>
      tpu.vector_store %arg6[%c0_15, %c0_16], %17 {strides = array<i32>} : memref<512x4xf32, #tpu.memory_space<vmem>>, vector<512x4xf32>,
    } else {
    }
    return
  }
  func.func @transform_0(%arg0: i32, %arg1: i32, %arg2: i32) -> (i32, i32) {
    %c0_i32 = arith.constant 0 : i32
    return %arg0, %arg2 : i32, i32
  }
  func.func @transform_1(%arg0: i32, %arg1: i32, %arg2: i32) -> (i32, i32) {
    %c0_i32 = arith.constant 0 : i32
    return %arg2, %arg1 : i32, i32
  }
  func.func @transform_2(%arg0: i32, %arg1: i32, %arg2: i32) -> (i32, i32) {
    %c0_i32 = arith.constant 0 : i32
    %c0_i32_0 = arith.constant 0 : i32
    return %c0_i32, %arg1 : i32, i32
  }
  func.func @transform_3(%arg0: i32, %arg1: i32, %arg2: i32) -> (i32, i32) {
    %c0_i32 = arith.constant 0 : i32
    return %arg0, %arg1 : i32, i32
  }
}

module attributes {stable_mosaic.version = 11 : i64} {
  func.func @_gemm_kernel(%arg0: i32, %arg1: i32, %arg2: i32, %arg3: memref<512x4xbf16, #tpu.memory_space<vmem>>, %arg4: memref<4x16xbf16, #tpu.memory_space<vmem>>, %arg5: memref<1x16xf32, #tpu.memory_space<vmem>>, %arg6: memref<512x16xf32, #tpu.memory_space<vmem>>, %arg7: memref<512x16xf32, #tpu.memory_space<vmem>>) attributes {dimension_semantics = [#tpu.dimension_semantics<parallel>, #tpu.dimension_semantics<parallel>, #tpu.dimension_semantics<arbitrary>], iteration_bounds = array<i64: 1, 1, 1>, scalar_prefetch = 0 : i64, scratch_operands = 0 : i64, tpu.core_type = #tpu.core_type<tc>, window_params = [{transform_indices = @transform_0, window_bounds = array<i64: 512, 4>}, {transform_indices = @transform_1, window_bounds = array<i64: 4, 16>}, {transform_indices = @transform_2, window_bounds = array<i64: 1, 16>}, {transform_indices = @transform_3, window_bounds = array<i64: 512, 16>}, {transform_indices = @transform_4, window_bounds = array<i64: 512, 16>}]} {
    %c0_i32 = arith.constant 0 : i32
    %0 = arith.cmpi eq, %arg2, %c0_i32 : i32
    %1 = arith.extui %0 : i1 to i32
    %c0_i32_0 = arith.constant 0 : i32
    %2 = arith.cmpi ne, %1, %c0_i32_0 : i32
    scf.if %2 {
      %cst_10 = arith.constant 0.000000e+00 : f32
      %12 = vector.broadcast %cst_10 : f32 to vector<512x16xf32>
      %c0_11 = arith.constant 0 : index
      %c0_12 = arith.constant 0 : index
      %13 = vector.load %arg7[%c0_11, %c0_12] : memref<512x16xf32, #tpu.memory_space<vmem>>, vector<512x16xf32>
      tpu.vector_store %arg7[%c0_11, %c0_12], %12 {strides = array<i32>} : memref<512x16xf32, #tpu.memory_space<vmem>>, vector<512x16xf32>,
    } else {
    }
    %c0 = arith.constant 0 : index
    %c0_1 = arith.constant 0 : index
    %3 = vector.load %arg7[%c0, %c0_1] : memref<512x16xf32, #tpu.memory_space<vmem>>, vector<512x16xf32>
    %c0_2 = arith.constant 0 : index
    %c0_3 = arith.constant 0 : index
    %4 = vector.load %arg3[%c0_2, %c0_3] : memref<512x4xbf16, #tpu.memory_space<vmem>>, vector<512x4xbf16>
    %c0_4 = arith.constant 0 : index
    %c0_5 = arith.constant 0 : index
    %5 = vector.load %arg4[%c0_4, %c0_5] : memref<4x16xbf16, #tpu.memory_space<vmem>>, vector<4x16xbf16>
    %cst = arith.constant dense<0.000000e+00> : vector<512x16xf32>
    %6 = tpu.matmul %4, %5, %cst {dimension_numbers = #tpu.dot_dimension_numbers<[1], [0], [0], [1], [0, 0, 1, 1], [], []>} : vector<512x4xbf16>, vector<4x16xbf16>, vector<512x16xf32> -> vector<512x16xf32>
    %7 = arith.addf %3, %6 : vector<512x16xf32>
    %c0_6 = arith.constant 0 : index
    %c0_7 = arith.constant 0 : index
    %8 = vector.load %arg7[%c0_6, %c0_7] : memref<512x16xf32, #tpu.memory_space<vmem>>, vector<512x16xf32>
    tpu.vector_store %arg7[%c0_6, %c0_7], %7 {strides = array<i32>} : memref<512x16xf32, #tpu.memory_space<vmem>>, vector<512x16xf32>,
    %c0_i32_8 = arith.constant 0 : i32
    %9 = arith.cmpi eq, %arg2, %c0_i32_8 : i32
    %10 = arith.extui %9 : i1 to i32
    %c0_i32_9 = arith.constant 0 : i32
    %11 = arith.cmpi ne, %10, %c0_i32_9 : i32
    scf.if %11 {
      %c0_10 = arith.constant 0 : index
      %c0_11 = arith.constant 0 : index
      %12 = vector.load %arg7[%c0_10, %c0_11] : memref<512x16xf32, #tpu.memory_space<vmem>>, vector<512x16xf32>
      %c0_12 = arith.constant 0 : index
      %c0_13 = arith.constant 0 : index
      %13 = vector.load %arg5[%c0_12, %c0_13] : memref<1x16xf32, #tpu.memory_space<vmem>>, vector<1x16xf32>
      %14 = vector.broadcast %13 : vector<1x16xf32> to vector<512x16xf32>
      %15 = arith.addf %12, %14 : vector<512x16xf32>
      %c0_14 = arith.constant 0 : index
      %c0_15 = arith.constant 0 : index
      %16 = vector.load %arg6[%c0_14, %c0_15] : memref<512x16xf32, #tpu.memory_space<vmem>>, vector<512x16xf32>
      %17 = arith.addf %15, %16 : vector<512x16xf32>
      %cst_16 = arith.constant 0.000000e+00 : f32
      %18 = vector.broadcast %cst_16 : f32 to vector<512x16xf32>
      %19 = arith.maximumf %17, %18 : vector<512x16xf32>
      %c0_17 = arith.constant 0 : index
      %c0_18 = arith.constant 0 : index
      %20 = vector.load %arg7[%c0_17, %c0_18] : memref<512x16xf32, #tpu.memory_space<vmem>>, vector<512x16xf32>
      tpu.vector_store %arg7[%c0_17, %c0_18], %19 {strides = array<i32>} : memref<512x16xf32, #tpu.memory_space<vmem>>, vector<512x16xf32>,
    } else {
    }
    return
  }
  func.func @transform_0(%arg0: i32, %arg1: i32, %arg2: i32) -> (i32, i32) {
    %c0_i32 = arith.constant 0 : i32
    return %arg0, %arg2 : i32, i32
  }
  func.func @transform_1(%arg0: i32, %arg1: i32, %arg2: i32) -> (i32, i32) {
    %c0_i32 = arith.constant 0 : i32
    return %arg2, %arg1 : i32, i32
  }
  func.func @transform_2(%arg0: i32, %arg1: i32, %arg2: i32) -> (i32, i32) {
    %c0_i32 = arith.constant 0 : i32
    %c0_i32_0 = arith.constant 0 : i32
    return %c0_i32, %arg1 : i32, i32
  }
  func.func @transform_3(%arg0: i32, %arg1: i32, %arg2: i32) -> (i32, i32) {
    %c0_i32 = arith.constant 0 : i32
    return %arg0, %arg1 : i32, i32
  }
  func.func @transform_4(%arg0: i32, %arg1: i32, %arg2: i32) -> (i32, i32) {
    %c0_i32 = arith.constant 0 : i32
    return %arg0, %arg1 : i32, i32
  }
}

</mosaic_0001>

<llo_original>
// kernel: bottleneck1_forward.3
$region0: #{bottleneck1_forward.3}
  #allocation0 [shape = 'u32[]', space=smem, size = 0x4, offset = 0x4, fixed_abs, tag = 'smem constant byte address 0x4 - core index']
  #allocation1 [shape = 'u32[144,128]{1,0:T(1,128)}', space=vmem, size = 0x12000, scoped, tag = 'internal scratch']
  %s0 = inlined_call_operand.vmem [shape: bf16[512,16], index: 0, kind: input, shape index: {}]
  %s1 = inlined_call_operand.vmem [shape: bf16[16,4], index: 1, kind: input, shape index: {}]
  %s2 = inlined_call_operand.vmem [shape: f32[1,4], index: 2, kind: input, shape index: {}]
  %s3 = inlined_call_operand.vmem [shape: f32[512,4], index: 3, kind: output, shape index: {}]
  %s4 = sld [smem:[#allocation0]]
  $region30: #{bottleneck1_forward.3} parent=0
    _
  %s6 = ssub.s32 1, %s4
  %s7 = scalar_select 0, %s6, %s4
  // Predicated region
  $region2: #{bottleneck1_forward.3} parent=0 // pred_check
    _
  $region3: #{bottleneck1_forward.3} parent=0 // pred_check_branch
    %9 = sbr.rel (0) target = $region5
  $region4: #{bottleneck1_forward.3} parent=0 // pred_region
    _
  $region5: #{bottleneck1_forward.3} parent=0 // pred_fallthru
    _
  // Predicated region
  $region6: #{bottleneck1_forward.3} parent=0 // pred_check
    _
  $region7: #{bottleneck1_forward.3} parent=0 // pred_check_branch
    %11 = sbr.rel (0) target = $region9
  $region8: #{bottleneck1_forward.3} parent=0 // pred_region
    _
  $region9: #{bottleneck1_forward.3} parent=0 // pred_fallthru
    _
  // Predicated region
  $region10: #{bottleneck1_forward.3} parent=0 // pred_check
    _
  $region11: #{bottleneck1_forward.3} parent=0 // pred_check_branch
    %13 = sbr.rel (0) target = $region13
  $region12: #{bottleneck1_forward.3} parent=0 // pred_region
    _
  $region13: #{bottleneck1_forward.3} parent=0 // pred_fallthru
    _
  %p15 = scmp.eq.s32.totalorder 0, 0
  // Predicated region
  $region14: #{bottleneck1_forward.3} parent=0 // pred_check
    %p16 = pneg %p15
  $region15: #{bottleneck1_forward.3} parent=0 // pred_check_branch
    %18 = sbr.rel (%p16) target = $region17
  $region16: #{bottleneck1_forward.3} parent=0 // pred_region
    %vm19 = vcmask 31744
    %20 = vst.msk [vmem:[%s3] sm:$0xff] %vm19, 0.0
    %21 = vst.msk [vmem:[%s3 + $0x8] sm:$0xff] %vm19, 0.0
    %22 = vst.msk [vmem:[%s3 + $0x10] sm:$0xff] %vm19, 0.0
    %23 = vst.msk [vmem:[%s3 + $0x18] sm:$0xff] %vm19, 0.0
    %24 = vst.msk [vmem:[%s3 + $0x20] sm:$0xff] %vm19, 0.0
    %25 = vst.msk [vmem:[%s3 + $0x28] sm:$0xff] %vm19, 0.0
    %26 = vst.msk [vmem:[%s3 + $0x30] sm:$0xff] %vm19, 0.0
    %27 = vst.msk [vmem:[%s3 + $0x38] sm:$0xff] %vm19, 0.0
    %28 = vst.msk [vmem:[%s3 + $0x40] sm:$0xff] %vm19, 0.0
    %29 = vst.msk [vmem:[%s3 + $0x48] sm:$0xff] %vm19, 0.0
    %30 = vst.msk [vmem:[%s3 + $0x50] sm:$0xff] %vm19, 0.0
    %31 = vst.msk [vmem:[%s3 + $0x58] sm:$0xff] %vm19, 0.0
    %32 = vst.msk [vmem:[%s3 + $0x60] sm:$0xff] %vm19, 0.0
    %33 = vst.msk [vmem:[%s3 + $0x68] sm:$0xff] %vm19, 0.0
    %34 = vst.msk [vmem:[%s3 + $0x70] sm:$0xff] %vm19, 0.0
    %35 = vst.msk [vmem:[%s3 + $0x78] sm:$0xff] %vm19, 0.0
    %36 = vst.msk [vmem:[%s3 + $0x80] sm:$0xff] %vm19, 0.0
    %37 = vst.msk [vmem:[%s3 + $0x88] sm:$0xff] %vm19, 0.0
    %38 = vst.msk [vmem:[%s3 + $0x90] sm:$0xff] %vm19, 0.0
    %39 = vst.msk [vmem:[%s3 + $0x98] sm:$0xff] %vm19, 0.0
    %40 = vst.msk [vmem:[%s3 + $0xa0] sm:$0xff] %vm19, 0.0
    %41 = vst.msk [vmem:[%s3 + $0xa8] sm:$0xff] %vm19, 0.0
    %42 = vst.msk [vmem:[%s3 + $0xb0] sm:$0xff] %vm19, 0.0
    %43 = vst.msk [vmem:[%s3 + $0xb8] sm:$0xff] %vm19, 0.0
    %44 = vst.msk [vmem:[%s3 + $0xc0] sm:$0xff] %vm19, 0.0
    %45 = vst.msk [vmem:[%s3 + $0xc8] sm:$0xff] %vm19, 0.0
    %46 = vst.msk [vmem:[%s3 + $0xd0] sm:$0xff] %vm19, 0.0
    %47 = vst.msk [vmem:[%s3 + $0xd8] sm:$0xff] %vm19, 0.0
    %48 = vst.msk [vmem:[%s3 + $0xe0] sm:$0xff] %vm19, 0.0
    %49 = vst.msk [vmem:[%s3 + $0xe8] sm:$0xff] %vm19, 0.0
    %50 = vst.msk [vmem:[%s3 + $0xf0] sm:$0xff] %vm19, 0.0
    %51 = vst.msk [vmem:[%s3 + $0xf8] sm:$0xff] %vm19, 0.0
    %52 = vst.msk [vmem:[%s3 + $0x100] sm:$0xff] %vm19, 0.0
    %53 = vst.msk [vmem:[%s3 + $0x108] sm:$0xff] %vm19, 0.0
    %54 = vst.msk [vmem:[%s3 + $0x110] sm:$0xff] %vm19, 0.0
    %55 = vst.msk [vmem:[%s3 + $0x118] sm:$0xff] %vm19, 0.0
    %56 = vst.msk [vmem:[%s3 + $0x120] sm:$0xff] %vm19, 0.0
    %57 = vst.msk [vmem:[%s3 + $0x128] sm:$0xff] %vm19, 0.0
    %58 = vst.msk [vmem:[%s3 + $0x130] sm:$0xff] %vm19, 0.0
    %59 = vst.msk [vmem:[%s3 + $0x138] sm:$0xff] %vm19, 0.0
    %60 = vst.msk [vmem:[%s3 + $0x140] sm:$0xff] %vm19, 0.0
    %61 = vst.msk [vmem:[%s3 + $0x148] sm:$0xff] %vm19, 0.0
    %62 = vst.msk [vmem:[%s3 + $0x150] sm:$0xff] %vm19, 0.0
    %63 = vst.msk [vmem:[%s3 + $0x158] sm:$0xff] %vm19, 0.0
    %64 = vst.msk [vmem:[%s3 + $0x160] sm:$0xff] %vm19, 0.0
    %65 = vst.msk [vmem:[%s3 + $0x168] sm:$0xff] %vm19, 0.0
    %66 = vst.msk [vmem:[%s3 + $0x170] sm:$0xff] %vm19, 0.0
    %67 = vst.msk [vmem:[%s3 + $0x178] sm:$0xff] %vm19, 0.0
    %68 = vst.msk [vmem:[%s3 + $0x180] sm:$0xff] %vm19, 0.0
    %69 = vst.msk [vmem:[%s3 + $0x188] sm:$0xff] %vm19, 0.0
    %70 = vst.msk [vmem:[%s3 + $0x190] sm:$0xff] %vm19, 0.0
    %71 = vst.msk [vmem:[%s3 + $0x198] sm:$0xff] %vm19, 0.0
    %72 = vst.msk [vmem:[%s3 + $0x1a0] sm:$0xff] %vm19, 0.0
    %73 = vst.msk [vmem:[%s3 + $0x1a8] sm:$0xff] %vm19, 0.0
    %74 = vst.msk [vmem:[%s3 + $0x1b0] sm:$0xff] %vm19, 0.0
    %75 = vst.msk [vmem:[%s3 + $0x1b8] sm:$0xff] %vm19, 0.0
    %76 = vst.msk [vmem:[%s3 + $0x1c0] sm:$0xff] %vm19, 0.0
    %77 = vst.msk [vmem:[%s3 + $0x1c8] sm:$0xff] %vm19, 0.0
    %78 = vst.msk [vmem:[%s3 + $0x1d0] sm:$0xff] %vm19, 0.0
    %79 = vst.msk [vmem:[%s3 + $0x1d8] sm:$0xff] %vm19, 0.0
    %80 = vst.msk [vmem:[%s3 + $0x1e0] sm:$0xff] %vm19, 0.0
    %81 = vst.msk [vmem:[%s3 + $0x1e8] sm:$0xff] %vm19, 0.0
    %82 = vst.msk [vmem:[%s3 + $0x1f0] sm:$0xff] %vm19, 0.0
    %83 = vst.msk [vmem:[%s3 + $0x1f8] sm:$0xff] %vm19, 0.0
  $region17: #{bottleneck1_forward.3} parent=0 // pred_fallthru
    _
  %v84 = vld [vmem:[%s3] sm:$0xff]
  %v85 = vld [vmem:[%s3 + $0x8] sm:$0xff]
  %v86 = vld [vmem:[%s3 + $0x10] sm:$0xff]
  %v87 = vld [vmem:[%s3 + $0x18] sm:$0xff]
  %v88 = vld [vmem:[%s3 + $0x20] sm:$0xff]
  %v89 = vld [vmem:[%s3 + $0x28] sm:$0xff]
  %v90 = vld [vmem:[%s3 + $0x30] sm:$0xff]
  %v91 = vld [vmem:[%s3 + $0x38] sm:$0xff]
  %v92 = vld [vmem:[%s3 + $0x40] sm:$0xff]
  %v93 = vld [vmem:[%s3 + $0x48] sm:$0xff]
  %v94 = vld [vmem:[%s3 + $0x50] sm:$0xff]
  %v95 = vld [vmem:[%s3 + $0x58] sm:$0xff]
  %v96 = vld [vmem:[%s3 + $0x60] sm:$0xff]
  %v97 = vld [vmem:[%s3 + $0x68] sm:$0xff]
  %v98 = vld [vmem:[%s3 + $0x70] sm:$0xff]
  %v99 = vld [vmem:[%s3 + $0x78] sm:$0xff]
  %v100 = vld [vmem:[%s3 + $0x80] sm:$0xff]
  %v101 = vld [vmem:[%s3 + $0x88] sm:$0xff]
  %v102 = vld [vmem:[%s3 + $0x90] sm:$0xff]
  %v103 = vld [vmem:[%s3 + $0x98] sm:$0xff]
  %v104 = vld [vmem:[%s3 + $0xa0] sm:$0xff]
  %v105 = vld [vmem:[%s3 + $0xa8] sm:$0xff]
  %v106 = vld [vmem:[%s3 + $0xb0] sm:$0xff]
  %v107 = vld [vmem:[%s3 + $0xb8] sm:$0xff]
  %v108 = vld [vmem:[%s3 + $0xc0] sm:$0xff]
  %v109 = vld [vmem:[%s3 + $0xc8] sm:$0xff]
  %v110 = vld [vmem:[%s3 + $0xd0] sm:$0xff]
  %v111 = vld [vmem:[%s3 + $0xd8] sm:$0xff]
  %v112 = vld [vmem:[%s3 + $0xe0] sm:$0xff]
  %v113 = vld [vmem:[%s3 + $0xe8] sm:$0xff]
  %v114 = vld [vmem:[%s3 + $0xf0] sm:$0xff]
  %v115 = vld [vmem:[%s3 + $0xf8] sm:$0xff]
  %v116 = vld [vmem:[%s3 + $0x100] sm:$0xff]
  %v117 = vld [vmem:[%s3 + $0x108] sm:$0xff]
  %v118 = vld [vmem:[%s3 + $0x110] sm:$0xff]
  %v119 = vld [vmem:[%s3 + $0x118] sm:$0xff]
  %v120 = vld [vmem:[%s3 + $0x120] sm:$0xff]
  %v121 = vld [vmem:[%s3 + $0x128] sm:$0xff]
  %v122 = vld [vmem:[%s3 + $0x130] sm:$0xff]
  %v123 = vld [vmem:[%s3 + $0x138] sm:$0xff]
  %v124 = vld [vmem:[%s3 + $0x140] sm:$0xff]
  %v125 = vld [vmem:[%s3 + $0x148] sm:$0xff]
  %v126 = vld [vmem:[%s3 + $0x150] sm:$0xff]
  %v127 = vld [vmem:[%s3 + $0x158] sm:$0xff]
  %v128 = vld [vmem:[%s3 + $0x160] sm:$0xff]
  %v129 = vld [vmem:[%s3 + $0x168] sm:$0xff]
  %v130 = vld [vmem:[%s3 + $0x170] sm:$0xff]
  %v131 = vld [vmem:[%s3 + $0x178] sm:$0xff]
  %v132 = vld [vmem:[%s3 + $0x180] sm:$0xff]
  %v133 = vld [vmem:[%s3 + $0x188] sm:$0xff]
  %v134 = vld [vmem:[%s3 + $0x190] sm:$0xff]
  %v135 = vld [vmem:[%s3 + $0x198] sm:$0xff]
  %v136 = vld [vmem:[%s3 + $0x1a0] sm:$0xff]
  %v137 = vld [vmem:[%s3 + $0x1a8] sm:$0xff]
  %v138 = vld [vmem:[%s3 + $0x1b0] sm:$0xff]
  %v139 = vld [vmem:[%s3 + $0x1b8] sm:$0xff]
  %v140 = vld [vmem:[%s3 + $0x1c0] sm:$0xff]
  %v141 = vld [vmem:[%s3 + $0x1c8] sm:$0xff]
  %v142 = vld [vmem:[%s3 + $0x1d0] sm:$0xff]
  %v143 = vld [vmem:[%s3 + $0x1d8] sm:$0xff]
  %v144 = vld [vmem:[%s3 + $0x1e0] sm:$0xff]
  %v145 = vld [vmem:[%s3 + $0x1e8] sm:$0xff]
  %v146 = vld [vmem:[%s3 + $0x1f0] sm:$0xff]
  %v147 = vld [vmem:[%s3 + $0x1f8] sm:$0xff]
  %v148 = vld [vmem:[%s0] sm:$0xf]
  %v149 = vld [vmem:[%s0 + $0x4] sm:$0xf]
  %v150 = vld [vmem:[%s0 + $0x8] sm:$0xf]
  %v151 = vld [vmem:[%s0 + $0xc] sm:$0xf]
  %v152 = vld [vmem:[%s0 + $0x10] sm:$0xf]
  %v153 = vld [vmem:[%s0 + $0x14] sm:$0xf]
  %v154 = vld [vmem:[%s0 + $0x18] sm:$0xf]
  %v155 = vld [vmem:[%s0 + $0x1c] sm:$0xf]
  %v156 = vld [vmem:[%s0 + $0x20] sm:$0xf]
  %v157 = vld [vmem:[%s0 + $0x24] sm:$0xf]
  %v158 = vld [vmem:[%s0 + $0x28] sm:$0xf]
  %v159 = vld [vmem:[%s0 + $0x2c] sm:$0xf]
  %v160 = vld [vmem:[%s0 + $0x30] sm:$0xf]
  %v161 = vld [vmem:[%s0 + $0x34] sm:$0xf]
  %v162 = vld [vmem:[%s0 + $0x38] sm:$0xf]
  %v163 = vld [vmem:[%s0 + $0x3c] sm:$0xf]
  %v164 = vld [vmem:[%s0 + $0x40] sm:$0xf]
  %v165 = vld [vmem:[%s0 + $0x44] sm:$0xf]
  %v166 = vld [vmem:[%s0 + $0x48] sm:$0xf]
  %v167 = vld [vmem:[%s0 + $0x4c] sm:$0xf]
  %v168 = vld [vmem:[%s0 + $0x50] sm:$0xf]
  %v169 = vld [vmem:[%s0 + $0x54] sm:$0xf]
  %v170 = vld [vmem:[%s0 + $0x58] sm:$0xf]
  %v171 = vld [vmem:[%s0 + $0x5c] sm:$0xf]
  %v172 = vld [vmem:[%s0 + $0x60] sm:$0xf]
  %v173 = vld [vmem:[%s0 + $0x64] sm:$0xf]
  %v174 = vld [vmem:[%s0 + $0x68] sm:$0xf]
  %v175 = vld [vmem:[%s0 + $0x6c] sm:$0xf]
  %v176 = vld [vmem:[%s0 + $0x70] sm:$0xf]
  %v177 = vld [vmem:[%s0 + $0x74] sm:$0xf]
  %v178 = vld [vmem:[%s0 + $0x78] sm:$0xf]
  %v179 = vld [vmem:[%s0 + $0x7c] sm:$0xf]
  %v180 = vld [vmem:[%s0 + $0x80] sm:$0xf]
  %v181 = vld [vmem:[%s0 + $0x84] sm:$0xf]
  %v182 = vld [vmem:[%s0 + $0x88] sm:$0xf]
  %v183 = vld [vmem:[%s0 + $0x8c] sm:$0xf]
  %v184 = vld [vmem:[%s0 + $0x90] sm:$0xf]
  %v185 = vld [vmem:[%s0 + $0x94] sm:$0xf]
  %v186 = vld [vmem:[%s0 + $0x98] sm:$0xf]
  %v187 = vld [vmem:[%s0 + $0x9c] sm:$0xf]
  %v188 = vld [vmem:[%s0 + $0xa0] sm:$0xf]
  %v189 = vld [vmem:[%s0 + $0xa4] sm:$0xf]
  %v190 = vld [vmem:[%s0 + $0xa8] sm:$0xf]
  %v191 = vld [vmem:[%s0 + $0xac] sm:$0xf]
  %v192 = vld [vmem:[%s0 + $0xb0] sm:$0xf]
  %v193 = vld [vmem:[%s0 + $0xb4] sm:$0xf]
  %v194 = vld [vmem:[%s0 + $0xb8] sm:$0xf]
  %v195 = vld [vmem:[%s0 + $0xbc] sm:$0xf]
  %v196 = vld [vmem:[%s0 + $0xc0] sm:$0xf]
  %v197 = vld [vmem:[%s0 + $0xc4] sm:$0xf]
  %v198 = vld [vmem:[%s0 + $0xc8] sm:$0xf]
  %v199 = vld [vmem:[%s0 + $0xcc] sm:$0xf]
  %v200 = vld [vmem:[%s0 + $0xd0] sm:$0xf]
  %v201 = vld [vmem:[%s0 + $0xd4] sm:$0xf]
  %v202 = vld [vmem:[%s0 + $0xd8] sm:$0xf]
  %v203 = vld [vmem:[%s0 + $0xdc] sm:$0xf]
  %v204 = vld [vmem:[%s0 + $0xe0] sm:$0xf]
  %v205 = vld [vmem:[%s0 + $0xe4] sm:$0xf]
  %v206 = vld [vmem:[%s0 + $0xe8] sm:$0xf]
  %v207 = vld [vmem:[%s0 + $0xec] sm:$0xf]
  %v208 = vld [vmem:[%s0 + $0xf0] sm:$0xf]
  %v209 = vld [vmem:[%s0 + $0xf4] sm:$0xf]
  %v210 = vld [vmem:[%s0 + $0xf8] sm:$0xf]
  %v211 = vld [vmem:[%s0 + $0xfc] sm:$0xf]
  %v212 = vld [vmem:[%s1] sm:$0xf]
  %v213 = vld [vmem:[%s1 + $0x4] sm:$0xf]
  %v278 = vunpack.c.l.b16 %v148
  %v279 = vunpack.c.l.b16 %v149
  %v280 = vunpack.c.l.b16 %v150
  %v281 = vunpack.c.l.b16 %v151
  %v282 = vunpack.c.l.b16 %v152
  %v283 = vunpack.c.l.b16 %v153
  %v284 = vunpack.c.l.b16 %v154
  %v285 = vunpack.c.l.b16 %v155
  %v286 = vunpack.c.l.b16 %v156
  %v287 = vunpack.c.l.b16 %v157
  %v288 = vunpack.c.l.b16 %v158
  %v289 = vunpack.c.l.b16 %v159
  %v290 = vunpack.c.l.b16 %v160
  %v291 = vunpack.c.l.b16 %v161
  %v292 = vunpack.c.l.b16 %v162
  %v293 = vunpack.c.l.b16 %v163
  %v294 = vunpack.c.l.b16 %v164
  %v295 = vunpack.c.l.b16 %v165
  %v296 = vunpack.c.l.b16 %v166
  %v297 = vunpack.c.l.b16 %v167
  %v298 = vunpack.c.l.b16 %v168
  %v299 = vunpack.c.l.b16 %v169
  %v300 = vunpack.c.l.b16 %v170
  %v301 = vunpack.c.l.b16 %v171
  %v302 = vunpack.c.l.b16 %v172
  %v303 = vunpack.c.l.b16 %v173
  %v304 = vunpack.c.l.b16 %v174
  %v305 = vunpack.c.l.b16 %v175
  %v306 = vunpack.c.l.b16 %v176
  %v307 = vunpack.c.l.b16 %v177
  %v308 = vunpack.c.l.b16 %v178
  %v309 = vunpack.c.l.b16 %v179
  %v310 = vunpack.c.l.b16 %v180
  %v311 = vunpack.c.l.b16 %v181
  %v312 = vunpack.c.l.b16 %v182
  %v313 = vunpack.c.l.b16 %v183
  %v314 = vunpack.c.l.b16 %v184
  %v315 = vunpack.c.l.b16 %v185
  %v316 = vunpack.c.l.b16 %v186
  %v317 = vunpack.c.l.b16 %v187
  %v318 = vunpack.c.l.b16 %v188
  %v319 = vunpack.c.l.b16 %v189
  %v320 = vunpack.c.l.b16 %v190
  %v321 = vunpack.c.l.b16 %v191
  %v322 = vunpack.c.l.b16 %v192
  %v323 = vunpack.c.l.b16 %v193
  %v324 = vunpack.c.l.b16 %v194
  %v325 = vunpack.c.l.b16 %v195
  %v326 = vunpack.c.l.b16 %v196
  %v327 = vunpack.c.l.b16 %v197
  %v328 = vunpack.c.l.b16 %v198
  %v329 = vunpack.c.l.b16 %v199
  %v330 = vunpack.c.l.b16 %v200
  %v331 = vunpack.c.l.b16 %v201
  %v332 = vunpack.c.l.b16 %v202
  %v333 = vunpack.c.l.b16 %v203
  %v334 = vunpack.c.l.b16 %v204
  %v335 = vunpack.c.l.b16 %v205
  %v336 = vunpack.c.l.b16 %v206
  %v337 = vunpack.c.l.b16 %v207
  %v338 = vunpack.c.l.b16 %v208
  %v339 = vunpack.c.l.b16 %v209
  %v340 = vunpack.c.l.b16 %v210
  %v341 = vunpack.c.l.b16 %v211
  %v342 = vpack.c.b16 %v279, %v278
  %v343 = vpack.c.b16 %v281, %v280
  %v344 = vpack.c.b16 %v283, %v282
  %v345 = vpack.c.b16 %v285, %v284
  %v346 = vpack.c.b16 %v287, %v286
  %v347 = vpack.c.b16 %v289, %v288
  %v348 = vpack.c.b16 %v291, %v290
  %v349 = vpack.c.b16 %v293, %v292
  %v350 = vpack.c.b16 %v295, %v294
  %v351 = vpack.c.b16 %v297, %v296
  %v352 = vpack.c.b16 %v299, %v298
  %v353 = vpack.c.b16 %v301, %v300
  %v354 = vpack.c.b16 %v303, %v302
  %v355 = vpack.c.b16 %v305, %v304
  %v356 = vpack.c.b16 %v307, %v306
  %v357 = vpack.c.b16 %v309, %v308
  %v358 = vpack.c.b16 %v311, %v310
  %v359 = vpack.c.b16 %v313, %v312
  %v360 = vpack.c.b16 %v315, %v314
  %v361 = vpack.c.b16 %v317, %v316
  %v362 = vpack.c.b16 %v319, %v318
  %v363 = vpack.c.b16 %v321, %v320
  %v364 = vpack.c.b16 %v323, %v322
  %v365 = vpack.c.b16 %v325, %v324
  %v366 = vpack.c.b16 %v327, %v326
  %v367 = vpack.c.b16 %v329, %v328
  %v368 = vpack.c.b16 %v331, %v330
  %v369 = vpack.c.b16 %v333, %v332
  %v370 = vpack.c.b16 %v335, %v334
  %v371 = vpack.c.b16 %v337, %v336
  %v372 = vpack.c.b16 %v339, %v338
  %v373 = vpack.c.b16 %v341, %v340
  %v376 = vunpack.c.l.b16 %v212
  %v377 = vunpack.c.l.b16 %v213
  %v378 = vpack.c.b16 %v377, %v376
  %vm380 = vcmask 130048
  %v382 = vsel %vm380, %v342, 0
  %v385 = vsel %vm380, %v343, 0
  %v388 = vsel %vm380, %v344, 0
  %v391 = vsel %vm380, %v345, 0
  %v394 = vsel %vm380, %v346, 0
  %v397 = vsel %vm380, %v347, 0
  %v400 = vsel %vm380, %v348, 0
  %v403 = vsel %vm380, %v349, 0
  %v406 = vsel %vm380, %v350, 0
  %v409 = vsel %vm380, %v351, 0
  %v412 = vsel %vm380, %v352, 0
  %v415 = vsel %vm380, %v353, 0
  %v418 = vsel %vm380, %v354, 0
  %v421 = vsel %vm380, %v355, 0
  %v424 = vsel %vm380, %v356, 0
  %v427 = vsel %vm380, %v357, 0
  %v430 = vsel %vm380, %v358, 0
  %v433 = vsel %vm380, %v359, 0
  %v436 = vsel %vm380, %v360, 0
  %v439 = vsel %vm380, %v361, 0
  %v442 = vsel %vm380, %v362, 0
  %v445 = vsel %vm380, %v363, 0
  %v448 = vsel %vm380, %v364, 0
  %v451 = vsel %vm380, %v365, 0
  %v454 = vsel %vm380, %v366, 0
  %v457 = vsel %vm380, %v367, 0
  %v460 = vsel %vm380, %v368, 0
  %v463 = vsel %vm380, %v369, 0
  %v466 = vsel %vm380, %v370, 0
  %v469 = vsel %vm380, %v371, 0
  %v472 = vsel %vm380, %v372, 0
  %v475 = vsel %vm380, %v373, 0
  %477 = vmatprep.subr.bf16.mxu0 0
  %478 = vmatpush1.bf16.msra.mxu0 %v378
  %479 = vmatprep.subr.bf16.mxu0 0
  %480 = vmatpush1.bf16.msra.mxu0 0
  %481 = vmatprep.subr.bf16.mxu0 0
  %482 = vmatpush1.bf16.msra.mxu0 0
  %483 = vmatprep.subr.bf16.mxu0 0
  %484 = vmatpush1.bf16.msra.mxu0 0
  %485 = vmatprep.subr.bf16.mxu0 0
  %486 = vmatpush1.bf16.msra.mxu0 0
  %487 = vmatprep.subr.bf16.mxu0 0
  %488 = vmatpush1.bf16.msra.mxu0 0
  %489 = vmatprep.subr.bf16.mxu0 0
  %490 = vmatpush1.bf16.msra.mxu0 0
  %491 = vmatprep.subr.bf16.mxu0 0
  %492 = vmatpush1.bf16.msra.mxu0 0
  %493 = vmatprep.subr.bf16.mxu0 0
  %494 = vmatpush1.bf16.msra.mxu0 0
  %495 = vmatprep.subr.bf16.mxu0 0
  %496 = vmatpush1.bf16.msra.mxu0 0
  %497 = vmatprep.subr.bf16.mxu0 0
  %498 = vmatpush1.bf16.msra.mxu0 0
  %499 = vmatprep.subr.bf16.mxu0 0
  %500 = vmatpush1.bf16.msra.mxu0 0
  %501 = vmatprep.subr.bf16.mxu0 0
  %502 = vmatpush1.bf16.msra.mxu0 0
  %503 = vmatprep.subr.bf16.mxu0 0
  %504 = vmatpush1.bf16.msra.mxu0 0
  %505 = vmatprep.subr.bf16.mxu0 0
  %506 = vmatpush1.bf16.msra.mxu0 0
  %507 = vmatprep.subr.bf16.mxu0 0
  %508 = vmatpush1.bf16.msra.mxu0 0
  %509 = vmatprep.mubr.bf16.mxu0 0
  %510 = vmatmul.mubr.bf16.gmra.mrb[0].mxu0 %v382
  %v511 = vpop.f32.mrb[0].mxu0
  %v512 = vadd.f32 0.0, %v511
  %v513 = vpop.f32.mrb[0].mxu0
  %v514 = vpop.f32.mrb[0].mxu0
  %v515 = vadd.f32 0.0, %v514
  %v516 = vpop.f32.mrb[0].mxu0
  %517 = vmatprep.mubr.bf16.mxu0 0
  %518 = vmatmul.mubr.bf16.gmra.mrb[0].mxu0 %v385
  %v519 = vpop.f32.mrb[0].mxu0
  %v520 = vadd.f32 0.0, %v519
  %v521 = vpop.f32.mrb[0].mxu0
  %v522 = vpop.f32.mrb[0].mxu0
  %v523 = vadd.f32 0.0, %v522
  %v524 = vpop.f32.mrb[0].mxu0
  %525 = vmatprep.mubr.bf16.mxu0 0
  %526 = vmatmul.mubr.bf16.gmra.mrb[0].mxu0 %v388
  %v527 = vpop.f32.mrb[0].mxu0
  %v528 = vadd.f32 0.0, %v527
  %v529 = vpop.f32.mrb[0].mxu0
  %v530 = vpop.f32.mrb[0].mxu0
  %v531 = vadd.f32 0.0, %v530
  %v532 = vpop.f32.mrb[0].mxu0
  %533 = vmatprep.mubr.bf16.mxu0 0
  %534 = vmatmul.mubr.bf16.gmra.mrb[0].mxu0 %v391
  %v535 = vpop.f32.mrb[0].mxu0
  %v536 = vadd.f32 0.0, %v535
  %v537 = vpop.f32.mrb[0].mxu0
  %v538 = vpop.f32.mrb[0].mxu0
  %v539 = vadd.f32 0.0, %v538
  %v540 = vpop.f32.mrb[0].mxu0
  %541 = vmatprep.mubr.bf16.mxu0 0
  %542 = vmatmul.mubr.bf16.gmra.mrb[0].mxu0 %v394
  %v543 = vpop.f32.mrb[0].mxu0
  %v544 = vadd.f32 0.0, %v543
  %v545 = vpop.f32.mrb[0].mxu0
  %v546 = vpop.f32.mrb[0].mxu0
  %v547 = vadd.f32 0.0, %v546
  %v548 = vpop.f32.mrb[0].mxu0
  %549 = vmatprep.mubr.bf16.mxu0 0
  %550 = vmatmul.mubr.bf16.gmra.mrb[0].mxu0 %v397
  %v551 = vpop.f32.mrb[0].mxu0
  %v552 = vadd.f32 0.0, %v551
  %v553 = vpop.f32.mrb[0].mxu0
  %v554 = vpop.f32.mrb[0].mxu0
  %v555 = vadd.f32 0.0, %v554
  %v556 = vpop.f32.mrb[0].mxu0
  %557 = vmatprep.mubr.bf16.mxu0 0
  %558 = vmatmul.mubr.bf16.gmra.mrb[0].mxu0 %v400
  %v559 = vpop.f32.mrb[0].mxu0
  %v560 = vadd.f32 0.0, %v559
  %v561 = vpop.f32.mrb[0].mxu0
  %v562 = vpop.f32.mrb[0].mxu0
  %v563 = vadd.f32 0.0, %v562
  %v564 = vpop.f32.mrb[0].mxu0
  %565 = vmatprep.mubr.bf16.mxu0 0
  %566 = vmatmul.mubr.bf16.gmra.mrb[0].mxu0 %v403
  %v567 = vpop.f32.mrb[0].mxu0
  %v568 = vadd.f32 0.0, %v567
  %v569 = vpop.f32.mrb[0].mxu0
  %v570 = vpop.f32.mrb[0].mxu0
  %v571 = vadd.f32 0.0, %v570
  %v572 = vpop.f32.mrb[0].mxu0
  %573 = vmatprep.mubr.bf16.mxu0 0
  %574 = vmatmul.mubr.bf16.gmra.mrb[0].mxu0 %v406
  %v575 = vpop.f32.mrb[0].mxu0
  %v576 = vadd.f32 0.0, %v575
  %v577 = vpop.f32.mrb[0].mxu0
  %v578 = vpop.f32.mrb[0].mxu0
  %v579 = vadd.f32 0.0, %v578
  %v580 = vpop.f32.mrb[0].mxu0
  %581 = vmatprep.mubr.bf16.mxu0 0
  %582 = vmatmul.mubr.bf16.gmra.mrb[0].mxu0 %v409
  %v583 = vpop.f32.mrb[0].mxu0
  %v584 = vadd.f32 0.0, %v583
  %v585 = vpop.f32.mrb[0].mxu0
  %v586 = vpop.f32.mrb[0].mxu0
  %v587 = vadd.f32 0.0, %v586
  %v588 = vpop.f32.mrb[0].mxu0
  %589 = vmatprep.mubr.bf16.mxu0 0
  %590 = vmatmul.mubr.bf16.gmra.mrb[0].mxu0 %v412
  %v591 = vpop.f32.mrb[0].mxu0
  %v592 = vadd.f32 0.0, %v591
  %v593 = vpop.f32.mrb[0].mxu0
  %v594 = vpop.f32.mrb[0].mxu0
  %v595 = vadd.f32 0.0, %v594
  %v596 = vpop.f32.mrb[0].mxu0
  %597 = vmatprep.mubr.bf16.mxu0 0
  %598 = vmatmul.mubr.bf16.gmra.mrb[0].mxu0 %v415
  %v599 = vpop.f32.mrb[0].mxu0
  %v600 = vadd.f32 0.0, %v599
  %v601 = vpop.f32.mrb[0].mxu0
  %v602 = vpop.f32.mrb[0].mxu0
  %v603 = vadd.f32 0.0, %v602
  %v604 = vpop.f32.mrb[0].mxu0
  %605 = vmatprep.mubr.bf16.mxu0 0
  %606 = vmatmul.mubr.bf16.gmra.mrb[0].mxu0 %v418
  %v607 = vpop.f32.mrb[0].mxu0
  %v608 = vadd.f32 0.0, %v607
  %v609 = vpop.f32.mrb[0].mxu0
  %v610 = vpop.f32.mrb[0].mxu0
  %v611 = vadd.f32 0.0, %v610
  %v612 = vpop.f32.mrb[0].mxu0
  %613 = vmatprep.mubr.bf16.mxu0 0
  %614 = vmatmul.mubr.bf16.gmra.mrb[0].mxu0 %v421
  %v615 = vpop.f32.mrb[0].mxu0
  %v616 = vadd.f32 0.0, %v615
  %v617 = vpop.f32.mrb[0].mxu0
  %v618 = vpop.f32.mrb[0].mxu0
  %v619 = vadd.f32 0.0, %v618
  %v620 = vpop.f32.mrb[0].mxu0
  %621 = vmatprep.mubr.bf16.mxu0 0
  %622 = vmatmul.mubr.bf16.gmra.mrb[0].mxu0 %v424
  %v623 = vpop.f32.mrb[0].mxu0
  %v624 = vadd.f32 0.0, %v623
  %v625 = vpop.f32.mrb[0].mxu0
  %v626 = vpop.f32.mrb[0].mxu0
  %v627 = vadd.f32 0.0, %v626
  %v628 = vpop.f32.mrb[0].mxu0
  %629 = vmatprep.mubr.bf16.mxu0 0
  %630 = vmatmul.mubr.bf16.gmra.mrb[0].mxu0 %v427
  %v631 = vpop.f32.mrb[0].mxu0
  %v632 = vadd.f32 0.0, %v631
  %v633 = vpop.f32.mrb[0].mxu0
  %v634 = vpop.f32.mrb[0].mxu0
  %v635 = vadd.f32 0.0, %v634
  %v636 = vpop.f32.mrb[0].mxu0
  %637 = vmatprep.mubr.bf16.mxu0 0
  %638 = vmatmul.mubr.bf16.gmra.mrb[0].mxu0 %v430
  %v639 = vpop.f32.mrb[0].mxu0
  %v640 = vadd.f32 0.0, %v639
  %v641 = vpop.f32.mrb[0].mxu0
  %v642 = vpop.f32.mrb[0].mxu0
  %v643 = vadd.f32 0.0, %v642
  %v644 = vpop.f32.mrb[0].mxu0
  %645 = vmatprep.mubr.bf16.mxu0 0
  %646 = vmatmul.mubr.bf16.gmra.mrb[0].mxu0 %v433
  %v647 = vpop.f32.mrb[0].mxu0
  %v648 = vadd.f32 0.0, %v647
  %v649 = vpop.f32.mrb[0].mxu0
  %v650 = vpop.f32.mrb[0].mxu0
  %v651 = vadd.f32 0.0, %v650
  %v652 = vpop.f32.mrb[0].mxu0
  %653 = vmatprep.mubr.bf16.mxu0 0
  %654 = vmatmul.mubr.bf16.gmra.mrb[0].mxu0 %v436
  %v655 = vpop.f32.mrb[0].mxu0
  %v656 = vadd.f32 0.0, %v655
  %v657 = vpop.f32.mrb[0].mxu0
  %v658 = vpop.f32.mrb[0].mxu0
  %v659 = vadd.f32 0.0, %v658
  %v660 = vpop.f32.mrb[0].mxu0
  %661 = vmatprep.mubr.bf16.mxu0 0
  %662 = vmatmul.mubr.bf16.gmra.mrb[0].mxu0 %v439
  %v663 = vpop.f32.mrb[0].mxu0
  %v664 = vadd.f32 0.0, %v663
  %v665 = vpop.f32.mrb[0].mxu0
  %v666 = vpop.f32.mrb[0].mxu0
  %v667 = vadd.f32 0.0, %v666
  %v668 = vpop.f32.mrb[0].mxu0
  %669 = vmatprep.mubr.bf16.mxu0 0
  %670 = vmatmul.mubr.bf16.gmra.mrb[0].mxu0 %v442
  %v671 = vpop.f32.mrb[0].mxu0
  %v672 = vadd.f32 0.0, %v671
  %v673 = vpop.f32.mrb[0].mxu0
  %v674 = vpop.f32.mrb[0].mxu0
  %v675 = vadd.f32 0.0, %v674
  %v676 = vpop.f32.mrb[0].mxu0
  %677 = vmatprep.mubr.bf16.mxu0 0
  %678 = vmatmul.mubr.bf16.gmra.mrb[0].mxu0 %v445
  %v679 = vpop.f32.mrb[0].mxu0
  %v680 = vadd.f32 0.0, %v679
  %v681 = vpop.f32.mrb[0].mxu0
  %v682 = vpop.f32.mrb[0].mxu0
  %v683 = vadd.f32 0.0, %v682
  %v684 = vpop.f32.mrb[0].mxu0
  %685 = vmatprep.mubr.bf16.mxu0 0
  %686 = vmatmul.mubr.bf16.gmra.mrb[0].mxu0 %v448
  %v687 = vpop.f32.mrb[0].mxu0
  %v688 = vadd.f32 0.0, %v687
  %v689 = vpop.f32.mrb[0].mxu0
  %v690 = vpop.f32.mrb[0].mxu0
  %v691 = vadd.f32 0.0, %v690
  %v692 = vpop.f32.mrb[0].mxu0
  %693 = vmatprep.mubr.bf16.mxu0 0
  %694 = vmatmul.mubr.bf16.gmra.mrb[0].mxu0 %v451
  %v695 = vpop.f32.mrb[0].mxu0
  %v696 = vadd.f32 0.0, %v695
  %v697 = vpop.f32.mrb[0].mxu0
  %v698 = vpop.f32.mrb[0].mxu0
  %v699 = vadd.f32 0.0, %v698
  %v700 = vpop.f32.mrb[0].mxu0
  %701 = vmatprep.mubr.bf16.mxu0 0
  %702 = vmatmul.mubr.bf16.gmra.mrb[0].mxu0 %v454
  %v703 = vpop.f32.mrb[0].mxu0
  %v704 = vadd.f32 0.0, %v703
  %v705 = vpop.f32.mrb[0].mxu0
  %v706 = vpop.f32.mrb[0].mxu0
  %v707 = vadd.f32 0.0, %v706
  %v708 = vpop.f32.mrb[0].mxu0
  %709 = vmatprep.mubr.bf16.mxu0 0
  %710 = vmatmul.mubr.bf16.gmra.mrb[0].mxu0 %v457
  %v711 = vpop.f32.mrb[0].mxu0
  %v712 = vadd.f32 0.0, %v711
  %v713 = vpop.f32.mrb[0].mxu0
  %v714 = vpop.f32.mrb[0].mxu0
  %v715 = vadd.f32 0.0, %v714
  %v716 = vpop.f32.mrb[0].mxu0
  %717 = vmatprep.mubr.bf16.mxu0 0
  %718 = vmatmul.mubr.bf16.gmra.mrb[0].mxu0 %v460
  %v719 = vpop.f32.mrb[0].mxu0
  %v720 = vadd.f32 0.0, %v719
  %v721 = vpop.f32.mrb[0].mxu0
  %v722 = vpop.f32.mrb[0].mxu0
  %v723 = vadd.f32 0.0, %v722
  %v724 = vpop.f32.mrb[0].mxu0
  %725 = vmatprep.mubr.bf16.mxu0 0
  %726 = vmatmul.mubr.bf16.gmra.mrb[0].mxu0 %v463
  %v727 = vpop.f32.mrb[0].mxu0
  %v728 = vadd.f32 0.0, %v727
  %v729 = vpop.f32.mrb[0].mxu0
  %v730 = vpop.f32.mrb[0].mxu0
  %v731 = vadd.f32 0.0, %v730
  %v732 = vpop.f32.mrb[0].mxu0
  %733 = vmatprep.mubr.bf16.mxu0 0
  %734 = vmatmul.mubr.bf16.gmra.mrb[0].mxu0 %v466
  %v735 = vpop.f32.mrb[0].mxu0
  %v736 = vadd.f32 0.0, %v735
  %v737 = vpop.f32.mrb[0].mxu0
  %v738 = vpop.f32.mrb[0].mxu0
  %v739 = vadd.f32 0.0, %v738
  %v740 = vpop.f32.mrb[0].mxu0
  %741 = vmatprep.mubr.bf16.mxu0 0
  %742 = vmatmul.mubr.bf16.gmra.mrb[0].mxu0 %v469
  %v743 = vpop.f32.mrb[0].mxu0
  %v744 = vadd.f32 0.0, %v743
  %v745 = vpop.f32.mrb[0].mxu0
  %v746 = vpop.f32.mrb[0].mxu0
  %v747 = vadd.f32 0.0, %v746
  %v748 = vpop.f32.mrb[0].mxu0
  %749 = vmatprep.mubr.bf16.mxu0 0
  %750 = vmatmul.mubr.bf16.gmra.mrb[0].mxu0 %v472
  %v751 = vpop.f32.mrb[0].mxu0
  %v752 = vadd.f32 0.0, %v751
  %v753 = vpop.f32.mrb[0].mxu0
  %v754 = vpop.f32.mrb[0].mxu0
  %v755 = vadd.f32 0.0, %v754
  %v756 = vpop.f32.mrb[0].mxu0
  %757 = vmatprep.mubr.bf16.mxu0 0
  %758 = vmatmul.mubr.bf16.gmra.mrb[0].mxu0 %v475
  %v759 = vpop.f32.mrb[0].mxu0
  %v760 = vadd.f32 0.0, %v759
  %v761 = vpop.f32.mrb[0].mxu0
  %v762 = vpop.f32.mrb[0].mxu0
  %v763 = vadd.f32 0.0, %v762
  %v764 = vpop.f32.mrb[0].mxu0
  %765 = vdwg.mxu0
  %v766 = vadd.f32 %v84, %v512
  %v767 = vadd.f32 %v85, %v515
  %v768 = vadd.f32 %v86, %v520
  %v769 = vadd.f32 %v87, %v523
  %v770 = vadd.f32 %v88, %v528
  %v771 = vadd.f32 %v89, %v531
  %v772 = vadd.f32 %v90, %v536
  %v773 = vadd.f32 %v91, %v539
  %v774 = vadd.f32 %v92, %v544
  %v775 = vadd.f32 %v93, %v547
  %v776 = vadd.f32 %v94, %v552
  %v777 = vadd.f32 %v95, %v555
  %v778 = vadd.f32 %v96, %v560
  %v779 = vadd.f32 %v97, %v563
  %v780 = vadd.f32 %v98, %v568
  %v781 = vadd.f32 %v99, %v571
  %v782 = vadd.f32 %v100, %v576
  %v783 = vadd.f32 %v101, %v579
  %v784 = vadd.f32 %v102, %v584
  %v785 = vadd.f32 %v103, %v587
  %v786 = vadd.f32 %v104, %v592
  %v787 = vadd.f32 %v105, %v595
  %v788 = vadd.f32 %v106, %v600
  %v789 = vadd.f32 %v107, %v603
  %v790 = vadd.f32 %v108, %v608
  %v791 = vadd.f32 %v109, %v611
  %v792 = vadd.f32 %v110, %v616
  %v793 = vadd.f32 %v111, %v619
  %v794 = vadd.f32 %v112, %v624
  %v795 = vadd.f32 %v113, %v627
  %v796 = vadd.f32 %v114, %v632
  %v797 = vadd.f32 %v115, %v635
  %v798 = vadd.f32 %v116, %v640
  %v799 = vadd.f32 %v117, %v643
  %v800 = vadd.f32 %v118, %v648
  %v801 = vadd.f32 %v119, %v651
  %v802 = vadd.f32 %v120, %v656
  %v803 = vadd.f32 %v121, %v659
  %v804 = vadd.f32 %v122, %v664
  %v805 = vadd.f32 %v123, %v667
  %v806 = vadd.f32 %v124, %v672
  %v807 = vadd.f32 %v125, %v675
  %v808 = vadd.f32 %v126, %v680
  %v809 = vadd.f32 %v127, %v683
  %v810 = vadd.f32 %v128, %v688
  %v811 = vadd.f32 %v129, %v691
  %v812 = vadd.f32 %v130, %v696
  %v813 = vadd.f32 %v131, %v699
  %v814 = vadd.f32 %v132, %v704
  %v815 = vadd.f32 %v133, %v707
  %v816 = vadd.f32 %v134, %v712
  %v817 = vadd.f32 %v135, %v715
  %v818 = vadd.f32 %v136, %v720
  %v819 = vadd.f32 %v137, %v723
  %v820 = vadd.f32 %v138, %v728
  %v821 = vadd.f32 %v139, %v731
  %v822 = vadd.f32 %v140, %v736
  %v823 = vadd.f32 %v141, %v739
  %v824 = vadd.f32 %v142, %v744
  %v825 = vadd.f32 %v143, %v747
  %v826 = vadd.f32 %v144, %v752
  %v827 = vadd.f32 %v145, %v755
  %v828 = vadd.f32 %v146, %v760
  %v829 = vadd.f32 %v147, %v763
  %vm830 = vcmask 31744
  %831 = vst.msk [vmem:[%s3] sm:$0xff] %vm830, %v766
  %832 = vst.msk [vmem:[%s3 + $0x8] sm:$0xff] %vm830, %v767
  %833 = vst.msk [vmem:[%s3 + $0x10] sm:$0xff] %vm830, %v768
  %834 = vst.msk [vmem:[%s3 + $0x18] sm:$0xff] %vm830, %v769
  %835 = vst.msk [vmem:[%s3 + $0x20] sm:$0xff] %vm830, %v770
  %836 = vst.msk [vmem:[%s3 + $0x28] sm:$0xff] %vm830, %v771
  %837 = vst.msk [vmem:[%s3 + $0x30] sm:$0xff] %vm830, %v772
  %838 = vst.msk [vmem:[%s3 + $0x38] sm:$0xff] %vm830, %v773
  %839 = vst.msk [vmem:[%s3 + $0x40] sm:$0xff] %vm830, %v774
  %840 = vst.msk [vmem:[%s3 + $0x48] sm:$0xff] %vm830, %v775
  %841 = vst.msk [vmem:[%s3 + $0x50] sm:$0xff] %vm830, %v776
  %842 = vst.msk [vmem:[%s3 + $0x58] sm:$0xff] %vm830, %v777
  %843 = vst.msk [vmem:[%s3 + $0x60] sm:$0xff] %vm830, %v778
  %844 = vst.msk [vmem:[%s3 + $0x68] sm:$0xff] %vm830, %v779
  %845 = vst.msk [vmem:[%s3 + $0x70] sm:$0xff] %vm830, %v780
  %846 = vst.msk [vmem:[%s3 + $0x78] sm:$0xff] %vm830, %v781
  %847 = vst.msk [vmem:[%s3 + $0x80] sm:$0xff] %vm830, %v782
  %848 = vst.msk [vmem:[%s3 + $0x88] sm:$0xff] %vm830, %v783
  %849 = vst.msk [vmem:[%s3 + $0x90] sm:$0xff] %vm830, %v784
  %850 = vst.msk [vmem:[%s3 + $0x98] sm:$0xff] %vm830, %v785
  %851 = vst.msk [vmem:[%s3 + $0xa0] sm:$0xff] %vm830, %v786
  %852 = vst.msk [vmem:[%s3 + $0xa8] sm:$0xff] %vm830, %v787
  %853 = vst.msk [vmem:[%s3 + $0xb0] sm:$0xff] %vm830, %v788
  %854 = vst.msk [vmem:[%s3 + $0xb8] sm:$0xff] %vm830, %v789
  %855 = vst.msk [vmem:[%s3 + $0xc0] sm:$0xff] %vm830, %v790
  %856 = vst.msk [vmem:[%s3 + $0xc8] sm:$0xff] %vm830, %v791
  %857 = vst.msk [vmem:[%s3 + $0xd0] sm:$0xff] %vm830, %v792
  %858 = vst.msk [vmem:[%s3 + $0xd8] sm:$0xff] %vm830, %v793
  %859 = vst.msk [vmem:[%s3 + $0xe0] sm:$0xff] %vm830, %v794
  %860 = vst.msk [vmem:[%s3 + $0xe8] sm:$0xff] %vm830, %v795
  %861 = vst.msk [vmem:[%s3 + $0xf0] sm:$0xff] %vm830, %v796
  %862 = vst.msk [vmem:[%s3 + $0xf8] sm:$0xff] %vm830, %v797
  %863 = vst.msk [vmem:[%s3 + $0x100] sm:$0xff] %vm830, %v798
  %864 = vst.msk [vmem:[%s3 + $0x108] sm:$0xff] %vm830, %v799
  %865 = vst.msk [vmem:[%s3 + $0x110] sm:$0xff] %vm830, %v800
  %866 = vst.msk [vmem:[%s3 + $0x118] sm:$0xff] %vm830, %v801
  %867 = vst.msk [vmem:[%s3 + $0x120] sm:$0xff] %vm830, %v802
  %868 = vst.msk [vmem:[%s3 + $0x128] sm:$0xff] %vm830, %v803
  %869 = vst.msk [vmem:[%s3 + $0x130] sm:$0xff] %vm830, %v804
  %870 = vst.msk [vmem:[%s3 + $0x138] sm:$0xff] %vm830, %v805
  %871 = vst.msk [vmem:[%s3 + $0x140] sm:$0xff] %vm830, %v806
  %872 = vst.msk [vmem:[%s3 + $0x148] sm:$0xff] %vm830, %v807
  %873 = vst.msk [vmem:[%s3 + $0x150] sm:$0xff] %vm830, %v808
  %874 = vst.msk [vmem:[%s3 + $0x158] sm:$0xff] %vm830, %v809
  %875 = vst.msk [vmem:[%s3 + $0x160] sm:$0xff] %vm830, %v810
  %876 = vst.msk [vmem:[%s3 + $0x168] sm:$0xff] %vm830, %v811
  %877 = vst.msk [vmem:[%s3 + $0x170] sm:$0xff] %vm830, %v812
  %878 = vst.msk [vmem:[%s3 + $0x178] sm:$0xff] %vm830, %v813
  %879 = vst.msk [vmem:[%s3 + $0x180] sm:$0xff] %vm830, %v814
  %880 = vst.msk [vmem:[%s3 + $0x188] sm:$0xff] %vm830, %v815
  %881 = vst.msk [vmem:[%s3 + $0x190] sm:$0xff] %vm830, %v816
  %882 = vst.msk [vmem:[%s3 + $0x198] sm:$0xff] %vm830, %v817
  %883 = vst.msk [vmem:[%s3 + $0x1a0] sm:$0xff] %vm830, %v818
  %884 = vst.msk [vmem:[%s3 + $0x1a8] sm:$0xff] %vm830, %v819
  %885 = vst.msk [vmem:[%s3 + $0x1b0] sm:$0xff] %vm830, %v820
  %886 = vst.msk [vmem:[%s3 + $0x1b8] sm:$0xff] %vm830, %v821
  %887 = vst.msk [vmem:[%s3 + $0x1c0] sm:$0xff] %vm830, %v822
  %888 = vst.msk [vmem:[%s3 + $0x1c8] sm:$0xff] %vm830, %v823
  %889 = vst.msk [vmem:[%s3 + $0x1d0] sm:$0xff] %vm830, %v824
  %890 = vst.msk [vmem:[%s3 + $0x1d8] sm:$0xff] %vm830, %v825
  %891 = vst.msk [vmem:[%s3 + $0x1e0] sm:$0xff] %vm830, %v826
  %892 = vst.msk [vmem:[%s3 + $0x1e8] sm:$0xff] %vm830, %v827
  %893 = vst.msk [vmem:[%s3 + $0x1f0] sm:$0xff] %vm830, %v828
  %894 = vst.msk [vmem:[%s3 + $0x1f8] sm:$0xff] %vm830, %v829
  // Predicated region
  $region18: #{bottleneck1_forward.3} parent=0 // pred_check
    %p895 = pneg %p15
  $region19: #{bottleneck1_forward.3} parent=0 // pred_check_branch
    %897 = sbr.rel (%p895) target = $region21
  $region20: #{bottleneck1_forward.3} parent=0 // pred_region
    %v898 = vld [vmem:[%s3] sm:$0xff]
    %v899 = vld [vmem:[%s3 + $0x8] sm:$0xff]
    %v900 = vld [vmem:[%s3 + $0x10] sm:$0xff]
    %v901 = vld [vmem:[%s3 + $0x18] sm:$0xff]
    %v902 = vld [vmem:[%s3 + $0x20] sm:$0xff]
    %v903 = vld [vmem:[%s3 + $0x28] sm:$0xff]
    %v904 = vld [vmem:[%s3 + $0x30] sm:$0xff]
    %v905 = vld [vmem:[%s3 + $0x38] sm:$0xff]
    %v906 = vld [vmem:[%s3 + $0x40] sm:$0xff]
    %v907 = vld [vmem:[%s3 + $0x48] sm:$0xff]
    %v908 = vld [vmem:[%s3 + $0x50] sm:$0xff]
    %v909 = vld [vmem:[%s3 + $0x58] sm:$0xff]
    %v910 = vld [vmem:[%s3 + $0x60] sm:$0xff]
    %v911 = vld [vmem:[%s3 + $0x68] sm:$0xff]
    %v912 = vld [vmem:[%s3 + $0x70] sm:$0xff]
    %v913 = vld [vmem:[%s3 + $0x78] sm:$0xff]
    %v914 = vld [vmem:[%s3 + $0x80] sm:$0xff]
    %v915 = vld [vmem:[%s3 + $0x88] sm:$0xff]
    %v916 = vld [vmem:[%s3 + $0x90] sm:$0xff]
    %v917 = vld [vmem:[%s3 + $0x98] sm:$0xff]
    %v918 = vld [vmem:[%s3 + $0xa0] sm:$0xff]
    %v919 = vld [vmem:[%s3 + $0xa8] sm:$0xff]
    %v920 = vld [vmem:[%s3 + $0xb0] sm:$0xff]
    %v921 = vld [vmem:[%s3 + $0xb8] sm:$0xff]
    %v922 = vld [vmem:[%s3 + $0xc0] sm:$0xff]
    %v923 = vld [vmem:[%s3 + $0xc8] sm:$0xff]
    %v924 = vld [vmem:[%s3 + $0xd0] sm:$0xff]
    %v925 = vld [vmem:[%s3 + $0xd8] sm:$0xff]
    %v926 = vld [vmem:[%s3 + $0xe0] sm:$0xff]
    %v927 = vld [vmem:[%s3 + $0xe8] sm:$0xff]
    %v928 = vld [vmem:[%s3 + $0xf0] sm:$0xff]
    %v929 = vld [vmem:[%s3 + $0xf8] sm:$0xff]
    %v930 = vld [vmem:[%s3 + $0x100] sm:$0xff]
    %v931 = vld [vmem:[%s3 + $0x108] sm:$0xff]
    %v932 = vld [vmem:[%s3 + $0x110] sm:$0xff]
    %v933 = vld [vmem:[%s3 + $0x118] sm:$0xff]
    %v934 = vld [vmem:[%s3 + $0x120] sm:$0xff]
    %v935 = vld [vmem:[%s3 + $0x128] sm:$0xff]
    %v936 = vld [vmem:[%s3 + $0x130] sm:$0xff]
    %v937 = vld [vmem:[%s3 + $0x138] sm:$0xff]
    %v938 = vld [vmem:[%s3 + $0x140] sm:$0xff]
    %v939 = vld [vmem:[%s3 + $0x148] sm:$0xff]
    %v940 = vld [vmem:[%s3 + $0x150] sm:$0xff]
    %v941 = vld [vmem:[%s3 + $0x158] sm:$0xff]
    %v942 = vld [vmem:[%s3 + $0x160] sm:$0xff]
    %v943 = vld [vmem:[%s3 + $0x168] sm:$0xff]
    %v944 = vld [vmem:[%s3 + $0x170] sm:$0xff]
    %v945 = vld [vmem:[%s3 + $0x178] sm:$0xff]
    %v946 = vld [vmem:[%s3 + $0x180] sm:$0xff]
    %v947 = vld [vmem:[%s3 + $0x188] sm:$0xff]
    %v948 = vld [vmem:[%s3 + $0x190] sm:$0xff]
    %v949 = vld [vmem:[%s3 + $0x198] sm:$0xff]
    %v950 = vld [vmem:[%s3 + $0x1a0] sm:$0xff]
    %v951 = vld [vmem:[%s3 + $0x1a8] sm:$0xff]
    %v952 = vld [vmem:[%s3 + $0x1b0] sm:$0xff]
    %v953 = vld [vmem:[%s3 + $0x1b8] sm:$0xff]
    %v954 = vld [vmem:[%s3 + $0x1c0] sm:$0xff]
    %v955 = vld [vmem:[%s3 + $0x1c8] sm:$0xff]
    %v956 = vld [vmem:[%s3 + $0x1d0] sm:$0xff]
    %v957 = vld [vmem:[%s3 + $0x1d8] sm:$0xff]
    %v958 = vld [vmem:[%s3 + $0x1e0] sm:$0xff]
    %v959 = vld [vmem:[%s3 + $0x1e8] sm:$0xff]
    %v960 = vld [vmem:[%s3 + $0x1f0] sm:$0xff]
    %v961 = vld [vmem:[%s3 + $0x1f8] sm:$0xff]
    %v962 = vld [vmem:[%s2] sm:$0x1]
    %v964 = vlaneseq
    %v965 = vshrl.u32 %v964, 7
    %v966 = vsub.s32 0, %v965
    %v967 = vrot.slane %v962, %v966
    %v969 = vadd.f32 %v898, %v967
    %v970 = vadd.f32 %v899, %v967
    %v971 = vadd.f32 %v900, %v967
    %v972 = vadd.f32 %v901, %v967
    %v973 = vadd.f32 %v902, %v967
    %v974 = vadd.f32 %v903, %v967
    %v975 = vadd.f32 %v904, %v967
    %v976 = vadd.f32 %v905, %v967
    %v977 = vadd.f32 %v906, %v967
    %v978 = vadd.f32 %v907, %v967
    %v979 = vadd.f32 %v908, %v967
    %v980 = vadd.f32 %v909, %v967
    %v981 = vadd.f32 %v910, %v967
    %v982 = vadd.f32 %v911, %v967
    %v983 = vadd.f32 %v912, %v967
    %v984 = vadd.f32 %v913, %v967
    %v985 = vadd.f32 %v914, %v967
    %v986 = vadd.f32 %v915, %v967
    %v987 = vadd.f32 %v916, %v967
    %v988 = vadd.f32 %v917, %v967
    %v989 = vadd.f32 %v918, %v967
    %v990 = vadd.f32 %v919, %v967
    %v991 = vadd.f32 %v920, %v967
    %v992 = vadd.f32 %v921, %v967
    %v993 = vadd.f32 %v922, %v967
    %v994 = vadd.f32 %v923, %v967
    %v995 = vadd.f32 %v924, %v967
    %v996 = vadd.f32 %v925, %v967
    %v997 = vadd.f32 %v926, %v967
    %v998 = vadd.f32 %v927, %v967
    %v999 = vadd.f32 %v928, %v967
    %v1000 = vadd.f32 %v929, %v967
    %v1001 = vadd.f32 %v930, %v967
    %v1002 = vadd.f32 %v931, %v967
    %v1003 = vadd.f32 %v932, %v967
    %v1004 = vadd.f32 %v933, %v967
    %v1005 = vadd.f32 %v934, %v967
    %v1006 = vadd.f32 %v935, %v967
    %v1007 = vadd.f32 %v936, %v967
    %v1008 = vadd.f32 %v937, %v967
    %v1009 = vadd.f32 %v938, %v967
    %v1010 = vadd.f32 %v939, %v967
    %v1011 = vadd.f32 %v940, %v967
    %v1012 = vadd.f32 %v941, %v967
    %v1013 = vadd.f32 %v942, %v967
    %v1014 = vadd.f32 %v943, %v967
    %v1015 = vadd.f32 %v944, %v967
    %v1016 = vadd.f32 %v945, %v967
    %v1017 = vadd.f32 %v946, %v967
    %v1018 = vadd.f32 %v947, %v967
    %v1019 = vadd.f32 %v948, %v967
    %v1020 = vadd.f32 %v949, %v967
    %v1021 = vadd.f32 %v950, %v967
    %v1022 = vadd.f32 %v951, %v967
    %v1023 = vadd.f32 %v952, %v967
    %v1024 = vadd.f32 %v953, %v967
    %v1025 = vadd.f32 %v954, %v967
    %v1026 = vadd.f32 %v955, %v967
    %v1027 = vadd.f32 %v956, %v967
    %v1028 = vadd.f32 %v957, %v967
    %v1029 = vadd.f32 %v958, %v967
    %v1030 = vadd.f32 %v959, %v967
    %v1031 = vadd.f32 %v960, %v967
    %v1032 = vadd.f32 %v961, %v967
    %v1033 = vmax.f32 %v969, 0.0
    %v1034 = vmax.f32 %v970, 0.0
    %v1035 = vmax.f32 %v971, 0.0
    %v1036 = vmax.f32 %v972, 0.0
    %v1037 = vmax.f32 %v973, 0.0
    %v1038 = vmax.f32 %v974, 0.0
    %v1039 = vmax.f32 %v975, 0.0
    %v1040 = vmax.f32 %v976, 0.0
    %v1041 = vmax.f32 %v977, 0.0
    %v1042 = vmax.f32 %v978, 0.0
    %v1043 = vmax.f32 %v979, 0.0
    %v1044 = vmax.f32 %v980, 0.0
    %v1045 = vmax.f32 %v981, 0.0
    %v1046 = vmax.f32 %v982, 0.0
    %v1047 = vmax.f32 %v983, 0.0
    %v1048 = vmax.f32 %v984, 0.0
    %v1049 = vmax.f32 %v985, 0.0
    %v1050 = vmax.f32 %v986, 0.0
    %v1051 = vmax.f32 %v987, 0.0
    %v1052 = vmax.f32 %v988, 0.0
    %v1053 = vmax.f32 %v989, 0.0
    %v1054 = vmax.f32 %v990, 0.0
    %v1055 = vmax.f32 %v991, 0.0
    %v1056 = vmax.f32 %v992, 0.0
    %v1057 = vmax.f32 %v993, 0.0
    %v1058 = vmax.f32 %v994, 0.0
    %v1059 = vmax.f32 %v995, 0.0
    %v1060 = vmax.f32 %v996, 0.0
    %v1061 = vmax.f32 %v997, 0.0
    %v1062 = vmax.f32 %v998, 0.0
    %v1063 = vmax.f32 %v999, 0.0
    %v1064 = vmax.f32 %v1000, 0.0
    %v1065 = vmax.f32 %v1001, 0.0
    %v1066 = vmax.f32 %v1002, 0.0
    %v1067 = vmax.f32 %v1003, 0.0
    %v1068 = vmax.f32 %v1004, 0.0
    %v1069 = vmax.f32 %v1005, 0.0
    %v1070 = vmax.f32 %v1006, 0.0
    %v1071 = vmax.f32 %v1007, 0.0
    %v1072 = vmax.f32 %v1008, 0.0
    %v1073 = vmax.f32 %v1009, 0.0
    %v1074 = vmax.f32 %v1010, 0.0
    %v1075 = vmax.f32 %v1011, 0.0
    %v1076 = vmax.f32 %v1012, 0.0
    %v1077 = vmax.f32 %v1013, 0.0
    %v1078 = vmax.f32 %v1014, 0.0
    %v1079 = vmax.f32 %v1015, 0.0
    %v1080 = vmax.f32 %v1016, 0.0
    %v1081 = vmax.f32 %v1017, 0.0
    %v1082 = vmax.f32 %v1018, 0.0
    %v1083 = vmax.f32 %v1019, 0.0
    %v1084 = vmax.f32 %v1020, 0.0
    %v1085 = vmax.f32 %v1021, 0.0
    %v1086 = vmax.f32 %v1022, 0.0
    %v1087 = vmax.f32 %v1023, 0.0
    %v1088 = vmax.f32 %v1024, 0.0
    %v1089 = vmax.f32 %v1025, 0.0
    %v1090 = vmax.f32 %v1026, 0.0
    %v1091 = vmax.f32 %v1027, 0.0
    %v1092 = vmax.f32 %v1028, 0.0
    %v1093 = vmax.f32 %v1029, 0.0
    %v1094 = vmax.f32 %v1030, 0.0
    %v1095 = vmax.f32 %v1031, 0.0
    %v1096 = vmax.f32 %v1032, 0.0
    %1097 = vst.msk [vmem:[%s3] sm:$0xff] %vm830, %v1033
    %1098 = vst.msk [vmem:[%s3 + $0x8] sm:$0xff] %vm830, %v1034
    %1099 = vst.msk [vmem:[%s3 + $0x10] sm:$0xff] %vm830, %v1035
    %1100 = vst.msk [vmem:[%s3 + $0x18] sm:$0xff] %vm830, %v1036
    %1101 = vst.msk [vmem:[%s3 + $0x20] sm:$0xff] %vm830, %v1037
    %1102 = vst.msk [vmem:[%s3 + $0x28] sm:$0xff] %vm830, %v1038
    %1103 = vst.msk [vmem:[%s3 + $0x30] sm:$0xff] %vm830, %v1039
    %1104 = vst.msk [vmem:[%s3 + $0x38] sm:$0xff] %vm830, %v1040
    %1105 = vst.msk [vmem:[%s3 + $0x40] sm:$0xff] %vm830, %v1041
    %1106 = vst.msk [vmem:[%s3 + $0x48] sm:$0xff] %vm830, %v1042
    %1107 = vst.msk [vmem:[%s3 + $0x50] sm:$0xff] %vm830, %v1043
    %1108 = vst.msk [vmem:[%s3 + $0x58] sm:$0xff] %vm830, %v1044
    %1109 = vst.msk [vmem:[%s3 + $0x60] sm:$0xff] %vm830, %v1045
    %1110 = vst.msk [vmem:[%s3 + $0x68] sm:$0xff] %vm830, %v1046
    %1111 = vst.msk [vmem:[%s3 + $0x70] sm:$0xff] %vm830, %v1047
    %1112 = vst.msk [vmem:[%s3 + $0x78] sm:$0xff] %vm830, %v1048
    %1113 = vst.msk [vmem:[%s3 + $0x80] sm:$0xff] %vm830, %v1049
    %1114 = vst.msk [vmem:[%s3 + $0x88] sm:$0xff] %vm830, %v1050
    %1115 = vst.msk [vmem:[%s3 + $0x90] sm:$0xff] %vm830, %v1051
    %1116 = vst.msk [vmem:[%s3 + $0x98] sm:$0xff] %vm830, %v1052
    %1117 = vst.msk [vmem:[%s3 + $0xa0] sm:$0xff] %vm830, %v1053
    %1118 = vst.msk [vmem:[%s3 + $0xa8] sm:$0xff] %vm830, %v1054
    %1119 = vst.msk [vmem:[%s3 + $0xb0] sm:$0xff] %vm830, %v1055
    %1120 = vst.msk [vmem:[%s3 + $0xb8] sm:$0xff] %vm830, %v1056
    %1121 = vst.msk [vmem:[%s3 + $0xc0] sm:$0xff] %vm830, %v1057
    %1122 = vst.msk [vmem:[%s3 + $0xc8] sm:$0xff] %vm830, %v1058
    %1123 = vst.msk [vmem:[%s3 + $0xd0] sm:$0xff] %vm830, %v1059
    %1124 = vst.msk [vmem:[%s3 + $0xd8] sm:$0xff] %vm830, %v1060
    %1125 = vst.msk [vmem:[%s3 + $0xe0] sm:$0xff] %vm830, %v1061
    %1126 = vst.msk [vmem:[%s3 + $0xe8] sm:$0xff] %vm830, %v1062
    %1127 = vst.msk [vmem:[%s3 + $0xf0] sm:$0xff] %vm830, %v1063
    %1128 = vst.msk [vmem:[%s3 + $0xf8] sm:$0xff] %vm830, %v1064
    %1129 = vst.msk [vmem:[%s3 + $0x100] sm:$0xff] %vm830, %v1065
    %1130 = vst.msk [vmem:[%s3 + $0x108] sm:$0xff] %vm830, %v1066
    %1131 = vst.msk [vmem:[%s3 + $0x110] sm:$0xff] %vm830, %v1067
    %1132 = vst.msk [vmem:[%s3 + $0x118] sm:$0xff] %vm830, %v1068
    %1133 = vst.msk [vmem:[%s3 + $0x120] sm:$0xff] %vm830, %v1069
    %1134 = vst.msk [vmem:[%s3 + $0x128] sm:$0xff] %vm830, %v1070
    %1135 = vst.msk [vmem:[%s3 + $0x130] sm:$0xff] %vm830, %v1071
    %1136 = vst.msk [vmem:[%s3 + $0x138] sm:$0xff] %vm830, %v1072
    %1137 = vst.msk [vmem:[%s3 + $0x140] sm:$0xff] %vm830, %v1073
    %1138 = vst.msk [vmem:[%s3 + $0x148] sm:$0xff] %vm830, %v1074
    %1139 = vst.msk [vmem:[%s3 + $0x150] sm:$0xff] %vm830, %v1075
    %1140 = vst.msk [vmem:[%s3 + $0x158] sm:$0xff] %vm830, %v1076
    %1141 = vst.msk [vmem:[%s3 + $0x160] sm:$0xff] %vm830, %v1077
    %1142 = vst.msk [vmem:[%s3 + $0x168] sm:$0xff] %vm830, %v1078
    %1143 = vst.msk [vmem:[%s3 + $0x170] sm:$0xff] %vm830, %v1079
    %1144 = vst.msk [vmem:[%s3 + $0x178] sm:$0xff] %vm830, %v1080
    %1145 = vst.msk [vmem:[%s3 + $0x180] sm:$0xff] %vm830, %v1081
    %1146 = vst.msk [vmem:[%s3 + $0x188] sm:$0xff] %vm830, %v1082
    %1147 = vst.msk [vmem:[%s3 + $0x190] sm:$0xff] %vm830, %v1083
    %1148 = vst.msk [vmem:[%s3 + $0x198] sm:$0xff] %vm830, %v1084
    %1149 = vst.msk [vmem:[%s3 + $0x1a0] sm:$0xff] %vm830, %v1085
    %1150 = vst.msk [vmem:[%s3 + $0x1a8] sm:$0xff] %vm830, %v1086
    %1151 = vst.msk [vmem:[%s3 + $0x1b0] sm:$0xff] %vm830, %v1087
    %1152 = vst.msk [vmem:[%s3 + $0x1b8] sm:$0xff] %vm830, %v1088
    %1153 = vst.msk [vmem:[%s3 + $0x1c0] sm:$0xff] %vm830, %v1089
    %1154 = vst.msk [vmem:[%s3 + $0x1c8] sm:$0xff] %vm830, %v1090
    %1155 = vst.msk [vmem:[%s3 + $0x1d0] sm:$0xff] %vm830, %v1091
    %1156 = vst.msk [vmem:[%s3 + $0x1d8] sm:$0xff] %vm830, %v1092
    %1157 = vst.msk [vmem:[%s3 + $0x1e0] sm:$0xff] %vm830, %v1093
    %1158 = vst.msk [vmem:[%s3 + $0x1e8] sm:$0xff] %vm830, %v1094
    %1159 = vst.msk [vmem:[%s3 + $0x1f0] sm:$0xff] %vm830, %v1095
    %1160 = vst.msk [vmem:[%s3 + $0x1f8] sm:$0xff] %vm830, %v1096
  $region21: #{bottleneck1_forward.3} parent=0 // pred_fallthru
    _
  // Predicated region
  $region22: #{bottleneck1_forward.3} parent=0 // pred_check
    _
  $region23: #{bottleneck1_forward.3} parent=0 // pred_check_branch
    %1162 = sbr.rel (0) target = $region25
  $region24: #{bottleneck1_forward.3} parent=0 // pred_region
    _
  $region25: #{bottleneck1_forward.3} parent=0 // pred_fallthru
    _
  // Predicated region
  $region26: #{bottleneck1_forward.3} parent=0 // pred_check
    _
  $region27: #{bottleneck1_forward.3} parent=0 // pred_check_branch
    %1164 = sbr.rel (0) target = $region29
  $region28: #{bottleneck1_forward.3} parent=0 // pred_region
    _
  $region29: #{bottleneck1_forward.3} parent=0 // pred_fallthru
    _

// kernel: bottleneck1_forward.4
$region0: #{bottleneck1_forward.4}
  #allocation0 [shape = 'u32[]', space=smem, size = 0x4, offset = 0x4, fixed_abs, tag = 'smem constant byte address 0x4 - core index']
  #allocation1 [shape = 'u32[144,128]{1,0:T(1,128)}', space=vmem, size = 0x12000, scoped, tag = 'internal scratch']
  %s0 = inlined_call_operand.vmem [shape: bf16[512,36], index: 0, kind: input, shape index: {}]
  %s1 = inlined_call_operand.vmem [shape: bf16[36,4], index: 1, kind: input, shape index: {}]
  %s2 = inlined_call_operand.vmem [shape: f32[1,4], index: 2, kind: input, shape index: {}]
  %s3 = inlined_call_operand.vmem [shape: f32[512,4], index: 3, kind: output, shape index: {}]
  %s4 = sld [smem:[#allocation0]]
  $region30: #{bottleneck1_forward.4} parent=0
    _
  %s6 = ssub.s32 1, %s4
  %s7 = scalar_select 0, %s6, %s4
  // Predicated region
  $region2: #{bottleneck1_forward.4} parent=0 // pred_check
    _
  $region3: #{bottleneck1_forward.4} parent=0 // pred_check_branch
    %9 = sbr.rel (0) target = $region5
  $region4: #{bottleneck1_forward.4} parent=0 // pred_region
    _
  $region5: #{bottleneck1_forward.4} parent=0 // pred_fallthru
    _
  // Predicated region
  $region6: #{bottleneck1_forward.4} parent=0 // pred_check
    _
  $region7: #{bottleneck1_forward.4} parent=0 // pred_check_branch
    %11 = sbr.rel (0) target = $region9
  $region8: #{bottleneck1_forward.4} parent=0 // pred_region
    _
  $region9: #{bottleneck1_forward.4} parent=0 // pred_fallthru
    _
  // Predicated region
  $region10: #{bottleneck1_forward.4} parent=0 // pred_check
    _
  $region11: #{bottleneck1_forward.4} parent=0 // pred_check_branch
    %13 = sbr.rel (0) target = $region13
  $region12: #{bottleneck1_forward.4} parent=0 // pred_region
    _
  $region13: #{bottleneck1_forward.4} parent=0 // pred_fallthru
    _
  %p15 = scmp.eq.s32.totalorder 0, 0
  // Predicated region
  $region14: #{bottleneck1_forward.4} parent=0 // pred_check
    %p16 = pneg %p15
  $region15: #{bottleneck1_forward.4} parent=0 // pred_check_branch
    %18 = sbr.rel (%p16) target = $region17
  $region16: #{bottleneck1_forward.4} parent=0 // pred_region
    %vm19 = vcmask 31744
    %20 = vst.msk [vmem:[%s3] sm:$0xff] %vm19, 0.0
    %21 = vst.msk [vmem:[%s3 + $0x8] sm:$0xff] %vm19, 0.0
    %22 = vst.msk [vmem:[%s3 + $0x10] sm:$0xff] %vm19, 0.0
    %23 = vst.msk [vmem:[%s3 + $0x18] sm:$0xff] %vm19, 0.0
    %24 = vst.msk [vmem:[%s3 + $0x20] sm:$0xff] %vm19, 0.0
    %25 = vst.msk [vmem:[%s3 + $0x28] sm:$0xff] %vm19, 0.0
    %26 = vst.msk [vmem:[%s3 + $0x30] sm:$0xff] %vm19, 0.0
    %27 = vst.msk [vmem:[%s3 + $0x38] sm:$0xff] %vm19, 0.0
    %28 = vst.msk [vmem:[%s3 + $0x40] sm:$0xff] %vm19, 0.0
    %29 = vst.msk [vmem:[%s3 + $0x48] sm:$0xff] %vm19, 0.0
    %30 = vst.msk [vmem:[%s3 + $0x50] sm:$0xff] %vm19, 0.0
    %31 = vst.msk [vmem:[%s3 + $0x58] sm:$0xff] %vm19, 0.0
    %32 = vst.msk [vmem:[%s3 + $0x60] sm:$0xff] %vm19, 0.0
    %33 = vst.msk [vmem:[%s3 + $0x68] sm:$0xff] %vm19, 0.0
    %34 = vst.msk [vmem:[%s3 + $0x70] sm:$0xff] %vm19, 0.0
    %35 = vst.msk [vmem:[%s3 + $0x78] sm:$0xff] %vm19, 0.0
    %36 = vst.msk [vmem:[%s3 + $0x80] sm:$0xff] %vm19, 0.0
    %37 = vst.msk [vmem:[%s3 + $0x88] sm:$0xff] %vm19, 0.0
    %38 = vst.msk [vmem:[%s3 + $0x90] sm:$0xff] %vm19, 0.0
    %39 = vst.msk [vmem:[%s3 + $0x98] sm:$0xff] %vm19, 0.0
    %40 = vst.msk [vmem:[%s3 + $0xa0] sm:$0xff] %vm19, 0.0
    %41 = vst.msk [vmem:[%s3 + $0xa8] sm:$0xff] %vm19, 0.0
    %42 = vst.msk [vmem:[%s3 + $0xb0] sm:$0xff] %vm19, 0.0
    %43 = vst.msk [vmem:[%s3 + $0xb8] sm:$0xff] %vm19, 0.0
    %44 = vst.msk [vmem:[%s3 + $0xc0] sm:$0xff] %vm19, 0.0
    %45 = vst.msk [vmem:[%s3 + $0xc8] sm:$0xff] %vm19, 0.0
    %46 = vst.msk [vmem:[%s3 + $0xd0] sm:$0xff] %vm19, 0.0
    %47 = vst.msk [vmem:[%s3 + $0xd8] sm:$0xff] %vm19, 0.0
    %48 = vst.msk [vmem:[%s3 + $0xe0] sm:$0xff] %vm19, 0.0
    %49 = vst.msk [vmem:[%s3 + $0xe8] sm:$0xff] %vm19, 0.0
    %50 = vst.msk [vmem:[%s3 + $0xf0] sm:$0xff] %vm19, 0.0
    %51 = vst.msk [vmem:[%s3 + $0xf8] sm:$0xff] %vm19, 0.0
    %52 = vst.msk [vmem:[%s3 + $0x100] sm:$0xff] %vm19, 0.0
    %53 = vst.msk [vmem:[%s3 + $0x108] sm:$0xff] %vm19, 0.0
    %54 = vst.msk [vmem:[%s3 + $0x110] sm:$0xff] %vm19, 0.0
    %55 = vst.msk [vmem:[%s3 + $0x118] sm:$0xff] %vm19, 0.0
    %56 = vst.msk [vmem:[%s3 + $0x120] sm:$0xff] %vm19, 0.0
    %57 = vst.msk [vmem:[%s3 + $0x128] sm:$0xff] %vm19, 0.0
    %58 = vst.msk [vmem:[%s3 + $0x130] sm:$0xff] %vm19, 0.0
    %59 = vst.msk [vmem:[%s3 + $0x138] sm:$0xff] %vm19, 0.0
    %60 = vst.msk [vmem:[%s3 + $0x140] sm:$0xff] %vm19, 0.0
    %61 = vst.msk [vmem:[%s3 + $0x148] sm:$0xff] %vm19, 0.0
    %62 = vst.msk [vmem:[%s3 + $0x150] sm:$0xff] %vm19, 0.0
    %63 = vst.msk [vmem:[%s3 + $0x158] sm:$0xff] %vm19, 0.0
    %64 = vst.msk [vmem:[%s3 + $0x160] sm:$0xff] %vm19, 0.0
    %65 = vst.msk [vmem:[%s3 + $0x168] sm:$0xff] %vm19, 0.0
    %66 = vst.msk [vmem:[%s3 + $0x170] sm:$0xff] %vm19, 0.0
    %67 = vst.msk [vmem:[%s3 + $0x178] sm:$0xff] %vm19, 0.0
    %68 = vst.msk [vmem:[%s3 + $0x180] sm:$0xff] %vm19, 0.0
    %69 = vst.msk [vmem:[%s3 + $0x188] sm:$0xff] %vm19, 0.0
    %70 = vst.msk [vmem:[%s3 + $0x190] sm:$0xff] %vm19, 0.0
    %71 = vst.msk [vmem:[%s3 + $0x198] sm:$0xff] %vm19, 0.0
    %72 = vst.msk [vmem:[%s3 + $0x1a0] sm:$0xff] %vm19, 0.0
    %73 = vst.msk [vmem:[%s3 + $0x1a8] sm:$0xff] %vm19, 0.0
    %74 = vst.msk [vmem:[%s3 + $0x1b0] sm:$0xff] %vm19, 0.0
    %75 = vst.msk [vmem:[%s3 + $0x1b8] sm:$0xff] %vm19, 0.0
    %76 = vst.msk [vmem:[%s3 + $0x1c0] sm:$0xff] %vm19, 0.0
    %77 = vst.msk [vmem:[%s3 + $0x1c8] sm:$0xff] %vm19, 0.0
    %78 = vst.msk [vmem:[%s3 + $0x1d0] sm:$0xff] %vm19, 0.0
    %79 = vst.msk [vmem:[%s3 + $0x1d8] sm:$0xff] %vm19, 0.0
    %80 = vst.msk [vmem:[%s3 + $0x1e0] sm:$0xff] %vm19, 0.0
    %81 = vst.msk [vmem:[%s3 + $0x1e8] sm:$0xff] %vm19, 0.0
    %82 = vst.msk [vmem:[%s3 + $0x1f0] sm:$0xff] %vm19, 0.0
    %83 = vst.msk [vmem:[%s3 + $0x1f8] sm:$0xff] %vm19, 0.0
  $region17: #{bottleneck1_forward.4} parent=0 // pred_fallthru
    _
  %v84 = vld [vmem:[%s3] sm:$0xff]
  %v85 = vld [vmem:[%s3 + $0x8] sm:$0xff]
  %v86 = vld [vmem:[%s3 + $0x10] sm:$0xff]
  %v87 = vld [vmem:[%s3 + $0x18] sm:$0xff]
  %v88 = vld [vmem:[%s3 + $0x20] sm:$0xff]
  %v89 = vld [vmem:[%s3 + $0x28] sm:$0xff]
  %v90 = vld [vmem:[%s3 + $0x30] sm:$0xff]
  %v91 = vld [vmem:[%s3 + $0x38] sm:$0xff]
  %v92 = vld [vmem:[%s3 + $0x40] sm:$0xff]
  %v93 = vld [vmem:[%s3 + $0x48] sm:$0xff]
  %v94 = vld [vmem:[%s3 + $0x50] sm:$0xff]
  %v95 = vld [vmem:[%s3 + $0x58] sm:$0xff]
  %v96 = vld [vmem:[%s3 + $0x60] sm:$0xff]
  %v97 = vld [vmem:[%s3 + $0x68] sm:$0xff]
  %v98 = vld [vmem:[%s3 + $0x70] sm:$0xff]
  %v99 = vld [vmem:[%s3 + $0x78] sm:$0xff]
  %v100 = vld [vmem:[%s3 + $0x80] sm:$0xff]
  %v101 = vld [vmem:[%s3 + $0x88] sm:$0xff]
  %v102 = vld [vmem:[%s3 + $0x90] sm:$0xff]
  %v103 = vld [vmem:[%s3 + $0x98] sm:$0xff]
  %v104 = vld [vmem:[%s3 + $0xa0] sm:$0xff]
  %v105 = vld [vmem:[%s3 + $0xa8] sm:$0xff]
  %v106 = vld [vmem:[%s3 + $0xb0] sm:$0xff]
  %v107 = vld [vmem:[%s3 + $0xb8] sm:$0xff]
  %v108 = vld [vmem:[%s3 + $0xc0] sm:$0xff]
  %v109 = vld [vmem:[%s3 + $0xc8] sm:$0xff]
  %v110 = vld [vmem:[%s3 + $0xd0] sm:$0xff]
  %v111 = vld [vmem:[%s3 + $0xd8] sm:$0xff]
  %v112 = vld [vmem:[%s3 + $0xe0] sm:$0xff]
  %v113 = vld [vmem:[%s3 + $0xe8] sm:$0xff]
  %v114 = vld [vmem:[%s3 + $0xf0] sm:$0xff]
  %v115 = vld [vmem:[%s3 + $0xf8] sm:$0xff]
  %v116 = vld [vmem:[%s3 + $0x100] sm:$0xff]
  %v117 = vld [vmem:[%s3 + $0x108] sm:$0xff]
  %v118 = vld [vmem:[%s3 + $0x110] sm:$0xff]
  %v119 = vld [vmem:[%s3 + $0x118] sm:$0xff]
  %v120 = vld [vmem:[%s3 + $0x120] sm:$0xff]
  %v121 = vld [vmem:[%s3 + $0x128] sm:$0xff]
  %v122 = vld [vmem:[%s3 + $0x130] sm:$0xff]
  %v123 = vld [vmem:[%s3 + $0x138] sm:$0xff]
  %v124 = vld [vmem:[%s3 + $0x140] sm:$0xff]
  %v125 = vld [vmem:[%s3 + $0x148] sm:$0xff]
  %v126 = vld [vmem:[%s3 + $0x150] sm:$0xff]
  %v127 = vld [vmem:[%s3 + $0x158] sm:$0xff]
  %v128 = vld [vmem:[%s3 + $0x160] sm:$0xff]
  %v129 = vld [vmem:[%s3 + $0x168] sm:$0xff]
  %v130 = vld [vmem:[%s3 + $0x170] sm:$0xff]
  %v131 = vld [vmem:[%s3 + $0x178] sm:$0xff]
  %v132 = vld [vmem:[%s3 + $0x180] sm:$0xff]
  %v133 = vld [vmem:[%s3 + $0x188] sm:$0xff]
  %v134 = vld [vmem:[%s3 + $0x190] sm:$0xff]
  %v135 = vld [vmem:[%s3 + $0x198] sm:$0xff]
  %v136 = vld [vmem:[%s3 + $0x1a0] sm:$0xff]
  %v137 = vld [vmem:[%s3 + $0x1a8] sm:$0xff]
  %v138 = vld [vmem:[%s3 + $0x1b0] sm:$0xff]
  %v139 = vld [vmem:[%s3 + $0x1b8] sm:$0xff]
  %v140 = vld [vmem:[%s3 + $0x1c0] sm:$0xff]
  %v141 = vld [vmem:[%s3 + $0x1c8] sm:$0xff]
  %v142 = vld [vmem:[%s3 + $0x1d0] sm:$0xff]
  %v143 = vld [vmem:[%s3 + $0x1d8] sm:$0xff]
  %v144 = vld [vmem:[%s3 + $0x1e0] sm:$0xff]
  %v145 = vld [vmem:[%s3 + $0x1e8] sm:$0xff]
  %v146 = vld [vmem:[%s3 + $0x1f0] sm:$0xff]
  %v147 = vld [vmem:[%s3 + $0x1f8] sm:$0xff]
  %v148 = vld [vmem:[%s0] sm:$0xf]
  %v149 = vld [vmem:[%s0 + $0x4] sm:$0xf]
  %v150 = vld [vmem:[%s0 + $0x8] sm:$0xf]
  %v151 = vld [vmem:[%s0 + $0xc] sm:$0xf]
  %v152 = vld [vmem:[%s0 + $0x10] sm:$0xf]
  %v153 = vld [vmem:[%s0 + $0x14] sm:$0xf]
  %v154 = vld [vmem:[%s0 + $0x18] sm:$0xf]
  %v155 = vld [vmem:[%s0 + $0x1c] sm:$0xf]
  %v156 = vld [vmem:[%s0 + $0x20] sm:$0xf]
  %v157 = vld [vmem:[%s0 + $0x24] sm:$0xf]
  %v158 = vld [vmem:[%s0 + $0x28] sm:$0xf]
  %v159 = vld [vmem:[%s0 + $0x2c] sm:$0xf]
  %v160 = vld [vmem:[%s0 + $0x30] sm:$0xf]
  %v161 = vld [vmem:[%s0 + $0x34] sm:$0xf]
  %v162 = vld [vmem:[%s0 + $0x38] sm:$0xf]
  %v163 = vld [vmem:[%s0 + $0x3c] sm:$0xf]
  %v164 = vld [vmem:[%s0 + $0x40] sm:$0xf]
  %v165 = vld [vmem:[%s0 + $0x44] sm:$0xf]
  %v166 = vld [vmem:[%s0 + $0x48] sm:$0xf]
  %v167 = vld [vmem:[%s0 + $0x4c] sm:$0xf]
  %v168 = vld [vmem:[%s0 + $0x50] sm:$0xf]
  %v169 = vld [vmem:[%s0 + $0x54] sm:$0xf]
  %v170 = vld [vmem:[%s0 + $0x58] sm:$0xf]
  %v171 = vld [vmem:[%s0 + $0x5c] sm:$0xf]
  %v172 = vld [vmem:[%s0 + $0x60] sm:$0xf]
  %v173 = vld [vmem:[%s0 + $0x64] sm:$0xf]
  %v174 = vld [vmem:[%s0 + $0x68] sm:$0xf]
  %v175 = vld [vmem:[%s0 + $0x6c] sm:$0xf]
  %v176 = vld [vmem:[%s0 + $0x70] sm:$0xf]
  %v177 = vld [vmem:[%s0 + $0x74] sm:$0xf]
  %v178 = vld [vmem:[%s0 + $0x78] sm:$0xf]
  %v179 = vld [vmem:[%s0 + $0x7c] sm:$0xf]
  %v180 = vld [vmem:[%s0 + $0x80] sm:$0xf]
  %v181 = vld [vmem:[%s0 + $0x84] sm:$0xf]
  %v182 = vld [vmem:[%s0 + $0x88] sm:$0xf]
  %v183 = vld [vmem:[%s0 + $0x8c] sm:$0xf]
  %v184 = vld [vmem:[%s0 + $0x90] sm:$0xf]
  %v185 = vld [vmem:[%s0 + $0x94] sm:$0xf]
  %v186 = vld [vmem:[%s0 + $0x98] sm:$0xf]
  %v187 = vld [vmem:[%s0 + $0x9c] sm:$0xf]
  %v188 = vld [vmem:[%s0 + $0xa0] sm:$0xf]
  %v189 = vld [vmem:[%s0 + $0xa4] sm:$0xf]
  %v190 = vld [vmem:[%s0 + $0xa8] sm:$0xf]
  %v191 = vld [vmem:[%s0 + $0xac] sm:$0xf]
  %v192 = vld [vmem:[%s0 + $0xb0] sm:$0xf]
  %v193 = vld [vmem:[%s0 + $0xb4] sm:$0xf]
  %v194 = vld [vmem:[%s0 + $0xb8] sm:$0xf]
  %v195 = vld [vmem:[%s0 + $0xbc] sm:$0xf]
  %v196 = vld [vmem:[%s0 + $0xc0] sm:$0xf]
  %v197 = vld [vmem:[%s0 + $0xc4] sm:$0xf]
  %v198 = vld [vmem:[%s0 + $0xc8] sm:$0xf]
  %v199 = vld [vmem:[%s0 + $0xcc] sm:$0xf]
  %v200 = vld [vmem:[%s0 + $0xd0] sm:$0xf]
  %v201 = vld [vmem:[%s0 + $0xd4] sm:$0xf]
  %v202 = vld [vmem:[%s0 + $0xd8] sm:$0xf]
  %v203 = vld [vmem:[%s0 + $0xdc] sm:$0xf]
  %v204 = vld [vmem:[%s0 + $0xe0] sm:$0xf]
  %v205 = vld [vmem:[%s0 + $0xe4] sm:$0xf]
  %v206 = vld [vmem:[%s0 + $0xe8] sm:$0xf]
  %v207 = vld [vmem:[%s0 + $0xec] sm:$0xf]
  %v208 = vld [vmem:[%s0 + $0xf0] sm:$0xf]
  %v209 = vld [vmem:[%s0 + $0xf4] sm:$0xf]
  %v210 = vld [vmem:[%s0 + $0xf8] sm:$0xf]
  %v211 = vld [vmem:[%s0 + $0xfc] sm:$0xf]
  %v212 = vld [vmem:[%s1] sm:$0xf]
  %v213 = vld [vmem:[%s1 + $0x4] sm:$0xf]
  %v214 = vld [vmem:[%s1 + $0x8] sm:$0xf]
  %v215 = vld [vmem:[%s1 + $0xc] sm:$0xf]
  %v216 = vld [vmem:[%s1 + $0x10] sm:$0x3]
  %v281 = vunpack.c.l.b16 %v148
  %v282 = vunpack.c.l.b16 %v149
  %v283 = vunpack.c.l.b16 %v150
  %v284 = vunpack.c.l.b16 %v151
  %v285 = vunpack.c.l.b16 %v152
  %v286 = vunpack.c.l.b16 %v153
  %v287 = vunpack.c.l.b16 %v154
  %v288 = vunpack.c.l.b16 %v155
  %v289 = vunpack.c.l.b16 %v156
  %v290 = vunpack.c.l.b16 %v157
  %v291 = vunpack.c.l.b16 %v158
  %v292 = vunpack.c.l.b16 %v159
  %v293 = vunpack.c.l.b16 %v160
  %v294 = vunpack.c.l.b16 %v161
  %v295 = vunpack.c.l.b16 %v162
  %v296 = vunpack.c.l.b16 %v163
  %v297 = vunpack.c.l.b16 %v164
  %v298 = vunpack.c.l.b16 %v165
  %v299 = vunpack.c.l.b16 %v166
  %v300 = vunpack.c.l.b16 %v167
  %v301 = vunpack.c.l.b16 %v168
  %v302 = vunpack.c.l.b16 %v169
  %v303 = vunpack.c.l.b16 %v170
  %v304 = vunpack.c.l.b16 %v171
  %v305 = vunpack.c.l.b16 %v172
  %v306 = vunpack.c.l.b16 %v173
  %v307 = vunpack.c.l.b16 %v174
  %v308 = vunpack.c.l.b16 %v175
  %v309 = vunpack.c.l.b16 %v176
  %v310 = vunpack.c.l.b16 %v177
  %v311 = vunpack.c.l.b16 %v178
  %v312 = vunpack.c.l.b16 %v179
  %v313 = vunpack.c.l.b16 %v180
  %v314 = vunpack.c.l.b16 %v181
  %v315 = vunpack.c.l.b16 %v182
  %v316 = vunpack.c.l.b16 %v183
  %v317 = vunpack.c.l.b16 %v184
  %v318 = vunpack.c.l.b16 %v185
  %v319 = vunpack.c.l.b16 %v186
  %v320 = vunpack.c.l.b16 %v187
  %v321 = vunpack.c.l.b16 %v188
  %v322 = vunpack.c.l.b16 %v189
  %v323 = vunpack.c.l.b16 %v190
  %v324 = vunpack.c.l.b16 %v191
  %v325 = vunpack.c.l.b16 %v192
  %v326 = vunpack.c.l.b16 %v193
  %v327 = vunpack.c.l.b16 %v194
  %v328 = vunpack.c.l.b16 %v195
  %v329 = vunpack.c.l.b16 %v196
  %v330 = vunpack.c.l.b16 %v197
  %v331 = vunpack.c.l.b16 %v198
  %v332 = vunpack.c.l.b16 %v199
  %v333 = vunpack.c.l.b16 %v200
  %v334 = vunpack.c.l.b16 %v201
  %v335 = vunpack.c.l.b16 %v202
  %v336 = vunpack.c.l.b16 %v203
  %v337 = vunpack.c.l.b16 %v204
  %v338 = vunpack.c.l.b16 %v205
  %v339 = vunpack.c.l.b16 %v206
  %v340 = vunpack.c.l.b16 %v207
  %v341 = vunpack.c.l.b16 %v208
  %v342 = vunpack.c.l.b16 %v209
  %v343 = vunpack.c.l.b16 %v210
  %v344 = vunpack.c.l.b16 %v211
  %v345 = vpack.c.b16 %v282, %v281
  %v346 = vpack.c.b16 %v284, %v283
  %v347 = vpack.c.b16 %v286, %v285
  %v348 = vpack.c.b16 %v288, %v287
  %v349 = vpack.c.b16 %v290, %v289
  %v350 = vpack.c.b16 %v292, %v291
  %v351 = vpack.c.b16 %v294, %v293
  %v352 = vpack.c.b16 %v296, %v295
  %v353 = vpack.c.b16 %v298, %v297
  %v354 = vpack.c.b16 %v300, %v299
  %v355 = vpack.c.b16 %v302, %v301
  %v356 = vpack.c.b16 %v304, %v303
  %v357 = vpack.c.b16 %v306, %v305
  %v358 = vpack.c.b16 %v308, %v307
  %v359 = vpack.c.b16 %v310, %v309
  %v360 = vpack.c.b16 %v312, %v311
  %v361 = vpack.c.b16 %v314, %v313
  %v362 = vpack.c.b16 %v316, %v315
  %v363 = vpack.c.b16 %v318, %v317
  %v364 = vpack.c.b16 %v320, %v319
  %v365 = vpack.c.b16 %v322, %v321
  %v366 = vpack.c.b16 %v324, %v323
  %v367 = vpack.c.b16 %v326, %v325
  %v368 = vpack.c.b16 %v328, %v327
  %v369 = vpack.c.b16 %v330, %v329
  %v370 = vpack.c.b16 %v332, %v331
  %v371 = vpack.c.b16 %v334, %v333
  %v372 = vpack.c.b16 %v336, %v335
  %v373 = vpack.c.b16 %v338, %v337
  %v374 = vpack.c.b16 %v340, %v339
  %v375 = vpack.c.b16 %v342, %v341
  %v376 = vpack.c.b16 %v344, %v343
  %v382 = vunpack.c.l.b16 %v212
  %v383 = vunpack.c.l.b16 %v213
  %v384 = vunpack.c.l.b16 %v214
  %v385 = vunpack.c.l.b16 %v215
  %v386 = vunpack.c.l.b16 %v216
  %v387 = vpack.c.b16 %v383, %v382
  %v388 = vpack.c.b16 %v385, %v384
  %v389 = vpack.c.b16 %v386, %v386
  %vm392 = vcmask 293888
  %v394 = vsel %vm392, %v345, 0
  %v397 = vsel %vm392, %v346, 0
  %v400 = vsel %vm392, %v347, 0
  %v403 = vsel %vm392, %v348, 0
  %v406 = vsel %vm392, %v349, 0
  %v409 = vsel %vm392, %v350, 0
  %v412 = vsel %vm392, %v351, 0
  %v415 = vsel %vm392, %v352, 0
  %v418 = vsel %vm392, %v353, 0
  %v421 = vsel %vm392, %v354, 0
  %v424 = vsel %vm392, %v355, 0
  %v427 = vsel %vm392, %v356, 0
  %v430 = vsel %vm392, %v357, 0
  %v433 = vsel %vm392, %v358, 0
  %v436 = vsel %vm392, %v359, 0
  %v439 = vsel %vm392, %v360, 0
  %v442 = vsel %vm392, %v361, 0
  %v445 = vsel %vm392, %v362, 0
  %v448 = vsel %vm392, %v363, 0
  %v451 = vsel %vm392, %v364, 0
  %v454 = vsel %vm392, %v365, 0
  %v457 = vsel %vm392, %v366, 0
  %v460 = vsel %vm392, %v367, 0
  %v463 = vsel %vm392, %v368, 0
  %v466 = vsel %vm392, %v369, 0
  %v469 = vsel %vm392, %v370, 0
  %v472 = vsel %vm392, %v371, 0
  %v475 = vsel %vm392, %v372, 0
  %v478 = vsel %vm392, %v373, 0
  %v481 = vsel %vm392, %v374, 0
  %v484 = vsel %vm392, %v375, 0
  %v487 = vsel %vm392, %v376, 0
  %vm489 = vcmask 1041408
  %v491 = vsel %vm489, %v389, 0
  %493 = vmatprep.subr.bf16.mxu0 0
  %494 = vmatpush1.bf16.msra.mxu0 %v387
  %495 = vmatprep.subr.bf16.mxu0 0
  %496 = vmatpush1.bf16.msra.mxu0 %v388
  %497 = vmatprep.subr.bf16.mxu0 0
  %498 = vmatpush1.bf16.msra.mxu0 %v491
  %499 = vmatprep.subr.bf16.mxu0 0
  %500 = vmatpush1.bf16.msra.mxu0 0
  %501 = vmatprep.subr.bf16.mxu0 0
  %502 = vmatpush1.bf16.msra.mxu0 0
  %503 = vmatprep.subr.bf16.mxu0 0
  %504 = vmatpush1.bf16.msra.mxu0 0
  %505 = vmatprep.subr.bf16.mxu0 0
  %506 = vmatpush1.bf16.msra.mxu0 0
  %507 = vmatprep.subr.bf16.mxu0 0
  %508 = vmatpush1.bf16.msra.mxu0 0
  %509 = vmatprep.subr.bf16.mxu0 0
  %510 = vmatpush1.bf16.msra.mxu0 0
  %511 = vmatprep.subr.bf16.mxu0 0
  %512 = vmatpush1.bf16.msra.mxu0 0
  %513 = vmatprep.subr.bf16.mxu0 0
  %514 = vmatpush1.bf16.msra.mxu0 0
  %515 = vmatprep.subr.bf16.mxu0 0
  %516 = vmatpush1.bf16.msra.mxu0 0
  %517 = vmatprep.subr.bf16.mxu0 0
  %518 = vmatpush1.bf16.msra.mxu0 0
  %519 = vmatprep.subr.bf16.mxu0 0
  %520 = vmatpush1.bf16.msra.mxu0 0
  %521 = vmatprep.subr.bf16.mxu0 0
  %522 = vmatpush1.bf16.msra.mxu0 0
  %523 = vmatprep.subr.bf16.mxu0 0
  %524 = vmatpush1.bf16.msra.mxu0 0
  %525 = vmatprep.mubr.bf16.mxu0 0
  %526 = vmatmul.mubr.bf16.gmra.mrb[0].mxu0 %v394
  %v527 = vpop.f32.mrb[0].mxu0
  %v528 = vadd.f32 0.0, %v527
  %v529 = vpop.f32.mrb[0].mxu0
  %v530 = vpop.f32.mrb[0].mxu0
  %v531 = vadd.f32 0.0, %v530
  %v532 = vpop.f32.mrb[0].mxu0
  %533 = vmatprep.mubr.bf16.mxu0 0
  %534 = vmatmul.mubr.bf16.gmra.mrb[0].mxu0 %v397
  %v535 = vpop.f32.mrb[0].mxu0
  %v536 = vadd.f32 0.0, %v535
  %v537 = vpop.f32.mrb[0].mxu0
  %v538 = vpop.f32.mrb[0].mxu0
  %v539 = vadd.f32 0.0, %v538
  %v540 = vpop.f32.mrb[0].mxu0
  %541 = vmatprep.mubr.bf16.mxu0 0
  %542 = vmatmul.mubr.bf16.gmra.mrb[0].mxu0 %v400
  %v543 = vpop.f32.mrb[0].mxu0
  %v544 = vadd.f32 0.0, %v543
  %v545 = vpop.f32.mrb[0].mxu0
  %v546 = vpop.f32.mrb[0].mxu0
  %v547 = vadd.f32 0.0, %v546
  %v548 = vpop.f32.mrb[0].mxu0
  %549 = vmatprep.mubr.bf16.mxu0 0
  %550 = vmatmul.mubr.bf16.gmra.mrb[0].mxu0 %v403
  %v551 = vpop.f32.mrb[0].mxu0
  %v552 = vadd.f32 0.0, %v551
  %v553 = vpop.f32.mrb[0].mxu0
  %v554 = vpop.f32.mrb[0].mxu0
  %v555 = vadd.f32 0.0, %v554
  %v556 = vpop.f32.mrb[0].mxu0
  %557 = vmatprep.mubr.bf16.mxu0 0
  %558 = vmatmul.mubr.bf16.gmra.mrb[0].mxu0 %v406
  %v559 = vpop.f32.mrb[0].mxu0
  %v560 = vadd.f32 0.0, %v559
  %v561 = vpop.f32.mrb[0].mxu0
  %v562 = vpop.f32.mrb[0].mxu0
  %v563 = vadd.f32 0.0, %v562
  %v564 = vpop.f32.mrb[0].mxu0
  %565 = vmatprep.mubr.bf16.mxu0 0
  %566 = vmatmul.mubr.bf16.gmra.mrb[0].mxu0 %v409
  %v567 = vpop.f32.mrb[0].mxu0
  %v568 = vadd.f32 0.0, %v567
  %v569 = vpop.f32.mrb[0].mxu0
  %v570 = vpop.f32.mrb[0].mxu0
  %v571 = vadd.f32 0.0, %v570
  %v572 = vpop.f32.mrb[0].mxu0
  %573 = vmatprep.mubr.bf16.mxu0 0
  %574 = vmatmul.mubr.bf16.gmra.mrb[0].mxu0 %v412
  %v575 = vpop.f32.mrb[0].mxu0
  %v576 = vadd.f32 0.0, %v575
  %v577 = vpop.f32.mrb[0].mxu0
  %v578 = vpop.f32.mrb[0].mxu0
  %v579 = vadd.f32 0.0, %v578
  %v580 = vpop.f32.mrb[0].mxu0
  %581 = vmatprep.mubr.bf16.mxu0 0
  %582 = vmatmul.mubr.bf16.gmra.mrb[0].mxu0 %v415
  %v583 = vpop.f32.mrb[0].mxu0
  %v584 = vadd.f32 0.0, %v583
  %v585 = vpop.f32.mrb[0].mxu0
  %v586 = vpop.f32.mrb[0].mxu0
  %v587 = vadd.f32 0.0, %v586
  %v588 = vpop.f32.mrb[0].mxu0
  %589 = vmatprep.mubr.bf16.mxu0 0
  %590 = vmatmul.mubr.bf16.gmra.mrb[0].mxu0 %v418
  %v591 = vpop.f32.mrb[0].mxu0
  %v592 = vadd.f32 0.0, %v591
  %v593 = vpop.f32.mrb[0].mxu0
  %v594 = vpop.f32.mrb[0].mxu0
  %v595 = vadd.f32 0.0, %v594
  %v596 = vpop.f32.mrb[0].mxu0
  %597 = vmatprep.mubr.bf16.mxu0 0
  %598 = vmatmul.mubr.bf16.gmra.mrb[0].mxu0 %v421
  %v599 = vpop.f32.mrb[0].mxu0
  %v600 = vadd.f32 0.0, %v599
  %v601 = vpop.f32.mrb[0].mxu0
  %v602 = vpop.f32.mrb[0].mxu0
  %v603 = vadd.f32 0.0, %v602
  %v604 = vpop.f32.mrb[0].mxu0
  %605 = vmatprep.mubr.bf16.mxu0 0
  %606 = vmatmul.mubr.bf16.gmra.mrb[0].mxu0 %v424
  %v607 = vpop.f32.mrb[0].mxu0
  %v608 = vadd.f32 0.0, %v607
  %v609 = vpop.f32.mrb[0].mxu0
  %v610 = vpop.f32.mrb[0].mxu0
  %v611 = vadd.f32 0.0, %v610
  %v612 = vpop.f32.mrb[0].mxu0
  %613 = vmatprep.mubr.bf16.mxu0 0
  %614 = vmatmul.mubr.bf16.gmra.mrb[0].mxu0 %v427
  %v615 = vpop.f32.mrb[0].mxu0
  %v616 = vadd.f32 0.0, %v615
  %v617 = vpop.f32.mrb[0].mxu0
  %v618 = vpop.f32.mrb[0].mxu0
  %v619 = vadd.f32 0.0, %v618
  %v620 = vpop.f32.mrb[0].mxu0
  %621 = vmatprep.mubr.bf16.mxu0 0
  %622 = vmatmul.mubr.bf16.gmra.mrb[0].mxu0 %v430
  %v623 = vpop.f32.mrb[0].mxu0
  %v624 = vadd.f32 0.0, %v623
  %v625 = vpop.f32.mrb[0].mxu0
  %v626 = vpop.f32.mrb[0].mxu0
  %v627 = vadd.f32 0.0, %v626
  %v628 = vpop.f32.mrb[0].mxu0
  %629 = vmatprep.mubr.bf16.mxu0 0
  %630 = vmatmul.mubr.bf16.gmra.mrb[0].mxu0 %v433
  %v631 = vpop.f32.mrb[0].mxu0
  %v632 = vadd.f32 0.0, %v631
  %v633 = vpop.f32.mrb[0].mxu0
  %v634 = vpop.f32.mrb[0].mxu0
  %v635 = vadd.f32 0.0, %v634
  %v636 = vpop.f32.mrb[0].mxu0
  %637 = vmatprep.mubr.bf16.mxu0 0
  %638 = vmatmul.mubr.bf16.gmra.mrb[0].mxu0 %v436
  %v639 = vpop.f32.mrb[0].mxu0
  %v640 = vadd.f32 0.0, %v639
  %v641 = vpop.f32.mrb[0].mxu0
  %v642 = vpop.f32.mrb[0].mxu0
  %v643 = vadd.f32 0.0, %v642
  %v644 = vpop.f32.mrb[0].mxu0
  %645 = vmatprep.mubr.bf16.mxu0 0
  %646 = vmatmul.mubr.bf16.gmra.mrb[0].mxu0 %v439
  %v647 = vpop.f32.mrb[0].mxu0
  %v648 = vadd.f32 0.0, %v647
  %v649 = vpop.f32.mrb[0].mxu0
  %v650 = vpop.f32.mrb[0].mxu0
  %v651 = vadd.f32 0.0, %v650
  %v652 = vpop.f32.mrb[0].mxu0
  %653 = vmatprep.mubr.bf16.mxu0 0
  %654 = vmatmul.mubr.bf16.gmra.mrb[0].mxu0 %v442
  %v655 = vpop.f32.mrb[0].mxu0
  %v656 = vadd.f32 0.0, %v655
  %v657 = vpop.f32.mrb[0].mxu0
  %v658 = vpop.f32.mrb[0].mxu0
  %v659 = vadd.f32 0.0, %v658
  %v660 = vpop.f32.mrb[0].mxu0
  %661 = vmatprep.mubr.bf16.mxu0 0
  %662 = vmatmul.mubr.bf16.gmra.mrb[0].mxu0 %v445
  %v663 = vpop.f32.mrb[0].mxu0
  %v664 = vadd.f32 0.0, %v663
  %v665 = vpop.f32.mrb[0].mxu0
  %v666 = vpop.f32.mrb[0].mxu0
  %v667 = vadd.f32 0.0, %v666
  %v668 = vpop.f32.mrb[0].mxu0
  %669 = vmatprep.mubr.bf16.mxu0 0
  %670 = vmatmul.mubr.bf16.gmra.mrb[0].mxu0 %v448
  %v671 = vpop.f32.mrb[0].mxu0
  %v672 = vadd.f32 0.0, %v671
  %v673 = vpop.f32.mrb[0].mxu0
  %v674 = vpop.f32.mrb[0].mxu0
  %v675 = vadd.f32 0.0, %v674
  %v676 = vpop.f32.mrb[0].mxu0
  %677 = vmatprep.mubr.bf16.mxu0 0
  %678 = vmatmul.mubr.bf16.gmra.mrb[0].mxu0 %v451
  %v679 = vpop.f32.mrb[0].mxu0
  %v680 = vadd.f32 0.0, %v679
  %v681 = vpop.f32.mrb[0].mxu0
  %v682 = vpop.f32.mrb[0].mxu0
  %v683 = vadd.f32 0.0, %v682
  %v684 = vpop.f32.mrb[0].mxu0
  %685 = vmatprep.mubr.bf16.mxu0 0
  %686 = vmatmul.mubr.bf16.gmra.mrb[0].mxu0 %v454
  %v687 = vpop.f32.mrb[0].mxu0
  %v688 = vadd.f32 0.0, %v687
  %v689 = vpop.f32.mrb[0].mxu0
  %v690 = vpop.f32.mrb[0].mxu0
  %v691 = vadd.f32 0.0, %v690
  %v692 = vpop.f32.mrb[0].mxu0
  %693 = vmatprep.mubr.bf16.mxu0 0
  %694 = vmatmul.mubr.bf16.gmra.mrb[0].mxu0 %v457
  %v695 = vpop.f32.mrb[0].mxu0
  %v696 = vadd.f32 0.0, %v695
  %v697 = vpop.f32.mrb[0].mxu0
  %v698 = vpop.f32.mrb[0].mxu0
  %v699 = vadd.f32 0.0, %v698
  %v700 = vpop.f32.mrb[0].mxu0
  %701 = vmatprep.mubr.bf16.mxu0 0
  %702 = vmatmul.mubr.bf16.gmra.mrb[0].mxu0 %v460
  %v703 = vpop.f32.mrb[0].mxu0
  %v704 = vadd.f32 0.0, %v703
  %v705 = vpop.f32.mrb[0].mxu0
  %v706 = vpop.f32.mrb[0].mxu0
  %v707 = vadd.f32 0.0, %v706
  %v708 = vpop.f32.mrb[0].mxu0
  %709 = vmatprep.mubr.bf16.mxu0 0
  %710 = vmatmul.mubr.bf16.gmra.mrb[0].mxu0 %v463
  %v711 = vpop.f32.mrb[0].mxu0
  %v712 = vadd.f32 0.0, %v711
  %v713 = vpop.f32.mrb[0].mxu0
  %v714 = vpop.f32.mrb[0].mxu0
  %v715 = vadd.f32 0.0, %v714
  %v716 = vpop.f32.mrb[0].mxu0
  %717 = vmatprep.mubr.bf16.mxu0 0
  %718 = vmatmul.mubr.bf16.gmra.mrb[0].mxu0 %v466
  %v719 = vpop.f32.mrb[0].mxu0
  %v720 = vadd.f32 0.0, %v719
  %v721 = vpop.f32.mrb[0].mxu0
  %v722 = vpop.f32.mrb[0].mxu0
  %v723 = vadd.f32 0.0, %v722
  %v724 = vpop.f32.mrb[0].mxu0
  %725 = vmatprep.mubr.bf16.mxu0 0
  %726 = vmatmul.mubr.bf16.gmra.mrb[0].mxu0 %v469
  %v727 = vpop.f32.mrb[0].mxu0
  %v728 = vadd.f32 0.0, %v727
  %v729 = vpop.f32.mrb[0].mxu0
  %v730 = vpop.f32.mrb[0].mxu0
  %v731 = vadd.f32 0.0, %v730
  %v732 = vpop.f32.mrb[0].mxu0
  %733 = vmatprep.mubr.bf16.mxu0 0
  %734 = vmatmul.mubr.bf16.gmra.mrb[0].mxu0 %v472
  %v735 = vpop.f32.mrb[0].mxu0
  %v736 = vadd.f32 0.0, %v735
  %v737 = vpop.f32.mrb[0].mxu0
  %v738 = vpop.f32.mrb[0].mxu0
  %v739 = vadd.f32 0.0, %v738
  %v740 = vpop.f32.mrb[0].mxu0
  %741 = vmatprep.mubr.bf16.mxu0 0
  %742 = vmatmul.mubr.bf16.gmra.mrb[0].mxu0 %v475
  %v743 = vpop.f32.mrb[0].mxu0
  %v744 = vadd.f32 0.0, %v743
  %v745 = vpop.f32.mrb[0].mxu0
  %v746 = vpop.f32.mrb[0].mxu0
  %v747 = vadd.f32 0.0, %v746
  %v748 = vpop.f32.mrb[0].mxu0
  %749 = vmatprep.mubr.bf16.mxu0 0
  %750 = vmatmul.mubr.bf16.gmra.mrb[0].mxu0 %v478
  %v751 = vpop.f32.mrb[0].mxu0
  %v752 = vadd.f32 0.0, %v751
  %v753 = vpop.f32.mrb[0].mxu0
  %v754 = vpop.f32.mrb[0].mxu0
  %v755 = vadd.f32 0.0, %v754
  %v756 = vpop.f32.mrb[0].mxu0
  %757 = vmatprep.mubr.bf16.mxu0 0
  %758 = vmatmul.mubr.bf16.gmra.mrb[0].mxu0 %v481
  %v759 = vpop.f32.mrb[0].mxu0
  %v760 = vadd.f32 0.0, %v759
  %v761 = vpop.f32.mrb[0].mxu0
  %v762 = vpop.f32.mrb[0].mxu0
  %v763 = vadd.f32 0.0, %v762
  %v764 = vpop.f32.mrb[0].mxu0
  %765 = vmatprep.mubr.bf16.mxu0 0
  %766 = vmatmul.mubr.bf16.gmra.mrb[0].mxu0 %v484
  %v767 = vpop.f32.mrb[0].mxu0
  %v768 = vadd.f32 0.0, %v767
  %v769 = vpop.f32.mrb[0].mxu0
  %v770 = vpop.f32.mrb[0].mxu0
  %v771 = vadd.f32 0.0, %v770
  %v772 = vpop.f32.mrb[0].mxu0
  %773 = vmatprep.mubr.bf16.mxu0 0
  %774 = vmatmul.mubr.bf16.gmra.mrb[0].mxu0 %v487
  %v775 = vpop.f32.mrb[0].mxu0
  %v776 = vadd.f32 0.0, %v775
  %v777 = vpop.f32.mrb[0].mxu0
  %v778 = vpop.f32.mrb[0].mxu0
  %v779 = vadd.f32 0.0, %v778
  %v780 = vpop.f32.mrb[0].mxu0
  %781 = vdwg.mxu0
  %v782 = vadd.f32 %v84, %v528
  %v783 = vadd.f32 %v85, %v531
  %v784 = vadd.f32 %v86, %v536
  %v785 = vadd.f32 %v87, %v539
  %v786 = vadd.f32 %v88, %v544
  %v787 = vadd.f32 %v89, %v547
  %v788 = vadd.f32 %v90, %v552
  %v789 = vadd.f32 %v91, %v555
  %v790 = vadd.f32 %v92, %v560
  %v791 = vadd.f32 %v93, %v563
  %v792 = vadd.f32 %v94, %v568
  %v793 = vadd.f32 %v95, %v571
  %v794 = vadd.f32 %v96, %v576
  %v795 = vadd.f32 %v97, %v579
  %v796 = vadd.f32 %v98, %v584
  %v797 = vadd.f32 %v99, %v587
  %v798 = vadd.f32 %v100, %v592
  %v799 = vadd.f32 %v101, %v595
  %v800 = vadd.f32 %v102, %v600
  %v801 = vadd.f32 %v103, %v603
  %v802 = vadd.f32 %v104, %v608
  %v803 = vadd.f32 %v105, %v611
  %v804 = vadd.f32 %v106, %v616
  %v805 = vadd.f32 %v107, %v619
  %v806 = vadd.f32 %v108, %v624
  %v807 = vadd.f32 %v109, %v627
  %v808 = vadd.f32 %v110, %v632
  %v809 = vadd.f32 %v111, %v635
  %v810 = vadd.f32 %v112, %v640
  %v811 = vadd.f32 %v113, %v643
  %v812 = vadd.f32 %v114, %v648
  %v813 = vadd.f32 %v115, %v651
  %v814 = vadd.f32 %v116, %v656
  %v815 = vadd.f32 %v117, %v659
  %v816 = vadd.f32 %v118, %v664
  %v817 = vadd.f32 %v119, %v667
  %v818 = vadd.f32 %v120, %v672
  %v819 = vadd.f32 %v121, %v675
  %v820 = vadd.f32 %v122, %v680
  %v821 = vadd.f32 %v123, %v683
  %v822 = vadd.f32 %v124, %v688
  %v823 = vadd.f32 %v125, %v691
  %v824 = vadd.f32 %v126, %v696
  %v825 = vadd.f32 %v127, %v699
  %v826 = vadd.f32 %v128, %v704
  %v827 = vadd.f32 %v129, %v707
  %v828 = vadd.f32 %v130, %v712
  %v829 = vadd.f32 %v131, %v715
  %v830 = vadd.f32 %v132, %v720
  %v831 = vadd.f32 %v133, %v723
  %v832 = vadd.f32 %v134, %v728
  %v833 = vadd.f32 %v135, %v731
  %v834 = vadd.f32 %v136, %v736
  %v835 = vadd.f32 %v137, %v739
  %v836 = vadd.f32 %v138, %v744
  %v837 = vadd.f32 %v139, %v747
  %v838 = vadd.f32 %v140, %v752
  %v839 = vadd.f32 %v141, %v755
  %v840 = vadd.f32 %v142, %v760
  %v841 = vadd.f32 %v143, %v763
  %v842 = vadd.f32 %v144, %v768
  %v843 = vadd.f32 %v145, %v771
  %v844 = vadd.f32 %v146, %v776
  %v845 = vadd.f32 %v147, %v779
  %vm846 = vcmask 31744
  %847 = vst.msk [vmem:[%s3] sm:$0xff] %vm846, %v782
  %848 = vst.msk [vmem:[%s3 + $0x8] sm:$0xff] %vm846, %v783
  %849 = vst.msk [vmem:[%s3 + $0x10] sm:$0xff] %vm846, %v784
  %850 = vst.msk [vmem:[%s3 + $0x18] sm:$0xff] %vm846, %v785
  %851 = vst.msk [vmem:[%s3 + $0x20] sm:$0xff] %vm846, %v786
  %852 = vst.msk [vmem:[%s3 + $0x28] sm:$0xff] %vm846, %v787
  %853 = vst.msk [vmem:[%s3 + $0x30] sm:$0xff] %vm846, %v788
  %854 = vst.msk [vmem:[%s3 + $0x38] sm:$0xff] %vm846, %v789
  %855 = vst.msk [vmem:[%s3 + $0x40] sm:$0xff] %vm846, %v790
  %856 = vst.msk [vmem:[%s3 + $0x48] sm:$0xff] %vm846, %v791
  %857 = vst.msk [vmem:[%s3 + $0x50] sm:$0xff] %vm846, %v792
  %858 = vst.msk [vmem:[%s3 + $0x58] sm:$0xff] %vm846, %v793
  %859 = vst.msk [vmem:[%s3 + $0x60] sm:$0xff] %vm846, %v794
  %860 = vst.msk [vmem:[%s3 + $0x68] sm:$0xff] %vm846, %v795
  %861 = vst.msk [vmem:[%s3 + $0x70] sm:$0xff] %vm846, %v796
  %862 = vst.msk [vmem:[%s3 + $0x78] sm:$0xff] %vm846, %v797
  %863 = vst.msk [vmem:[%s3 + $0x80] sm:$0xff] %vm846, %v798
  %864 = vst.msk [vmem:[%s3 + $0x88] sm:$0xff] %vm846, %v799
  %865 = vst.msk [vmem:[%s3 + $0x90] sm:$0xff] %vm846, %v800
  %866 = vst.msk [vmem:[%s3 + $0x98] sm:$0xff] %vm846, %v801
  %867 = vst.msk [vmem:[%s3 + $0xa0] sm:$0xff] %vm846, %v802
  %868 = vst.msk [vmem:[%s3 + $0xa8] sm:$0xff] %vm846, %v803
  %869 = vst.msk [vmem:[%s3 + $0xb0] sm:$0xff] %vm846, %v804
  %870 = vst.msk [vmem:[%s3 + $0xb8] sm:$0xff] %vm846, %v805
  %871 = vst.msk [vmem:[%s3 + $0xc0] sm:$0xff] %vm846, %v806
  %872 = vst.msk [vmem:[%s3 + $0xc8] sm:$0xff] %vm846, %v807
  %873 = vst.msk [vmem:[%s3 + $0xd0] sm:$0xff] %vm846, %v808
  %874 = vst.msk [vmem:[%s3 + $0xd8] sm:$0xff] %vm846, %v809
  %875 = vst.msk [vmem:[%s3 + $0xe0] sm:$0xff] %vm846, %v810
  %876 = vst.msk [vmem:[%s3 + $0xe8] sm:$0xff] %vm846, %v811
  %877 = vst.msk [vmem:[%s3 + $0xf0] sm:$0xff] %vm846, %v812
  %878 = vst.msk [vmem:[%s3 + $0xf8] sm:$0xff] %vm846, %v813
  %879 = vst.msk [vmem:[%s3 + $0x100] sm:$0xff] %vm846, %v814
  %880 = vst.msk [vmem:[%s3 + $0x108] sm:$0xff] %vm846, %v815
  %881 = vst.msk [vmem:[%s3 + $0x110] sm:$0xff] %vm846, %v816
  %882 = vst.msk [vmem:[%s3 + $0x118] sm:$0xff] %vm846, %v817
  %883 = vst.msk [vmem:[%s3 + $0x120] sm:$0xff] %vm846, %v818
  %884 = vst.msk [vmem:[%s3 + $0x128] sm:$0xff] %vm846, %v819
  %885 = vst.msk [vmem:[%s3 + $0x130] sm:$0xff] %vm846, %v820
  %886 = vst.msk [vmem:[%s3 + $0x138] sm:$0xff] %vm846, %v821
  %887 = vst.msk [vmem:[%s3 + $0x140] sm:$0xff] %vm846, %v822
  %888 = vst.msk [vmem:[%s3 + $0x148] sm:$0xff] %vm846, %v823
  %889 = vst.msk [vmem:[%s3 + $0x150] sm:$0xff] %vm846, %v824
  %890 = vst.msk [vmem:[%s3 + $0x158] sm:$0xff] %vm846, %v825
  %891 = vst.msk [vmem:[%s3 + $0x160] sm:$0xff] %vm846, %v826
  %892 = vst.msk [vmem:[%s3 + $0x168] sm:$0xff] %vm846, %v827
  %893 = vst.msk [vmem:[%s3 + $0x170] sm:$0xff] %vm846, %v828
  %894 = vst.msk [vmem:[%s3 + $0x178] sm:$0xff] %vm846, %v829
  %895 = vst.msk [vmem:[%s3 + $0x180] sm:$0xff] %vm846, %v830
  %896 = vst.msk [vmem:[%s3 + $0x188] sm:$0xff] %vm846, %v831
  %897 = vst.msk [vmem:[%s3 + $0x190] sm:$0xff] %vm846, %v832
  %898 = vst.msk [vmem:[%s3 + $0x198] sm:$0xff] %vm846, %v833
  %899 = vst.msk [vmem:[%s3 + $0x1a0] sm:$0xff] %vm846, %v834
  %900 = vst.msk [vmem:[%s3 + $0x1a8] sm:$0xff] %vm846, %v835
  %901 = vst.msk [vmem:[%s3 + $0x1b0] sm:$0xff] %vm846, %v836
  %902 = vst.msk [vmem:[%s3 + $0x1b8] sm:$0xff] %vm846, %v837
  %903 = vst.msk [vmem:[%s3 + $0x1c0] sm:$0xff] %vm846, %v838
  %904 = vst.msk [vmem:[%s3 + $0x1c8] sm:$0xff] %vm846, %v839
  %905 = vst.msk [vmem:[%s3 + $0x1d0] sm:$0xff] %vm846, %v840
  %906 = vst.msk [vmem:[%s3 + $0x1d8] sm:$0xff] %vm846, %v841
  %907 = vst.msk [vmem:[%s3 + $0x1e0] sm:$0xff] %vm846, %v842
  %908 = vst.msk [vmem:[%s3 + $0x1e8] sm:$0xff] %vm846, %v843
  %909 = vst.msk [vmem:[%s3 + $0x1f0] sm:$0xff] %vm846, %v844
  %910 = vst.msk [vmem:[%s3 + $0x1f8] sm:$0xff] %vm846, %v845
  // Predicated region
  $region18: #{bottleneck1_forward.4} parent=0 // pred_check
    %p911 = pneg %p15
  $region19: #{bottleneck1_forward.4} parent=0 // pred_check_branch
    %913 = sbr.rel (%p911) target = $region21
  $region20: #{bottleneck1_forward.4} parent=0 // pred_region
    %v914 = vld [vmem:[%s3] sm:$0xff]
    %v915 = vld [vmem:[%s3 + $0x8] sm:$0xff]
    %v916 = vld [vmem:[%s3 + $0x10] sm:$0xff]
    %v917 = vld [vmem:[%s3 + $0x18] sm:$0xff]
    %v918 = vld [vmem:[%s3 + $0x20] sm:$0xff]
    %v919 = vld [vmem:[%s3 + $0x28] sm:$0xff]
    %v920 = vld [vmem:[%s3 + $0x30] sm:$0xff]
    %v921 = vld [vmem:[%s3 + $0x38] sm:$0xff]
    %v922 = vld [vmem:[%s3 + $0x40] sm:$0xff]
    %v923 = vld [vmem:[%s3 + $0x48] sm:$0xff]
    %v924 = vld [vmem:[%s3 + $0x50] sm:$0xff]
    %v925 = vld [vmem:[%s3 + $0x58] sm:$0xff]
    %v926 = vld [vmem:[%s3 + $0x60] sm:$0xff]
    %v927 = vld [vmem:[%s3 + $0x68] sm:$0xff]
    %v928 = vld [vmem:[%s3 + $0x70] sm:$0xff]
    %v929 = vld [vmem:[%s3 + $0x78] sm:$0xff]
    %v930 = vld [vmem:[%s3 + $0x80] sm:$0xff]
    %v931 = vld [vmem:[%s3 + $0x88] sm:$0xff]
    %v932 = vld [vmem:[%s3 + $0x90] sm:$0xff]
    %v933 = vld [vmem:[%s3 + $0x98] sm:$0xff]
    %v934 = vld [vmem:[%s3 + $0xa0] sm:$0xff]
    %v935 = vld [vmem:[%s3 + $0xa8] sm:$0xff]
    %v936 = vld [vmem:[%s3 + $0xb0] sm:$0xff]
    %v937 = vld [vmem:[%s3 + $0xb8] sm:$0xff]
    %v938 = vld [vmem:[%s3 + $0xc0] sm:$0xff]
    %v939 = vld [vmem:[%s3 + $0xc8] sm:$0xff]
    %v940 = vld [vmem:[%s3 + $0xd0] sm:$0xff]
    %v941 = vld [vmem:[%s3 + $0xd8] sm:$0xff]
    %v942 = vld [vmem:[%s3 + $0xe0] sm:$0xff]
    %v943 = vld [vmem:[%s3 + $0xe8] sm:$0xff]
    %v944 = vld [vmem:[%s3 + $0xf0] sm:$0xff]
    %v945 = vld [vmem:[%s3 + $0xf8] sm:$0xff]
    %v946 = vld [vmem:[%s3 + $0x100] sm:$0xff]
    %v947 = vld [vmem:[%s3 + $0x108] sm:$0xff]
    %v948 = vld [vmem:[%s3 + $0x110] sm:$0xff]
    %v949 = vld [vmem:[%s3 + $0x118] sm:$0xff]
    %v950 = vld [vmem:[%s3 + $0x120] sm:$0xff]
    %v951 = vld [vmem:[%s3 + $0x128] sm:$0xff]
    %v952 = vld [vmem:[%s3 + $0x130] sm:$0xff]
    %v953 = vld [vmem:[%s3 + $0x138] sm:$0xff]
    %v954 = vld [vmem:[%s3 + $0x140] sm:$0xff]
    %v955 = vld [vmem:[%s3 + $0x148] sm:$0xff]
    %v956 = vld [vmem:[%s3 + $0x150] sm:$0xff]
    %v957 = vld [vmem:[%s3 + $0x158] sm:$0xff]
    %v958 = vld [vmem:[%s3 + $0x160] sm:$0xff]
    %v959 = vld [vmem:[%s3 + $0x168] sm:$0xff]
    %v960 = vld [vmem:[%s3 + $0x170] sm:$0xff]
    %v961 = vld [vmem:[%s3 + $0x178] sm:$0xff]
    %v962 = vld [vmem:[%s3 + $0x180] sm:$0xff]
    %v963 = vld [vmem:[%s3 + $0x188] sm:$0xff]
    %v964 = vld [vmem:[%s3 + $0x190] sm:$0xff]
    %v965 = vld [vmem:[%s3 + $0x198] sm:$0xff]
    %v966 = vld [vmem:[%s3 + $0x1a0] sm:$0xff]
    %v967 = vld [vmem:[%s3 + $0x1a8] sm:$0xff]
    %v968 = vld [vmem:[%s3 + $0x1b0] sm:$0xff]
    %v969 = vld [vmem:[%s3 + $0x1b8] sm:$0xff]
    %v970 = vld [vmem:[%s3 + $0x1c0] sm:$0xff]
    %v971 = vld [vmem:[%s3 + $0x1c8] sm:$0xff]
    %v972 = vld [vmem:[%s3 + $0x1d0] sm:$0xff]
    %v973 = vld [vmem:[%s3 + $0x1d8] sm:$0xff]
    %v974 = vld [vmem:[%s3 + $0x1e0] sm:$0xff]
    %v975 = vld [vmem:[%s3 + $0x1e8] sm:$0xff]
    %v976 = vld [vmem:[%s3 + $0x1f0] sm:$0xff]
    %v977 = vld [vmem:[%s3 + $0x1f8] sm:$0xff]
    %v978 = vld [vmem:[%s2] sm:$0x1]
    %v980 = vlaneseq
    %v981 = vshrl.u32 %v980, 7
    %v982 = vsub.s32 0, %v981
    %v983 = vrot.slane %v978, %v982
    %v985 = vadd.f32 %v914, %v983
    %v986 = vadd.f32 %v915, %v983
    %v987 = vadd.f32 %v916, %v983
    %v988 = vadd.f32 %v917, %v983
    %v989 = vadd.f32 %v918, %v983
    %v990 = vadd.f32 %v919, %v983
    %v991 = vadd.f32 %v920, %v983
    %v992 = vadd.f32 %v921, %v983
    %v993 = vadd.f32 %v922, %v983
    %v994 = vadd.f32 %v923, %v983
    %v995 = vadd.f32 %v924, %v983
    %v996 = vadd.f32 %v925, %v983
    %v997 = vadd.f32 %v926, %v983
    %v998 = vadd.f32 %v927, %v983
    %v999 = vadd.f32 %v928, %v983
    %v1000 = vadd.f32 %v929, %v983
    %v1001 = vadd.f32 %v930, %v983
    %v1002 = vadd.f32 %v931, %v983
    %v1003 = vadd.f32 %v932, %v983
    %v1004 = vadd.f32 %v933, %v983
    %v1005 = vadd.f32 %v934, %v983
    %v1006 = vadd.f32 %v935, %v983
    %v1007 = vadd.f32 %v936, %v983
    %v1008 = vadd.f32 %v937, %v983
    %v1009 = vadd.f32 %v938, %v983
    %v1010 = vadd.f32 %v939, %v983
    %v1011 = vadd.f32 %v940, %v983
    %v1012 = vadd.f32 %v941, %v983
    %v1013 = vadd.f32 %v942, %v983
    %v1014 = vadd.f32 %v943, %v983
    %v1015 = vadd.f32 %v944, %v983
    %v1016 = vadd.f32 %v945, %v983
    %v1017 = vadd.f32 %v946, %v983
    %v1018 = vadd.f32 %v947, %v983
    %v1019 = vadd.f32 %v948, %v983
    %v1020 = vadd.f32 %v949, %v983
    %v1021 = vadd.f32 %v950, %v983
    %v1022 = vadd.f32 %v951, %v983
    %v1023 = vadd.f32 %v952, %v983
    %v1024 = vadd.f32 %v953, %v983
    %v1025 = vadd.f32 %v954, %v983
    %v1026 = vadd.f32 %v955, %v983
    %v1027 = vadd.f32 %v956, %v983
    %v1028 = vadd.f32 %v957, %v983
    %v1029 = vadd.f32 %v958, %v983
    %v1030 = vadd.f32 %v959, %v983
    %v1031 = vadd.f32 %v960, %v983
    %v1032 = vadd.f32 %v961, %v983
    %v1033 = vadd.f32 %v962, %v983
    %v1034 = vadd.f32 %v963, %v983
    %v1035 = vadd.f32 %v964, %v983
    %v1036 = vadd.f32 %v965, %v983
    %v1037 = vadd.f32 %v966, %v983
    %v1038 = vadd.f32 %v967, %v983
    %v1039 = vadd.f32 %v968, %v983
    %v1040 = vadd.f32 %v969, %v983
    %v1041 = vadd.f32 %v970, %v983
    %v1042 = vadd.f32 %v971, %v983
    %v1043 = vadd.f32 %v972, %v983
    %v1044 = vadd.f32 %v973, %v983
    %v1045 = vadd.f32 %v974, %v983
    %v1046 = vadd.f32 %v975, %v983
    %v1047 = vadd.f32 %v976, %v983
    %v1048 = vadd.f32 %v977, %v983
    %v1049 = vmax.f32 %v985, 0.0
    %v1050 = vmax.f32 %v986, 0.0
    %v1051 = vmax.f32 %v987, 0.0
    %v1052 = vmax.f32 %v988, 0.0
    %v1053 = vmax.f32 %v989, 0.0
    %v1054 = vmax.f32 %v990, 0.0
    %v1055 = vmax.f32 %v991, 0.0
    %v1056 = vmax.f32 %v992, 0.0
    %v1057 = vmax.f32 %v993, 0.0
    %v1058 = vmax.f32 %v994, 0.0
    %v1059 = vmax.f32 %v995, 0.0
    %v1060 = vmax.f32 %v996, 0.0
    %v1061 = vmax.f32 %v997, 0.0
    %v1062 = vmax.f32 %v998, 0.0
    %v1063 = vmax.f32 %v999, 0.0
    %v1064 = vmax.f32 %v1000, 0.0
    %v1065 = vmax.f32 %v1001, 0.0
    %v1066 = vmax.f32 %v1002, 0.0
    %v1067 = vmax.f32 %v1003, 0.0
    %v1068 = vmax.f32 %v1004, 0.0
    %v1069 = vmax.f32 %v1005, 0.0
    %v1070 = vmax.f32 %v1006, 0.0
    %v1071 = vmax.f32 %v1007, 0.0
    %v1072 = vmax.f32 %v1008, 0.0
    %v1073 = vmax.f32 %v1009, 0.0
    %v1074 = vmax.f32 %v1010, 0.0
    %v1075 = vmax.f32 %v1011, 0.0
    %v1076 = vmax.f32 %v1012, 0.0
    %v1077 = vmax.f32 %v1013, 0.0
    %v1078 = vmax.f32 %v1014, 0.0
    %v1079 = vmax.f32 %v1015, 0.0
    %v1080 = vmax.f32 %v1016, 0.0
    %v1081 = vmax.f32 %v1017, 0.0
    %v1082 = vmax.f32 %v1018, 0.0
    %v1083 = vmax.f32 %v1019, 0.0
    %v1084 = vmax.f32 %v1020, 0.0
    %v1085 = vmax.f32 %v1021, 0.0
    %v1086 = vmax.f32 %v1022, 0.0
    %v1087 = vmax.f32 %v1023, 0.0
    %v1088 = vmax.f32 %v1024, 0.0
    %v1089 = vmax.f32 %v1025, 0.0
    %v1090 = vmax.f32 %v1026, 0.0
    %v1091 = vmax.f32 %v1027, 0.0
    %v1092 = vmax.f32 %v1028, 0.0
    %v1093 = vmax.f32 %v1029, 0.0
    %v1094 = vmax.f32 %v1030, 0.0
    %v1095 = vmax.f32 %v1031, 0.0
    %v1096 = vmax.f32 %v1032, 0.0
    %v1097 = vmax.f32 %v1033, 0.0
    %v1098 = vmax.f32 %v1034, 0.0
    %v1099 = vmax.f32 %v1035, 0.0
    %v1100 = vmax.f32 %v1036, 0.0
    %v1101 = vmax.f32 %v1037, 0.0
    %v1102 = vmax.f32 %v1038, 0.0
    %v1103 = vmax.f32 %v1039, 0.0
    %v1104 = vmax.f32 %v1040, 0.0
    %v1105 = vmax.f32 %v1041, 0.0
    %v1106 = vmax.f32 %v1042, 0.0
    %v1107 = vmax.f32 %v1043, 0.0
    %v1108 = vmax.f32 %v1044, 0.0
    %v1109 = vmax.f32 %v1045, 0.0
    %v1110 = vmax.f32 %v1046, 0.0
    %v1111 = vmax.f32 %v1047, 0.0
    %v1112 = vmax.f32 %v1048, 0.0
    %1113 = vst.msk [vmem:[%s3] sm:$0xff] %vm846, %v1049
    %1114 = vst.msk [vmem:[%s3 + $0x8] sm:$0xff] %vm846, %v1050
    %1115 = vst.msk [vmem:[%s3 + $0x10] sm:$0xff] %vm846, %v1051
    %1116 = vst.msk [vmem:[%s3 + $0x18] sm:$0xff] %vm846, %v1052
    %1117 = vst.msk [vmem:[%s3 + $0x20] sm:$0xff] %vm846, %v1053
    %1118 = vst.msk [vmem:[%s3 + $0x28] sm:$0xff] %vm846, %v1054
    %1119 = vst.msk [vmem:[%s3 + $0x30] sm:$0xff] %vm846, %v1055
    %1120 = vst.msk [vmem:[%s3 + $0x38] sm:$0xff] %vm846, %v1056
    %1121 = vst.msk [vmem:[%s3 + $0x40] sm:$0xff] %vm846, %v1057
    %1122 = vst.msk [vmem:[%s3 + $0x48] sm:$0xff] %vm846, %v1058
    %1123 = vst.msk [vmem:[%s3 + $0x50] sm:$0xff] %vm846, %v1059
    %1124 = vst.msk [vmem:[%s3 + $0x58] sm:$0xff] %vm846, %v1060
    %1125 = vst.msk [vmem:[%s3 + $0x60] sm:$0xff] %vm846, %v1061
    %1126 = vst.msk [vmem:[%s3 + $0x68] sm:$0xff] %vm846, %v1062
    %1127 = vst.msk [vmem:[%s3 + $0x70] sm:$0xff] %vm846, %v1063
    %1128 = vst.msk [vmem:[%s3 + $0x78] sm:$0xff] %vm846, %v1064
    %1129 = vst.msk [vmem:[%s3 + $0x80] sm:$0xff] %vm846, %v1065
    %1130 = vst.msk [vmem:[%s3 + $0x88] sm:$0xff] %vm846, %v1066
    %1131 = vst.msk [vmem:[%s3 + $0x90] sm:$0xff] %vm846, %v1067
    %1132 = vst.msk [vmem:[%s3 + $0x98] sm:$0xff] %vm846, %v1068
    %1133 = vst.msk [vmem:[%s3 + $0xa0] sm:$0xff] %vm846, %v1069
    %1134 = vst.msk [vmem:[%s3 + $0xa8] sm:$0xff] %vm846, %v1070
    %1135 = vst.msk [vmem:[%s3 + $0xb0] sm:$0xff] %vm846, %v1071
    %1136 = vst.msk [vmem:[%s3 + $0xb8] sm:$0xff] %vm846, %v1072
    %1137 = vst.msk [vmem:[%s3 + $0xc0] sm:$0xff] %vm846, %v1073
    %1138 = vst.msk [vmem:[%s3 + $0xc8] sm:$0xff] %vm846, %v1074
    %1139 = vst.msk [vmem:[%s3 + $0xd0] sm:$0xff] %vm846, %v1075
    %1140 = vst.msk [vmem:[%s3 + $0xd8] sm:$0xff] %vm846, %v1076
    %1141 = vst.msk [vmem:[%s3 + $0xe0] sm:$0xff] %vm846, %v1077
    %1142 = vst.msk [vmem:[%s3 + $0xe8] sm:$0xff] %vm846, %v1078
    %1143 = vst.msk [vmem:[%s3 + $0xf0] sm:$0xff] %vm846, %v1079
    %1144 = vst.msk [vmem:[%s3 + $0xf8] sm:$0xff] %vm846, %v1080
    %1145 = vst.msk [vmem:[%s3 + $0x100] sm:$0xff] %vm846, %v1081
    %1146 = vst.msk [vmem:[%s3 + $0x108] sm:$0xff] %vm846, %v1082
    %1147 = vst.msk [vmem:[%s3 + $0x110] sm:$0xff] %vm846, %v1083
    %1148 = vst.msk [vmem:[%s3 + $0x118] sm:$0xff] %vm846, %v1084
    %1149 = vst.msk [vmem:[%s3 + $0x120] sm:$0xff] %vm846, %v1085
    %1150 = vst.msk [vmem:[%s3 + $0x128] sm:$0xff] %vm846, %v1086
    %1151 = vst.msk [vmem:[%s3 + $0x130] sm:$0xff] %vm846, %v1087
    %1152 = vst.msk [vmem:[%s3 + $0x138] sm:$0xff] %vm846, %v1088
    %1153 = vst.msk [vmem:[%s3 + $0x140] sm:$0xff] %vm846, %v1089
    %1154 = vst.msk [vmem:[%s3 + $0x148] sm:$0xff] %vm846, %v1090
    %1155 = vst.msk [vmem:[%s3 + $0x150] sm:$0xff] %vm846, %v1091
    %1156 = vst.msk [vmem:[%s3 + $0x158] sm:$0xff] %vm846, %v1092
    %1157 = vst.msk [vmem:[%s3 + $0x160] sm:$0xff] %vm846, %v1093
    %1158 = vst.msk [vmem:[%s3 + $0x168] sm:$0xff] %vm846, %v1094
    %1159 = vst.msk [vmem:[%s3 + $0x170] sm:$0xff] %vm846, %v1095
    %1160 = vst.msk [vmem:[%s3 + $0x178] sm:$0xff] %vm846, %v1096
    %1161 = vst.msk [vmem:[%s3 + $0x180] sm:$0xff] %vm846, %v1097
    %1162 = vst.msk [vmem:[%s3 + $0x188] sm:$0xff] %vm846, %v1098
    %1163 = vst.msk [vmem:[%s3 + $0x190] sm:$0xff] %vm846, %v1099
    %1164 = vst.msk [vmem:[%s3 + $0x198] sm:$0xff] %vm846, %v1100
    %1165 = vst.msk [vmem:[%s3 + $0x1a0] sm:$0xff] %vm846, %v1101
    %1166 = vst.msk [vmem:[%s3 + $0x1a8] sm:$0xff] %vm846, %v1102
    %1167 = vst.msk [vmem:[%s3 + $0x1b0] sm:$0xff] %vm846, %v1103
    %1168 = vst.msk [vmem:[%s3 + $0x1b8] sm:$0xff] %vm846, %v1104
    %1169 = vst.msk [vmem:[%s3 + $0x1c0] sm:$0xff] %vm846, %v1105
    %1170 = vst.msk [vmem:[%s3 + $0x1c8] sm:$0xff] %vm846, %v1106
    %1171 = vst.msk [vmem:[%s3 + $0x1d0] sm:$0xff] %vm846, %v1107
    %1172 = vst.msk [vmem:[%s3 + $0x1d8] sm:$0xff] %vm846, %v1108
    %1173 = vst.msk [vmem:[%s3 + $0x1e0] sm:$0xff] %vm846, %v1109
    %1174 = vst.msk [vmem:[%s3 + $0x1e8] sm:$0xff] %vm846, %v1110
    %1175 = vst.msk [vmem:[%s3 + $0x1f0] sm:$0xff] %vm846, %v1111
    %1176 = vst.msk [vmem:[%s3 + $0x1f8] sm:$0xff] %vm846, %v1112
  $region21: #{bottleneck1_forward.4} parent=0 // pred_fallthru
    _
  // Predicated region
  $region22: #{bottleneck1_forward.4} parent=0 // pred_check
    _
  $region23: #{bottleneck1_forward.4} parent=0 // pred_check_branch
    %1178 = sbr.rel (0) target = $region25
  $region24: #{bottleneck1_forward.4} parent=0 // pred_region
    _
  $region25: #{bottleneck1_forward.4} parent=0 // pred_fallthru
    _
  // Predicated region
  $region26: #{bottleneck1_forward.4} parent=0 // pred_check
    _
  $region27: #{bottleneck1_forward.4} parent=0 // pred_check_branch
    %1180 = sbr.rel (0) target = $region29
  $region28: #{bottleneck1_forward.4} parent=0 // pred_region
    _
  $region29: #{bottleneck1_forward.4} parent=0 // pred_fallthru
    _

// kernel: bottleneck1_forward.5
$region0: #{bottleneck1_forward.5}
  #allocation0 [shape = 'u32[]', space=smem, size = 0x4, offset = 0x4, fixed_abs, tag = 'smem constant byte address 0x4 - core index']
  #allocation1 [shape = 'u32[144,128]{1,0:T(1,128)}', space=vmem, size = 0x12000, scoped, tag = 'internal scratch']
  %s0 = inlined_call_operand.vmem [shape: bf16[512,4], index: 0, kind: input, shape index: {}]
  %s1 = inlined_call_operand.vmem [shape: bf16[4,16], index: 1, kind: input, shape index: {}]
  %s2 = inlined_call_operand.vmem [shape: f32[1,16], index: 2, kind: input, shape index: {}]
  %s3 = inlined_call_operand.vmem [shape: f32[512,16], index: 3, kind: input, shape index: {}]
  %s4 = inlined_call_operand.vmem [shape: f32[512,16], index: 4, kind: output, shape index: {}]
  %s5 = sld [smem:[#allocation0]]
  $region34: #{bottleneck1_forward.5} parent=0
    _
  %s7 = ssub.s32 1, %s5
  %s8 = scalar_select 0, %s7, %s5
  // Predicated region
  $region2: #{bottleneck1_forward.5} parent=0 // pred_check
    _
  $region3: #{bottleneck1_forward.5} parent=0 // pred_check_branch
    %10 = sbr.rel (0) target = $region5
  $region4: #{bottleneck1_forward.5} parent=0 // pred_region
    _
  $region5: #{bottleneck1_forward.5} parent=0 // pred_fallthru
    _
  // Predicated region
  $region6: #{bottleneck1_forward.5} parent=0 // pred_check
    _
  $region7: #{bottleneck1_forward.5} parent=0 // pred_check_branch
    %12 = sbr.rel (0) target = $region9
  $region8: #{bottleneck1_forward.5} parent=0 // pred_region
    _
  $region9: #{bottleneck1_forward.5} parent=0 // pred_fallthru
    _
  // Predicated region
  $region10: #{bottleneck1_forward.5} parent=0 // pred_check
    _
  $region11: #{bottleneck1_forward.5} parent=0 // pred_check_branch
    %14 = sbr.rel (0) target = $region13
  $region12: #{bottleneck1_forward.5} parent=0 // pred_region
    _
  $region13: #{bottleneck1_forward.5} parent=0 // pred_fallthru
    _
  // Predicated region
  $region14: #{bottleneck1_forward.5} parent=0 // pred_check
    _
  $region15: #{bottleneck1_forward.5} parent=0 // pred_check_branch
    %16 = sbr.rel (0) target = $region17
  $region16: #{bottleneck1_forward.5} parent=0 // pred_region
    _
  $region17: #{bottleneck1_forward.5} parent=0 // pred_fallthru
    _
  %p18 = scmp.eq.s32.totalorder 0, 0
  // Predicated region
  $region18: #{bottleneck1_forward.5} parent=0 // pred_check
    %p19 = pneg %p18
  $region19: #{bottleneck1_forward.5} parent=0 // pred_check_branch
    %21 = sbr.rel (%p19) target = $region21
  $region20: #{bottleneck1_forward.5} parent=0 // pred_region
    %vm22 = vcmask 130048
    %23 = vst.msk [vmem:[%s4] sm:$0xff] %vm22, 0.0
    %24 = vst.msk [vmem:[%s4 + $0x8] sm:$0xff] %vm22, 0.0
    %25 = vst.msk [vmem:[%s4 + $0x10] sm:$0xff] %vm22, 0.0
    %26 = vst.msk [vmem:[%s4 + $0x18] sm:$0xff] %vm22, 0.0
    %27 = vst.msk [vmem:[%s4 + $0x20] sm:$0xff] %vm22, 0.0
    %28 = vst.msk [vmem:[%s4 + $0x28] sm:$0xff] %vm22, 0.0
    %29 = vst.msk [vmem:[%s4 + $0x30] sm:$0xff] %vm22, 0.0
    %30 = vst.msk [vmem:[%s4 + $0x38] sm:$0xff] %vm22, 0.0
    %31 = vst.msk [vmem:[%s4 + $0x40] sm:$0xff] %vm22, 0.0
    %32 = vst.msk [vmem:[%s4 + $0x48] sm:$0xff] %vm22, 0.0
    %33 = vst.msk [vmem:[%s4 + $0x50] sm:$0xff] %vm22, 0.0
    %34 = vst.msk [vmem:[%s4 + $0x58] sm:$0xff] %vm22, 0.0
    %35 = vst.msk [vmem:[%s4 + $0x60] sm:$0xff] %vm22, 0.0
    %36 = vst.msk [vmem:[%s4 + $0x68] sm:$0xff] %vm22, 0.0
    %37 = vst.msk [vmem:[%s4 + $0x70] sm:$0xff] %vm22, 0.0
    %38 = vst.msk [vmem:[%s4 + $0x78] sm:$0xff] %vm22, 0.0
    %39 = vst.msk [vmem:[%s4 + $0x80] sm:$0xff] %vm22, 0.0
    %40 = vst.msk [vmem:[%s4 + $0x88] sm:$0xff] %vm22, 0.0
    %41 = vst.msk [vmem:[%s4 + $0x90] sm:$0xff] %vm22, 0.0
    %42 = vst.msk [vmem:[%s4 + $0x98] sm:$0xff] %vm22, 0.0
    %43 = vst.msk [vmem:[%s4 + $0xa0] sm:$0xff] %vm22, 0.0
    %44 = vst.msk [vmem:[%s4 + $0xa8] sm:$0xff] %vm22, 0.0
    %45 = vst.msk [vmem:[%s4 + $0xb0] sm:$0xff] %vm22, 0.0
    %46 = vst.msk [vmem:[%s4 + $0xb8] sm:$0xff] %vm22, 0.0
    %47 = vst.msk [vmem:[%s4 + $0xc0] sm:$0xff] %vm22, 0.0
    %48 = vst.msk [vmem:[%s4 + $0xc8] sm:$0xff] %vm22, 0.0
    %49 = vst.msk [vmem:[%s4 + $0xd0] sm:$0xff] %vm22, 0.0
    %50 = vst.msk [vmem:[%s4 + $0xd8] sm:$0xff] %vm22, 0.0
    %51 = vst.msk [vmem:[%s4 + $0xe0] sm:$0xff] %vm22, 0.0
    %52 = vst.msk [vmem:[%s4 + $0xe8] sm:$0xff] %vm22, 0.0
    %53 = vst.msk [vmem:[%s4 + $0xf0] sm:$0xff] %vm22, 0.0
    %54 = vst.msk [vmem:[%s4 + $0xf8] sm:$0xff] %vm22, 0.0
    %55 = vst.msk [vmem:[%s4 + $0x100] sm:$0xff] %vm22, 0.0
    %56 = vst.msk [vmem:[%s4 + $0x108] sm:$0xff] %vm22, 0.0
    %57 = vst.msk [vmem:[%s4 + $0x110] sm:$0xff] %vm22, 0.0
    %58 = vst.msk [vmem:[%s4 + $0x118] sm:$0xff] %vm22, 0.0
    %59 = vst.msk [vmem:[%s4 + $0x120] sm:$0xff] %vm22, 0.0
    %60 = vst.msk [vmem:[%s4 + $0x128] sm:$0xff] %vm22, 0.0
    %61 = vst.msk [vmem:[%s4 + $0x130] sm:$0xff] %vm22, 0.0
    %62 = vst.msk [vmem:[%s4 + $0x138] sm:$0xff] %vm22, 0.0
    %63 = vst.msk [vmem:[%s4 + $0x140] sm:$0xff] %vm22, 0.0
    %64 = vst.msk [vmem:[%s4 + $0x148] sm:$0xff] %vm22, 0.0
    %65 = vst.msk [vmem:[%s4 + $0x150] sm:$0xff] %vm22, 0.0
    %66 = vst.msk [vmem:[%s4 + $0x158] sm:$0xff] %vm22, 0.0
    %67 = vst.msk [vmem:[%s4 + $0x160] sm:$0xff] %vm22, 0.0
    %68 = vst.msk [vmem:[%s4 + $0x168] sm:$0xff] %vm22, 0.0
    %69 = vst.msk [vmem:[%s4 + $0x170] sm:$0xff] %vm22, 0.0
    %70 = vst.msk [vmem:[%s4 + $0x178] sm:$0xff] %vm22, 0.0
    %71 = vst.msk [vmem:[%s4 + $0x180] sm:$0xff] %vm22, 0.0
    %72 = vst.msk [vmem:[%s4 + $0x188] sm:$0xff] %vm22, 0.0
    %73 = vst.msk [vmem:[%s4 + $0x190] sm:$0xff] %vm22, 0.0
    %74 = vst.msk [vmem:[%s4 + $0x198] sm:$0xff] %vm22, 0.0
    %75 = vst.msk [vmem:[%s4 + $0x1a0] sm:$0xff] %vm22, 0.0
    %76 = vst.msk [vmem:[%s4 + $0x1a8] sm:$0xff] %vm22, 0.0
    %77 = vst.msk [vmem:[%s4 + $0x1b0] sm:$0xff] %vm22, 0.0
    %78 = vst.msk [vmem:[%s4 + $0x1b8] sm:$0xff] %vm22, 0.0
    %79 = vst.msk [vmem:[%s4 + $0x1c0] sm:$0xff] %vm22, 0.0
    %80 = vst.msk [vmem:[%s4 + $0x1c8] sm:$0xff] %vm22, 0.0
    %81 = vst.msk [vmem:[%s4 + $0x1d0] sm:$0xff] %vm22, 0.0
    %82 = vst.msk [vmem:[%s4 + $0x1d8] sm:$0xff] %vm22, 0.0
    %83 = vst.msk [vmem:[%s4 + $0x1e0] sm:$0xff] %vm22, 0.0
    %84 = vst.msk [vmem:[%s4 + $0x1e8] sm:$0xff] %vm22, 0.0
    %85 = vst.msk [vmem:[%s4 + $0x1f0] sm:$0xff] %vm22, 0.0
    %86 = vst.msk [vmem:[%s4 + $0x1f8] sm:$0xff] %vm22, 0.0
  $region21: #{bottleneck1_forward.5} parent=0 // pred_fallthru
    _
  %v87 = vld [vmem:[%s4] sm:$0xff]
  %v88 = vld [vmem:[%s4 + $0x8] sm:$0xff]
  %v89 = vld [vmem:[%s4 + $0x10] sm:$0xff]
  %v90 = vld [vmem:[%s4 + $0x18] sm:$0xff]
  %v91 = vld [vmem:[%s4 + $0x20] sm:$0xff]
  %v92 = vld [vmem:[%s4 + $0x28] sm:$0xff]
  %v93 = vld [vmem:[%s4 + $0x30] sm:$0xff]
  %v94 = vld [vmem:[%s4 + $0x38] sm:$0xff]
  %v95 = vld [vmem:[%s4 + $0x40] sm:$0xff]
  %v96 = vld [vmem:[%s4 + $0x48] sm:$0xff]
  %v97 = vld [vmem:[%s4 + $0x50] sm:$0xff]
  %v98 = vld [vmem:[%s4 + $0x58] sm:$0xff]
  %v99 = vld [vmem:[%s4 + $0x60] sm:$0xff]
  %v100 = vld [vmem:[%s4 + $0x68] sm:$0xff]
  %v101 = vld [vmem:[%s4 + $0x70] sm:$0xff]
  %v102 = vld [vmem:[%s4 + $0x78] sm:$0xff]
  %v103 = vld [vmem:[%s4 + $0x80] sm:$0xff]
  %v104 = vld [vmem:[%s4 + $0x88] sm:$0xff]
  %v105 = vld [vmem:[%s4 + $0x90] sm:$0xff]
  %v106 = vld [vmem:[%s4 + $0x98] sm:$0xff]
  %v107 = vld [vmem:[%s4 + $0xa0] sm:$0xff]
  %v108 = vld [vmem:[%s4 + $0xa8] sm:$0xff]
  %v109 = vld [vmem:[%s4 + $0xb0] sm:$0xff]
  %v110 = vld [vmem:[%s4 + $0xb8] sm:$0xff]
  %v111 = vld [vmem:[%s4 + $0xc0] sm:$0xff]
  %v112 = vld [vmem:[%s4 + $0xc8] sm:$0xff]
  %v113 = vld [vmem:[%s4 + $0xd0] sm:$0xff]
  %v114 = vld [vmem:[%s4 + $0xd8] sm:$0xff]
  %v115 = vld [vmem:[%s4 + $0xe0] sm:$0xff]
  %v116 = vld [vmem:[%s4 + $0xe8] sm:$0xff]
  %v117 = vld [vmem:[%s4 + $0xf0] sm:$0xff]
  %v118 = vld [vmem:[%s4 + $0xf8] sm:$0xff]
  %v119 = vld [vmem:[%s4 + $0x100] sm:$0xff]
  %v120 = vld [vmem:[%s4 + $0x108] sm:$0xff]
  %v121 = vld [vmem:[%s4 + $0x110] sm:$0xff]
  %v122 = vld [vmem:[%s4 + $0x118] sm:$0xff]
  %v123 = vld [vmem:[%s4 + $0x120] sm:$0xff]
  %v124 = vld [vmem:[%s4 + $0x128] sm:$0xff]
  %v125 = vld [vmem:[%s4 + $0x130] sm:$0xff]
  %v126 = vld [vmem:[%s4 + $0x138] sm:$0xff]
  %v127 = vld [vmem:[%s4 + $0x140] sm:$0xff]
  %v128 = vld [vmem:[%s4 + $0x148] sm:$0xff]
  %v129 = vld [vmem:[%s4 + $0x150] sm:$0xff]
  %v130 = vld [vmem:[%s4 + $0x158] sm:$0xff]
  %v131 = vld [vmem:[%s4 + $0x160] sm:$0xff]
  %v132 = vld [vmem:[%s4 + $0x168] sm:$0xff]
  %v133 = vld [vmem:[%s4 + $0x170] sm:$0xff]
  %v134 = vld [vmem:[%s4 + $0x178] sm:$0xff]
  %v135 = vld [vmem:[%s4 + $0x180] sm:$0xff]
  %v136 = vld [vmem:[%s4 + $0x188] sm:$0xff]
  %v137 = vld [vmem:[%s4 + $0x190] sm:$0xff]
  %v138 = vld [vmem:[%s4 + $0x198] sm:$0xff]
  %v139 = vld [vmem:[%s4 + $0x1a0] sm:$0xff]
  %v140 = vld [vmem:[%s4 + $0x1a8] sm:$0xff]
  %v141 = vld [vmem:[%s4 + $0x1b0] sm:$0xff]
  %v142 = vld [vmem:[%s4 + $0x1b8] sm:$0xff]
  %v143 = vld [vmem:[%s4 + $0x1c0] sm:$0xff]
  %v144 = vld [vmem:[%s4 + $0x1c8] sm:$0xff]
  %v145 = vld [vmem:[%s4 + $0x1d0] sm:$0xff]
  %v146 = vld [vmem:[%s4 + $0x1d8] sm:$0xff]
  %v147 = vld [vmem:[%s4 + $0x1e0] sm:$0xff]
  %v148 = vld [vmem:[%s4 + $0x1e8] sm:$0xff]
  %v149 = vld [vmem:[%s4 + $0x1f0] sm:$0xff]
  %v150 = vld [vmem:[%s4 + $0x1f8] sm:$0xff]
  %v151 = vld [vmem:[%s0] sm:$0xf]
  %v152 = vld [vmem:[%s0 + $0x4] sm:$0xf]
  %v153 = vld [vmem:[%s0 + $0x8] sm:$0xf]
  %v154 = vld [vmem:[%s0 + $0xc] sm:$0xf]
  %v155 = vld [vmem:[%s0 + $0x10] sm:$0xf]
  %v156 = vld [vmem:[%s0 + $0x14] sm:$0xf]
  %v157 = vld [vmem:[%s0 + $0x18] sm:$0xf]
  %v158 = vld [vmem:[%s0 + $0x1c] sm:$0xf]
  %v159 = vld [vmem:[%s0 + $0x20] sm:$0xf]
  %v160 = vld [vmem:[%s0 + $0x24] sm:$0xf]
  %v161 = vld [vmem:[%s0 + $0x28] sm:$0xf]
  %v162 = vld [vmem:[%s0 + $0x2c] sm:$0xf]
  %v163 = vld [vmem:[%s0 + $0x30] sm:$0xf]
  %v164 = vld [vmem:[%s0 + $0x34] sm:$0xf]
  %v165 = vld [vmem:[%s0 + $0x38] sm:$0xf]
  %v166 = vld [vmem:[%s0 + $0x3c] sm:$0xf]
  %v167 = vld [vmem:[%s0 + $0x40] sm:$0xf]
  %v168 = vld [vmem:[%s0 + $0x44] sm:$0xf]
  %v169 = vld [vmem:[%s0 + $0x48] sm:$0xf]
  %v170 = vld [vmem:[%s0 + $0x4c] sm:$0xf]
  %v171 = vld [vmem:[%s0 + $0x50] sm:$0xf]
  %v172 = vld [vmem:[%s0 + $0x54] sm:$0xf]
  %v173 = vld [vmem:[%s0 + $0x58] sm:$0xf]
  %v174 = vld [vmem:[%s0 + $0x5c] sm:$0xf]
  %v175 = vld [vmem:[%s0 + $0x60] sm:$0xf]
  %v176 = vld [vmem:[%s0 + $0x64] sm:$0xf]
  %v177 = vld [vmem:[%s0 + $0x68] sm:$0xf]
  %v178 = vld [vmem:[%s0 + $0x6c] sm:$0xf]
  %v179 = vld [vmem:[%s0 + $0x70] sm:$0xf]
  %v180 = vld [vmem:[%s0 + $0x74] sm:$0xf]
  %v181 = vld [vmem:[%s0 + $0x78] sm:$0xf]
  %v182 = vld [vmem:[%s0 + $0x7c] sm:$0xf]
  %v183 = vld [vmem:[%s0 + $0x80] sm:$0xf]
  %v184 = vld [vmem:[%s0 + $0x84] sm:$0xf]
  %v185 = vld [vmem:[%s0 + $0x88] sm:$0xf]
  %v186 = vld [vmem:[%s0 + $0x8c] sm:$0xf]
  %v187 = vld [vmem:[%s0 + $0x90] sm:$0xf]
  %v188 = vld [vmem:[%s0 + $0x94] sm:$0xf]
  %v189 = vld [vmem:[%s0 + $0x98] sm:$0xf]
  %v190 = vld [vmem:[%s0 + $0x9c] sm:$0xf]
  %v191 = vld [vmem:[%s0 + $0xa0] sm:$0xf]
  %v192 = vld [vmem:[%s0 + $0xa4] sm:$0xf]
  %v193 = vld [vmem:[%s0 + $0xa8] sm:$0xf]
  %v194 = vld [vmem:[%s0 + $0xac] sm:$0xf]
  %v195 = vld [vmem:[%s0 + $0xb0] sm:$0xf]
  %v196 = vld [vmem:[%s0 + $0xb4] sm:$0xf]
  %v197 = vld [vmem:[%s0 + $0xb8] sm:$0xf]
  %v198 = vld [vmem:[%s0 + $0xbc] sm:$0xf]
  %v199 = vld [vmem:[%s0 + $0xc0] sm:$0xf]
  %v200 = vld [vmem:[%s0 + $0xc4] sm:$0xf]
  %v201 = vld [vmem:[%s0 + $0xc8] sm:$0xf]
  %v202 = vld [vmem:[%s0 + $0xcc] sm:$0xf]
  %v203 = vld [vmem:[%s0 + $0xd0] sm:$0xf]
  %v204 = vld [vmem:[%s0 + $0xd4] sm:$0xf]
  %v205 = vld [vmem:[%s0 + $0xd8] sm:$0xf]
  %v206 = vld [vmem:[%s0 + $0xdc] sm:$0xf]
  %v207 = vld [vmem:[%s0 + $0xe0] sm:$0xf]
  %v208 = vld [vmem:[%s0 + $0xe4] sm:$0xf]
  %v209 = vld [vmem:[%s0 + $0xe8] sm:$0xf]
  %v210 = vld [vmem:[%s0 + $0xec] sm:$0xf]
  %v211 = vld [vmem:[%s0 + $0xf0] sm:$0xf]
  %v212 = vld [vmem:[%s0 + $0xf4] sm:$0xf]
  %v213 = vld [vmem:[%s0 + $0xf8] sm:$0xf]
  %v214 = vld [vmem:[%s0 + $0xfc] sm:$0xf]
  %v215 = vld [vmem:[%s1] sm:$0x3]
  %v280 = vunpack.c.l.b16 %v151
  %v281 = vunpack.c.l.b16 %v152
  %v282 = vunpack.c.l.b16 %v153
  %v283 = vunpack.c.l.b16 %v154
  %v284 = vunpack.c.l.b16 %v155
  %v285 = vunpack.c.l.b16 %v156
  %v286 = vunpack.c.l.b16 %v157
  %v287 = vunpack.c.l.b16 %v158
  %v288 = vunpack.c.l.b16 %v159
  %v289 = vunpack.c.l.b16 %v160
  %v290 = vunpack.c.l.b16 %v161
  %v291 = vunpack.c.l.b16 %v162
  %v292 = vunpack.c.l.b16 %v163
  %v293 = vunpack.c.l.b16 %v164
  %v294 = vunpack.c.l.b16 %v165
  %v295 = vunpack.c.l.b16 %v166
  %v296 = vunpack.c.l.b16 %v167
  %v297 = vunpack.c.l.b16 %v168
  %v298 = vunpack.c.l.b16 %v169
  %v299 = vunpack.c.l.b16 %v170
  %v300 = vunpack.c.l.b16 %v171
  %v301 = vunpack.c.l.b16 %v172
  %v302 = vunpack.c.l.b16 %v173
  %v303 = vunpack.c.l.b16 %v174
  %v304 = vunpack.c.l.b16 %v175
  %v305 = vunpack.c.l.b16 %v176
  %v306 = vunpack.c.l.b16 %v177
  %v307 = vunpack.c.l.b16 %v178
  %v308 = vunpack.c.l.b16 %v179
  %v309 = vunpack.c.l.b16 %v180
  %v310 = vunpack.c.l.b16 %v181
  %v311 = vunpack.c.l.b16 %v182
  %v312 = vunpack.c.l.b16 %v183
  %v313 = vunpack.c.l.b16 %v184
  %v314 = vunpack.c.l.b16 %v185
  %v315 = vunpack.c.l.b16 %v186
  %v316 = vunpack.c.l.b16 %v187
  %v317 = vunpack.c.l.b16 %v188
  %v318 = vunpack.c.l.b16 %v189
  %v319 = vunpack.c.l.b16 %v190
  %v320 = vunpack.c.l.b16 %v191
  %v321 = vunpack.c.l.b16 %v192
  %v322 = vunpack.c.l.b16 %v193
  %v323 = vunpack.c.l.b16 %v194
  %v324 = vunpack.c.l.b16 %v195
  %v325 = vunpack.c.l.b16 %v196
  %v326 = vunpack.c.l.b16 %v197
  %v327 = vunpack.c.l.b16 %v198
  %v328 = vunpack.c.l.b16 %v199
  %v329 = vunpack.c.l.b16 %v200
  %v330 = vunpack.c.l.b16 %v201
  %v331 = vunpack.c.l.b16 %v202
  %v332 = vunpack.c.l.b16 %v203
  %v333 = vunpack.c.l.b16 %v204
  %v334 = vunpack.c.l.b16 %v205
  %v335 = vunpack.c.l.b16 %v206
  %v336 = vunpack.c.l.b16 %v207
  %v337 = vunpack.c.l.b16 %v208
  %v338 = vunpack.c.l.b16 %v209
  %v339 = vunpack.c.l.b16 %v210
  %v340 = vunpack.c.l.b16 %v211
  %v341 = vunpack.c.l.b16 %v212
  %v342 = vunpack.c.l.b16 %v213
  %v343 = vunpack.c.l.b16 %v214
  %v344 = vpack.c.b16 %v281, %v280
  %v345 = vpack.c.b16 %v283, %v282
  %v346 = vpack.c.b16 %v285, %v284
  %v347 = vpack.c.b16 %v287, %v286
  %v348 = vpack.c.b16 %v289, %v288
  %v349 = vpack.c.b16 %v291, %v290
  %v350 = vpack.c.b16 %v293, %v292
  %v351 = vpack.c.b16 %v295, %v294
  %v352 = vpack.c.b16 %v297, %v296
  %v353 = vpack.c.b16 %v299, %v298
  %v354 = vpack.c.b16 %v301, %v300
  %v355 = vpack.c.b16 %v303, %v302
  %v356 = vpack.c.b16 %v305, %v304
  %v357 = vpack.c.b16 %v307, %v306
  %v358 = vpack.c.b16 %v309, %v308
  %v359 = vpack.c.b16 %v311, %v310
  %v360 = vpack.c.b16 %v313, %v312
  %v361 = vpack.c.b16 %v315, %v314
  %v362 = vpack.c.b16 %v317, %v316
  %v363 = vpack.c.b16 %v319, %v318
  %v364 = vpack.c.b16 %v321, %v320
  %v365 = vpack.c.b16 %v323, %v322
  %v366 = vpack.c.b16 %v325, %v324
  %v367 = vpack.c.b16 %v327, %v326
  %v368 = vpack.c.b16 %v329, %v328
  %v369 = vpack.c.b16 %v331, %v330
  %v370 = vpack.c.b16 %v333, %v332
  %v371 = vpack.c.b16 %v335, %v334
  %v372 = vpack.c.b16 %v337, %v336
  %v373 = vpack.c.b16 %v339, %v338
  %v374 = vpack.c.b16 %v341, %v340
  %v375 = vpack.c.b16 %v343, %v342
  %vm376 = vcmask 31744
  %v378 = vsel %vm376, %v344, 0
  %v381 = vsel %vm376, %v345, 0
  %v384 = vsel %vm376, %v346, 0
  %v387 = vsel %vm376, %v347, 0
  %v390 = vsel %vm376, %v348, 0
  %v393 = vsel %vm376, %v349, 0
  %v396 = vsel %vm376, %v350, 0
  %v399 = vsel %vm376, %v351, 0
  %v402 = vsel %vm376, %v352, 0
  %v405 = vsel %vm376, %v353, 0
  %v408 = vsel %vm376, %v354, 0
  %v411 = vsel %vm376, %v355, 0
  %v414 = vsel %vm376, %v356, 0
  %v417 = vsel %vm376, %v357, 0
  %v420 = vsel %vm376, %v358, 0
  %v423 = vsel %vm376, %v359, 0
  %v426 = vsel %vm376, %v360, 0
  %v429 = vsel %vm376, %v361, 0
  %v432 = vsel %vm376, %v362, 0
  %v435 = vsel %vm376, %v363, 0
  %v438 = vsel %vm376, %v364, 0
  %v441 = vsel %vm376, %v365, 0
  %v444 = vsel %vm376, %v366, 0
  %v447 = vsel %vm376, %v367, 0
  %v450 = vsel %vm376, %v368, 0
  %v453 = vsel %vm376, %v369, 0
  %v456 = vsel %vm376, %v370, 0
  %v459 = vsel %vm376, %v371, 0
  %v462 = vsel %vm376, %v372, 0
  %v465 = vsel %vm376, %v373, 0
  %v468 = vsel %vm376, %v374, 0
  %v471 = vsel %vm376, %v375, 0
  %vm473 = vcmask 1041408
  %v475 = vsel %vm473, %v215, 0
  %477 = vmatprep.subr.bf16.mxu0 0
  %478 = vmatpush1.bf16.msra.mxu0 %v475
  %479 = vmatprep.subr.bf16.mxu0 0
  %480 = vmatpush1.bf16.msra.mxu0 0
  %481 = vmatprep.subr.bf16.mxu0 0
  %482 = vmatpush1.bf16.msra.mxu0 0
  %483 = vmatprep.subr.bf16.mxu0 0
  %484 = vmatpush1.bf16.msra.mxu0 0
  %485 = vmatprep.subr.bf16.mxu0 0
  %486 = vmatpush1.bf16.msra.mxu0 0
  %487 = vmatprep.subr.bf16.mxu0 0
  %488 = vmatpush1.bf16.msra.mxu0 0
  %489 = vmatprep.subr.bf16.mxu0 0
  %490 = vmatpush1.bf16.msra.mxu0 0
  %491 = vmatprep.subr.bf16.mxu0 0
  %492 = vmatpush1.bf16.msra.mxu0 0
  %493 = vmatprep.subr.bf16.mxu0 0
  %494 = vmatpush1.bf16.msra.mxu0 0
  %495 = vmatprep.subr.bf16.mxu0 0
  %496 = vmatpush1.bf16.msra.mxu0 0
  %497 = vmatprep.subr.bf16.mxu0 0
  %498 = vmatpush1.bf16.msra.mxu0 0
  %499 = vmatprep.subr.bf16.mxu0 0
  %500 = vmatpush1.bf16.msra.mxu0 0
  %501 = vmatprep.subr.bf16.mxu0 0
  %502 = vmatpush1.bf16.msra.mxu0 0
  %503 = vmatprep.subr.bf16.mxu0 0
  %504 = vmatpush1.bf16.msra.mxu0 0
  %505 = vmatprep.subr.bf16.mxu0 0
  %506 = vmatpush1.bf16.msra.mxu0 0
  %507 = vmatprep.subr.bf16.mxu0 0
  %508 = vmatpush1.bf16.msra.mxu0 0
  %509 = vmatprep.mubr.bf16.mxu0 0
  %510 = vmatmul.mubr.bf16.gmra.mrb[0].mxu0 %v378
  %v511 = vpop.f32.mrb[0].mxu0
  %v512 = vadd.f32 0.0, %v511
  %v513 = vpop.f32.mrb[0].mxu0
  %v514 = vpop.f32.mrb[0].mxu0
  %v515 = vadd.f32 0.0, %v514
  %v516 = vpop.f32.mrb[0].mxu0
  %517 = vmatprep.mubr.bf16.mxu0 0
  %518 = vmatmul.mubr.bf16.gmra.mrb[0].mxu0 %v381
  %v519 = vpop.f32.mrb[0].mxu0
  %v520 = vadd.f32 0.0, %v519
  %v521 = vpop.f32.mrb[0].mxu0
  %v522 = vpop.f32.mrb[0].mxu0
  %v523 = vadd.f32 0.0, %v522
  %v524 = vpop.f32.mrb[0].mxu0
  %525 = vmatprep.mubr.bf16.mxu0 0
  %526 = vmatmul.mubr.bf16.gmra.mrb[0].mxu0 %v384
  %v527 = vpop.f32.mrb[0].mxu0
  %v528 = vadd.f32 0.0, %v527
  %v529 = vpop.f32.mrb[0].mxu0
  %v530 = vpop.f32.mrb[0].mxu0
  %v531 = vadd.f32 0.0, %v530
  %v532 = vpop.f32.mrb[0].mxu0
  %533 = vmatprep.mubr.bf16.mxu0 0
  %534 = vmatmul.mubr.bf16.gmra.mrb[0].mxu0 %v387
  %v535 = vpop.f32.mrb[0].mxu0
  %v536 = vadd.f32 0.0, %v535
  %v537 = vpop.f32.mrb[0].mxu0
  %v538 = vpop.f32.mrb[0].mxu0
  %v539 = vadd.f32 0.0, %v538
  %v540 = vpop.f32.mrb[0].mxu0
  %541 = vmatprep.mubr.bf16.mxu0 0
  %542 = vmatmul.mubr.bf16.gmra.mrb[0].mxu0 %v390
  %v543 = vpop.f32.mrb[0].mxu0
  %v544 = vadd.f32 0.0, %v543
  %v545 = vpop.f32.mrb[0].mxu0
  %v546 = vpop.f32.mrb[0].mxu0
  %v547 = vadd.f32 0.0, %v546
  %v548 = vpop.f32.mrb[0].mxu0
  %549 = vmatprep.mubr.bf16.mxu0 0
  %550 = vmatmul.mubr.bf16.gmra.mrb[0].mxu0 %v393
  %v551 = vpop.f32.mrb[0].mxu0
  %v552 = vadd.f32 0.0, %v551
  %v553 = vpop.f32.mrb[0].mxu0
  %v554 = vpop.f32.mrb[0].mxu0
  %v555 = vadd.f32 0.0, %v554
  %v556 = vpop.f32.mrb[0].mxu0
  %557 = vmatprep.mubr.bf16.mxu0 0
  %558 = vmatmul.mubr.bf16.gmra.mrb[0].mxu0 %v396
  %v559 = vpop.f32.mrb[0].mxu0
  %v560 = vadd.f32 0.0, %v559
  %v561 = vpop.f32.mrb[0].mxu0
  %v562 = vpop.f32.mrb[0].mxu0
  %v563 = vadd.f32 0.0, %v562
  %v564 = vpop.f32.mrb[0].mxu0
  %565 = vmatprep.mubr.bf16.mxu0 0
  %566 = vmatmul.mubr.bf16.gmra.mrb[0].mxu0 %v399
  %v567 = vpop.f32.mrb[0].mxu0
  %v568 = vadd.f32 0.0, %v567
  %v569 = vpop.f32.mrb[0].mxu0
  %v570 = vpop.f32.mrb[0].mxu0
  %v571 = vadd.f32 0.0, %v570
  %v572 = vpop.f32.mrb[0].mxu0
  %573 = vmatprep.mubr.bf16.mxu0 0
  %574 = vmatmul.mubr.bf16.gmra.mrb[0].mxu0 %v402
  %v575 = vpop.f32.mrb[0].mxu0
  %v576 = vadd.f32 0.0, %v575
  %v577 = vpop.f32.mrb[0].mxu0
  %v578 = vpop.f32.mrb[0].mxu0
  %v579 = vadd.f32 0.0, %v578
  %v580 = vpop.f32.mrb[0].mxu0
  %581 = vmatprep.mubr.bf16.mxu0 0
  %582 = vmatmul.mubr.bf16.gmra.mrb[0].mxu0 %v405
  %v583 = vpop.f32.mrb[0].mxu0
  %v584 = vadd.f32 0.0, %v583
  %v585 = vpop.f32.mrb[0].mxu0
  %v586 = vpop.f32.mrb[0].mxu0
  %v587 = vadd.f32 0.0, %v586
  %v588 = vpop.f32.mrb[0].mxu0
  %589 = vmatprep.mubr.bf16.mxu0 0
  %590 = vmatmul.mubr.bf16.gmra.mrb[0].mxu0 %v408
  %v591 = vpop.f32.mrb[0].mxu0
  %v592 = vadd.f32 0.0, %v591
  %v593 = vpop.f32.mrb[0].mxu0
  %v594 = vpop.f32.mrb[0].mxu0
  %v595 = vadd.f32 0.0, %v594
  %v596 = vpop.f32.mrb[0].mxu0
  %597 = vmatprep.mubr.bf16.mxu0 0
  %598 = vmatmul.mubr.bf16.gmra.mrb[0].mxu0 %v411
  %v599 = vpop.f32.mrb[0].mxu0
  %v600 = vadd.f32 0.0, %v599
  %v601 = vpop.f32.mrb[0].mxu0
  %v602 = vpop.f32.mrb[0].mxu0
  %v603 = vadd.f32 0.0, %v602
  %v604 = vpop.f32.mrb[0].mxu0
  %605 = vmatprep.mubr.bf16.mxu0 0
  %606 = vmatmul.mubr.bf16.gmra.mrb[0].mxu0 %v414
  %v607 = vpop.f32.mrb[0].mxu0
  %v608 = vadd.f32 0.0, %v607
  %v609 = vpop.f32.mrb[0].mxu0
  %v610 = vpop.f32.mrb[0].mxu0
  %v611 = vadd.f32 0.0, %v610
  %v612 = vpop.f32.mrb[0].mxu0
  %613 = vmatprep.mubr.bf16.mxu0 0
  %614 = vmatmul.mubr.bf16.gmra.mrb[0].mxu0 %v417
  %v615 = vpop.f32.mrb[0].mxu0
  %v616 = vadd.f32 0.0, %v615
  %v617 = vpop.f32.mrb[0].mxu0
  %v618 = vpop.f32.mrb[0].mxu0
  %v619 = vadd.f32 0.0, %v618
  %v620 = vpop.f32.mrb[0].mxu0
  %621 = vmatprep.mubr.bf16.mxu0 0
  %622 = vmatmul.mubr.bf16.gmra.mrb[0].mxu0 %v420
  %v623 = vpop.f32.mrb[0].mxu0
  %v624 = vadd.f32 0.0, %v623
  %v625 = vpop.f32.mrb[0].mxu0
  %v626 = vpop.f32.mrb[0].mxu0
  %v627 = vadd.f32 0.0, %v626
  %v628 = vpop.f32.mrb[0].mxu0
  %629 = vmatprep.mubr.bf16.mxu0 0
  %630 = vmatmul.mubr.bf16.gmra.mrb[0].mxu0 %v423
  %v631 = vpop.f32.mrb[0].mxu0
  %v632 = vadd.f32 0.0, %v631
  %v633 = vpop.f32.mrb[0].mxu0
  %v634 = vpop.f32.mrb[0].mxu0
  %v635 = vadd.f32 0.0, %v634
  %v636 = vpop.f32.mrb[0].mxu0
  %637 = vmatprep.mubr.bf16.mxu0 0
  %638 = vmatmul.mubr.bf16.gmra.mrb[0].mxu0 %v426
  %v639 = vpop.f32.mrb[0].mxu0
  %v640 = vadd.f32 0.0, %v639
  %v641 = vpop.f32.mrb[0].mxu0
  %v642 = vpop.f32.mrb[0].mxu0
  %v643 = vadd.f32 0.0, %v642
  %v644 = vpop.f32.mrb[0].mxu0
  %645 = vmatprep.mubr.bf16.mxu0 0
  %646 = vmatmul.mubr.bf16.gmra.mrb[0].mxu0 %v429
  %v647 = vpop.f32.mrb[0].mxu0
  %v648 = vadd.f32 0.0, %v647
  %v649 = vpop.f32.mrb[0].mxu0
  %v650 = vpop.f32.mrb[0].mxu0
  %v651 = vadd.f32 0.0, %v650
  %v652 = vpop.f32.mrb[0].mxu0
  %653 = vmatprep.mubr.bf16.mxu0 0
  %654 = vmatmul.mubr.bf16.gmra.mrb[0].mxu0 %v432
  %v655 = vpop.f32.mrb[0].mxu0
  %v656 = vadd.f32 0.0, %v655
  %v657 = vpop.f32.mrb[0].mxu0
  %v658 = vpop.f32.mrb[0].mxu0
  %v659 = vadd.f32 0.0, %v658
  %v660 = vpop.f32.mrb[0].mxu0
  %661 = vmatprep.mubr.bf16.mxu0 0
  %662 = vmatmul.mubr.bf16.gmra.mrb[0].mxu0 %v435
  %v663 = vpop.f32.mrb[0].mxu0
  %v664 = vadd.f32 0.0, %v663
  %v665 = vpop.f32.mrb[0].mxu0
  %v666 = vpop.f32.mrb[0].mxu0
  %v667 = vadd.f32 0.0, %v666
  %v668 = vpop.f32.mrb[0].mxu0
  %669 = vmatprep.mubr.bf16.mxu0 0
  %670 = vmatmul.mubr.bf16.gmra.mrb[0].mxu0 %v438
  %v671 = vpop.f32.mrb[0].mxu0
  %v672 = vadd.f32 0.0, %v671
  %v673 = vpop.f32.mrb[0].mxu0
  %v674 = vpop.f32.mrb[0].mxu0
  %v675 = vadd.f32 0.0, %v674
  %v676 = vpop.f32.mrb[0].mxu0
  %677 = vmatprep.mubr.bf16.mxu0 0
  %678 = vmatmul.mubr.bf16.gmra.mrb[0].mxu0 %v441
  %v679 = vpop.f32.mrb[0].mxu0
  %v680 = vadd.f32 0.0, %v679
  %v681 = vpop.f32.mrb[0].mxu0
  %v682 = vpop.f32.mrb[0].mxu0
  %v683 = vadd.f32 0.0, %v682
  %v684 = vpop.f32.mrb[0].mxu0
  %685 = vmatprep.mubr.bf16.mxu0 0
  %686 = vmatmul.mubr.bf16.gmra.mrb[0].mxu0 %v444
  %v687 = vpop.f32.mrb[0].mxu0
  %v688 = vadd.f32 0.0, %v687
  %v689 = vpop.f32.mrb[0].mxu0
  %v690 = vpop.f32.mrb[0].mxu0
  %v691 = vadd.f32 0.0, %v690
  %v692 = vpop.f32.mrb[0].mxu0
  %693 = vmatprep.mubr.bf16.mxu0 0
  %694 = vmatmul.mubr.bf16.gmra.mrb[0].mxu0 %v447
  %v695 = vpop.f32.mrb[0].mxu0
  %v696 = vadd.f32 0.0, %v695
  %v697 = vpop.f32.mrb[0].mxu0
  %v698 = vpop.f32.mrb[0].mxu0
  %v699 = vadd.f32 0.0, %v698
  %v700 = vpop.f32.mrb[0].mxu0
  %701 = vmatprep.mubr.bf16.mxu0 0
  %702 = vmatmul.mubr.bf16.gmra.mrb[0].mxu0 %v450
  %v703 = vpop.f32.mrb[0].mxu0
  %v704 = vadd.f32 0.0, %v703
  %v705 = vpop.f32.mrb[0].mxu0
  %v706 = vpop.f32.mrb[0].mxu0
  %v707 = vadd.f32 0.0, %v706
  %v708 = vpop.f32.mrb[0].mxu0
  %709 = vmatprep.mubr.bf16.mxu0 0
  %710 = vmatmul.mubr.bf16.gmra.mrb[0].mxu0 %v453
  %v711 = vpop.f32.mrb[0].mxu0
  %v712 = vadd.f32 0.0, %v711
  %v713 = vpop.f32.mrb[0].mxu0
  %v714 = vpop.f32.mrb[0].mxu0
  %v715 = vadd.f32 0.0, %v714
  %v716 = vpop.f32.mrb[0].mxu0
  %717 = vmatprep.mubr.bf16.mxu0 0
  %718 = vmatmul.mubr.bf16.gmra.mrb[0].mxu0 %v456
  %v719 = vpop.f32.mrb[0].mxu0
  %v720 = vadd.f32 0.0, %v719
  %v721 = vpop.f32.mrb[0].mxu0
  %v722 = vpop.f32.mrb[0].mxu0
  %v723 = vadd.f32 0.0, %v722
  %v724 = vpop.f32.mrb[0].mxu0
  %725 = vmatprep.mubr.bf16.mxu0 0
  %726 = vmatmul.mubr.bf16.gmra.mrb[0].mxu0 %v459
  %v727 = vpop.f32.mrb[0].mxu0
  %v728 = vadd.f32 0.0, %v727
  %v729 = vpop.f32.mrb[0].mxu0
  %v730 = vpop.f32.mrb[0].mxu0
  %v731 = vadd.f32 0.0, %v730
  %v732 = vpop.f32.mrb[0].mxu0
  %733 = vmatprep.mubr.bf16.mxu0 0
  %734 = vmatmul.mubr.bf16.gmra.mrb[0].mxu0 %v462
  %v735 = vpop.f32.mrb[0].mxu0
  %v736 = vadd.f32 0.0, %v735
  %v737 = vpop.f32.mrb[0].mxu0
  %v738 = vpop.f32.mrb[0].mxu0
  %v739 = vadd.f32 0.0, %v738
  %v740 = vpop.f32.mrb[0].mxu0
  %741 = vmatprep.mubr.bf16.mxu0 0
  %742 = vmatmul.mubr.bf16.gmra.mrb[0].mxu0 %v465
  %v743 = vpop.f32.mrb[0].mxu0
  %v744 = vadd.f32 0.0, %v743
  %v745 = vpop.f32.mrb[0].mxu0
  %v746 = vpop.f32.mrb[0].mxu0
  %v747 = vadd.f32 0.0, %v746
  %v748 = vpop.f32.mrb[0].mxu0
  %749 = vmatprep.mubr.bf16.mxu0 0
  %750 = vmatmul.mubr.bf16.gmra.mrb[0].mxu0 %v468
  %v751 = vpop.f32.mrb[0].mxu0
  %v752 = vadd.f32 0.0, %v751
  %v753 = vpop.f32.mrb[0].mxu0
  %v754 = vpop.f32.mrb[0].mxu0
  %v755 = vadd.f32 0.0, %v754
  %v756 = vpop.f32.mrb[0].mxu0
  %757 = vmatprep.mubr.bf16.mxu0 0
  %758 = vmatmul.mubr.bf16.gmra.mrb[0].mxu0 %v471
  %v759 = vpop.f32.mrb[0].mxu0
  %v760 = vadd.f32 0.0, %v759
  %v761 = vpop.f32.mrb[0].mxu0
  %v762 = vpop.f32.mrb[0].mxu0
  %v763 = vadd.f32 0.0, %v762
  %v764 = vpop.f32.mrb[0].mxu0
  %765 = vdwg.mxu0
  %v766 = vadd.f32 %v87, %v512
  %v767 = vadd.f32 %v88, %v515
  %v768 = vadd.f32 %v89, %v520
  %v769 = vadd.f32 %v90, %v523
  %v770 = vadd.f32 %v91, %v528
  %v771 = vadd.f32 %v92, %v531
  %v772 = vadd.f32 %v93, %v536
  %v773 = vadd.f32 %v94, %v539
  %v774 = vadd.f32 %v95, %v544
  %v775 = vadd.f32 %v96, %v547
  %v776 = vadd.f32 %v97, %v552
  %v777 = vadd.f32 %v98, %v555
  %v778 = vadd.f32 %v99, %v560
  %v779 = vadd.f32 %v100, %v563
  %v780 = vadd.f32 %v101, %v568
  %v781 = vadd.f32 %v102, %v571
  %v782 = vadd.f32 %v103, %v576
  %v783 = vadd.f32 %v104, %v579
  %v784 = vadd.f32 %v105, %v584
  %v785 = vadd.f32 %v106, %v587
  %v786 = vadd.f32 %v107, %v592
  %v787 = vadd.f32 %v108, %v595
  %v788 = vadd.f32 %v109, %v600
  %v789 = vadd.f32 %v110, %v603
  %v790 = vadd.f32 %v111, %v608
  %v791 = vadd.f32 %v112, %v611
  %v792 = vadd.f32 %v113, %v616
  %v793 = vadd.f32 %v114, %v619
  %v794 = vadd.f32 %v115, %v624
  %v795 = vadd.f32 %v116, %v627
  %v796 = vadd.f32 %v117, %v632
  %v797 = vadd.f32 %v118, %v635
  %v798 = vadd.f32 %v119, %v640
  %v799 = vadd.f32 %v120, %v643
  %v800 = vadd.f32 %v121, %v648
  %v801 = vadd.f32 %v122, %v651
  %v802 = vadd.f32 %v123, %v656
  %v803 = vadd.f32 %v124, %v659
  %v804 = vadd.f32 %v125, %v664
  %v805 = vadd.f32 %v126, %v667
  %v806 = vadd.f32 %v127, %v672
  %v807 = vadd.f32 %v128, %v675
  %v808 = vadd.f32 %v129, %v680
  %v809 = vadd.f32 %v130, %v683
  %v810 = vadd.f32 %v131, %v688
  %v811 = vadd.f32 %v132, %v691
  %v812 = vadd.f32 %v133, %v696
  %v813 = vadd.f32 %v134, %v699
  %v814 = vadd.f32 %v135, %v704
  %v815 = vadd.f32 %v136, %v707
  %v816 = vadd.f32 %v137, %v712
  %v817 = vadd.f32 %v138, %v715
  %v818 = vadd.f32 %v139, %v720
  %v819 = vadd.f32 %v140, %v723
  %v820 = vadd.f32 %v141, %v728
  %v821 = vadd.f32 %v142, %v731
  %v822 = vadd.f32 %v143, %v736
  %v823 = vadd.f32 %v144, %v739
  %v824 = vadd.f32 %v145, %v744
  %v825 = vadd.f32 %v146, %v747
  %v826 = vadd.f32 %v147, %v752
  %v827 = vadd.f32 %v148, %v755
  %v828 = vadd.f32 %v149, %v760
  %v829 = vadd.f32 %v150, %v763
  %vm830 = vcmask 130048
  %831 = vst.msk [vmem:[%s4] sm:$0xff] %vm830, %v766
  %832 = vst.msk [vmem:[%s4 + $0x8] sm:$0xff] %vm830, %v767
  %833 = vst.msk [vmem:[%s4 + $0x10] sm:$0xff] %vm830, %v768
  %834 = vst.msk [vmem:[%s4 + $0x18] sm:$0xff] %vm830, %v769
  %835 = vst.msk [vmem:[%s4 + $0x20] sm:$0xff] %vm830, %v770
  %836 = vst.msk [vmem:[%s4 + $0x28] sm:$0xff] %vm830, %v771
  %837 = vst.msk [vmem:[%s4 + $0x30] sm:$0xff] %vm830, %v772
  %838 = vst.msk [vmem:[%s4 + $0x38] sm:$0xff] %vm830, %v773
  %839 = vst.msk [vmem:[%s4 + $0x40] sm:$0xff] %vm830, %v774
  %840 = vst.msk [vmem:[%s4 + $0x48] sm:$0xff] %vm830, %v775
  %841 = vst.msk [vmem:[%s4 + $0x50] sm:$0xff] %vm830, %v776
  %842 = vst.msk [vmem:[%s4 + $0x58] sm:$0xff] %vm830, %v777
  %843 = vst.msk [vmem:[%s4 + $0x60] sm:$0xff] %vm830, %v778
  %844 = vst.msk [vmem:[%s4 + $0x68] sm:$0xff] %vm830, %v779
  %845 = vst.msk [vmem:[%s4 + $0x70] sm:$0xff] %vm830, %v780
  %846 = vst.msk [vmem:[%s4 + $0x78] sm:$0xff] %vm830, %v781
  %847 = vst.msk [vmem:[%s4 + $0x80] sm:$0xff] %vm830, %v782
  %848 = vst.msk [vmem:[%s4 + $0x88] sm:$0xff] %vm830, %v783
  %849 = vst.msk [vmem:[%s4 + $0x90] sm:$0xff] %vm830, %v784
  %850 = vst.msk [vmem:[%s4 + $0x98] sm:$0xff] %vm830, %v785
  %851 = vst.msk [vmem:[%s4 + $0xa0] sm:$0xff] %vm830, %v786
  %852 = vst.msk [vmem:[%s4 + $0xa8] sm:$0xff] %vm830, %v787
  %853 = vst.msk [vmem:[%s4 + $0xb0] sm:$0xff] %vm830, %v788
  %854 = vst.msk [vmem:[%s4 + $0xb8] sm:$0xff] %vm830, %v789
  %855 = vst.msk [vmem:[%s4 + $0xc0] sm:$0xff] %vm830, %v790
  %856 = vst.msk [vmem:[%s4 + $0xc8] sm:$0xff] %vm830, %v791
  %857 = vst.msk [vmem:[%s4 + $0xd0] sm:$0xff] %vm830, %v792
  %858 = vst.msk [vmem:[%s4 + $0xd8] sm:$0xff] %vm830, %v793
  %859 = vst.msk [vmem:[%s4 + $0xe0] sm:$0xff] %vm830, %v794
  %860 = vst.msk [vmem:[%s4 + $0xe8] sm:$0xff] %vm830, %v795
  %861 = vst.msk [vmem:[%s4 + $0xf0] sm:$0xff] %vm830, %v796
  %862 = vst.msk [vmem:[%s4 + $0xf8] sm:$0xff] %vm830, %v797
  %863 = vst.msk [vmem:[%s4 + $0x100] sm:$0xff] %vm830, %v798
  %864 = vst.msk [vmem:[%s4 + $0x108] sm:$0xff] %vm830, %v799
  %865 = vst.msk [vmem:[%s4 + $0x110] sm:$0xff] %vm830, %v800
  %866 = vst.msk [vmem:[%s4 + $0x118] sm:$0xff] %vm830, %v801
  %867 = vst.msk [vmem:[%s4 + $0x120] sm:$0xff] %vm830, %v802
  %868 = vst.msk [vmem:[%s4 + $0x128] sm:$0xff] %vm830, %v803
  %869 = vst.msk [vmem:[%s4 + $0x130] sm:$0xff] %vm830, %v804
  %870 = vst.msk [vmem:[%s4 + $0x138] sm:$0xff] %vm830, %v805
  %871 = vst.msk [vmem:[%s4 + $0x140] sm:$0xff] %vm830, %v806
  %872 = vst.msk [vmem:[%s4 + $0x148] sm:$0xff] %vm830, %v807
  %873 = vst.msk [vmem:[%s4 + $0x150] sm:$0xff] %vm830, %v808
  %874 = vst.msk [vmem:[%s4 + $0x158] sm:$0xff] %vm830, %v809
  %875 = vst.msk [vmem:[%s4 + $0x160] sm:$0xff] %vm830, %v810
  %876 = vst.msk [vmem:[%s4 + $0x168] sm:$0xff] %vm830, %v811
  %877 = vst.msk [vmem:[%s4 + $0x170] sm:$0xff] %vm830, %v812
  %878 = vst.msk [vmem:[%s4 + $0x178] sm:$0xff] %vm830, %v813
  %879 = vst.msk [vmem:[%s4 + $0x180] sm:$0xff] %vm830, %v814
  %880 = vst.msk [vmem:[%s4 + $0x188] sm:$0xff] %vm830, %v815
  %881 = vst.msk [vmem:[%s4 + $0x190] sm:$0xff] %vm830, %v816
  %882 = vst.msk [vmem:[%s4 + $0x198] sm:$0xff] %vm830, %v817
  %883 = vst.msk [vmem:[%s4 + $0x1a0] sm:$0xff] %vm830, %v818
  %884 = vst.msk [vmem:[%s4 + $0x1a8] sm:$0xff] %vm830, %v819
  %885 = vst.msk [vmem:[%s4 + $0x1b0] sm:$0xff] %vm830, %v820
  %886 = vst.msk [vmem:[%s4 + $0x1b8] sm:$0xff] %vm830, %v821
  %887 = vst.msk [vmem:[%s4 + $0x1c0] sm:$0xff] %vm830, %v822
  %888 = vst.msk [vmem:[%s4 + $0x1c8] sm:$0xff] %vm830, %v823
  %889 = vst.msk [vmem:[%s4 + $0x1d0] sm:$0xff] %vm830, %v824
  %890 = vst.msk [vmem:[%s4 + $0x1d8] sm:$0xff] %vm830, %v825
  %891 = vst.msk [vmem:[%s4 + $0x1e0] sm:$0xff] %vm830, %v826
  %892 = vst.msk [vmem:[%s4 + $0x1e8] sm:$0xff] %vm830, %v827
  %893 = vst.msk [vmem:[%s4 + $0x1f0] sm:$0xff] %vm830, %v828
  %894 = vst.msk [vmem:[%s4 + $0x1f8] sm:$0xff] %vm830, %v829
  // Predicated region
  $region22: #{bottleneck1_forward.5} parent=0 // pred_check
    %p895 = pneg %p18
  $region23: #{bottleneck1_forward.5} parent=0 // pred_check_branch
    %897 = sbr.rel (%p895) target = $region25
  $region24: #{bottleneck1_forward.5} parent=0 // pred_region
    %v898 = vld [vmem:[%s4] sm:$0xff]
    %v899 = vld [vmem:[%s4 + $0x8] sm:$0xff]
    %v900 = vld [vmem:[%s4 + $0x10] sm:$0xff]
    %v901 = vld [vmem:[%s4 + $0x18] sm:$0xff]
    %v902 = vld [vmem:[%s4 + $0x20] sm:$0xff]
    %v903 = vld [vmem:[%s4 + $0x28] sm:$0xff]
    %v904 = vld [vmem:[%s4 + $0x30] sm:$0xff]
    %v905 = vld [vmem:[%s4 + $0x38] sm:$0xff]
    %v906 = vld [vmem:[%s4 + $0x40] sm:$0xff]
    %v907 = vld [vmem:[%s4 + $0x48] sm:$0xff]
    %v908 = vld [vmem:[%s4 + $0x50] sm:$0xff]
    %v909 = vld [vmem:[%s4 + $0x58] sm:$0xff]
    %v910 = vld [vmem:[%s4 + $0x60] sm:$0xff]
    %v911 = vld [vmem:[%s4 + $0x68] sm:$0xff]
    %v912 = vld [vmem:[%s4 + $0x70] sm:$0xff]
    %v913 = vld [vmem:[%s4 + $0x78] sm:$0xff]
    %v914 = vld [vmem:[%s4 + $0x80] sm:$0xff]
    %v915 = vld [vmem:[%s4 + $0x88] sm:$0xff]
    %v916 = vld [vmem:[%s4 + $0x90] sm:$0xff]
    %v917 = vld [vmem:[%s4 + $0x98] sm:$0xff]
    %v918 = vld [vmem:[%s4 + $0xa0] sm:$0xff]
    %v919 = vld [vmem:[%s4 + $0xa8] sm:$0xff]
    %v920 = vld [vmem:[%s4 + $0xb0] sm:$0xff]
    %v921 = vld [vmem:[%s4 + $0xb8] sm:$0xff]
    %v922 = vld [vmem:[%s4 + $0xc0] sm:$0xff]
    %v923 = vld [vmem:[%s4 + $0xc8] sm:$0xff]
    %v924 = vld [vmem:[%s4 + $0xd0] sm:$0xff]
    %v925 = vld [vmem:[%s4 + $0xd8] sm:$0xff]
    %v926 = vld [vmem:[%s4 + $0xe0] sm:$0xff]
    %v927 = vld [vmem:[%s4 + $0xe8] sm:$0xff]
    %v928 = vld [vmem:[%s4 + $0xf0] sm:$0xff]
    %v929 = vld [vmem:[%s4 + $0xf8] sm:$0xff]
    %v930 = vld [vmem:[%s4 + $0x100] sm:$0xff]
    %v931 = vld [vmem:[%s4 + $0x108] sm:$0xff]
    %v932 = vld [vmem:[%s4 + $0x110] sm:$0xff]
    %v933 = vld [vmem:[%s4 + $0x118] sm:$0xff]
    %v934 = vld [vmem:[%s4 + $0x120] sm:$0xff]
    %v935 = vld [vmem:[%s4 + $0x128] sm:$0xff]
    %v936 = vld [vmem:[%s4 + $0x130] sm:$0xff]
    %v937 = vld [vmem:[%s4 + $0x138] sm:$0xff]
    %v938 = vld [vmem:[%s4 + $0x140] sm:$0xff]
    %v939 = vld [vmem:[%s4 + $0x148] sm:$0xff]
    %v940 = vld [vmem:[%s4 + $0x150] sm:$0xff]
    %v941 = vld [vmem:[%s4 + $0x158] sm:$0xff]
    %v942 = vld [vmem:[%s4 + $0x160] sm:$0xff]
    %v943 = vld [vmem:[%s4 + $0x168] sm:$0xff]
    %v944 = vld [vmem:[%s4 + $0x170] sm:$0xff]
    %v945 = vld [vmem:[%s4 + $0x178] sm:$0xff]
    %v946 = vld [vmem:[%s4 + $0x180] sm:$0xff]
    %v947 = vld [vmem:[%s4 + $0x188] sm:$0xff]
    %v948 = vld [vmem:[%s4 + $0x190] sm:$0xff]
    %v949 = vld [vmem:[%s4 + $0x198] sm:$0xff]
    %v950 = vld [vmem:[%s4 + $0x1a0] sm:$0xff]
    %v951 = vld [vmem:[%s4 + $0x1a8] sm:$0xff]
    %v952 = vld [vmem:[%s4 + $0x1b0] sm:$0xff]
    %v953 = vld [vmem:[%s4 + $0x1b8] sm:$0xff]
    %v954 = vld [vmem:[%s4 + $0x1c0] sm:$0xff]
    %v955 = vld [vmem:[%s4 + $0x1c8] sm:$0xff]
    %v956 = vld [vmem:[%s4 + $0x1d0] sm:$0xff]
    %v957 = vld [vmem:[%s4 + $0x1d8] sm:$0xff]
    %v958 = vld [vmem:[%s4 + $0x1e0] sm:$0xff]
    %v959 = vld [vmem:[%s4 + $0x1e8] sm:$0xff]
    %v960 = vld [vmem:[%s4 + $0x1f0] sm:$0xff]
    %v961 = vld [vmem:[%s4 + $0x1f8] sm:$0xff]
    %v962 = vld [vmem:[%s2] sm:$0x1]
    %v964 = vlaneseq
    %v965 = vshrl.u32 %v964, 7
    %v966 = vsub.s32 0, %v965
    %v967 = vrot.slane %v962, %v966
    %v969 = vadd.f32 %v898, %v967
    %v970 = vadd.f32 %v899, %v967
    %v971 = vadd.f32 %v900, %v967
    %v972 = vadd.f32 %v901, %v967
    %v973 = vadd.f32 %v902, %v967
    %v974 = vadd.f32 %v903, %v967
    %v975 = vadd.f32 %v904, %v967
    %v976 = vadd.f32 %v905, %v967
    %v977 = vadd.f32 %v906, %v967
    %v978 = vadd.f32 %v907, %v967
    %v979 = vadd.f32 %v908, %v967
    %v980 = vadd.f32 %v909, %v967
    %v981 = vadd.f32 %v910, %v967
    %v982 = vadd.f32 %v911, %v967
    %v983 = vadd.f32 %v912, %v967
    %v984 = vadd.f32 %v913, %v967
    %v985 = vadd.f32 %v914, %v967
    %v986 = vadd.f32 %v915, %v967
    %v987 = vadd.f32 %v916, %v967
    %v988 = vadd.f32 %v917, %v967
    %v989 = vadd.f32 %v918, %v967
    %v990 = vadd.f32 %v919, %v967
    %v991 = vadd.f32 %v920, %v967
    %v992 = vadd.f32 %v921, %v967
    %v993 = vadd.f32 %v922, %v967
    %v994 = vadd.f32 %v923, %v967
    %v995 = vadd.f32 %v924, %v967
    %v996 = vadd.f32 %v925, %v967
    %v997 = vadd.f32 %v926, %v967
    %v998 = vadd.f32 %v927, %v967
    %v999 = vadd.f32 %v928, %v967
    %v1000 = vadd.f32 %v929, %v967
    %v1001 = vadd.f32 %v930, %v967
    %v1002 = vadd.f32 %v931, %v967
    %v1003 = vadd.f32 %v932, %v967
    %v1004 = vadd.f32 %v933, %v967
    %v1005 = vadd.f32 %v934, %v967
    %v1006 = vadd.f32 %v935, %v967
    %v1007 = vadd.f32 %v936, %v967
    %v1008 = vadd.f32 %v937, %v967
    %v1009 = vadd.f32 %v938, %v967
    %v1010 = vadd.f32 %v939, %v967
    %v1011 = vadd.f32 %v940, %v967
    %v1012 = vadd.f32 %v941, %v967
    %v1013 = vadd.f32 %v942, %v967
    %v1014 = vadd.f32 %v943, %v967
    %v1015 = vadd.f32 %v944, %v967
    %v1016 = vadd.f32 %v945, %v967
    %v1017 = vadd.f32 %v946, %v967
    %v1018 = vadd.f32 %v947, %v967
    %v1019 = vadd.f32 %v948, %v967
    %v1020 = vadd.f32 %v949, %v967
    %v1021 = vadd.f32 %v950, %v967
    %v1022 = vadd.f32 %v951, %v967
    %v1023 = vadd.f32 %v952, %v967
    %v1024 = vadd.f32 %v953, %v967
    %v1025 = vadd.f32 %v954, %v967
    %v1026 = vadd.f32 %v955, %v967
    %v1027 = vadd.f32 %v956, %v967
    %v1028 = vadd.f32 %v957, %v967
    %v1029 = vadd.f32 %v958, %v967
    %v1030 = vadd.f32 %v959, %v967
    %v1031 = vadd.f32 %v960, %v967
    %v1032 = vadd.f32 %v961, %v967
    %v1033 = vld [vmem:[%s3] sm:$0xff]
    %v1034 = vld [vmem:[%s3 + $0x8] sm:$0xff]
    %v1035 = vld [vmem:[%s3 + $0x10] sm:$0xff]
    %v1036 = vld [vmem:[%s3 + $0x18] sm:$0xff]
    %v1037 = vld [vmem:[%s3 + $0x20] sm:$0xff]
    %v1038 = vld [vmem:[%s3 + $0x28] sm:$0xff]
    %v1039 = vld [vmem:[%s3 + $0x30] sm:$0xff]
    %v1040 = vld [vmem:[%s3 + $0x38] sm:$0xff]
    %v1041 = vld [vmem:[%s3 + $0x40] sm:$0xff]
    %v1042 = vld [vmem:[%s3 + $0x48] sm:$0xff]
    %v1043 = vld [vmem:[%s3 + $0x50] sm:$0xff]
    %v1044 = vld [vmem:[%s3 + $0x58] sm:$0xff]
    %v1045 = vld [vmem:[%s3 + $0x60] sm:$0xff]
    %v1046 = vld [vmem:[%s3 + $0x68] sm:$0xff]
    %v1047 = vld [vmem:[%s3 + $0x70] sm:$0xff]
    %v1048 = vld [vmem:[%s3 + $0x78] sm:$0xff]
    %v1049 = vld [vmem:[%s3 + $0x80] sm:$0xff]
    %v1050 = vld [vmem:[%s3 + $0x88] sm:$0xff]
    %v1051 = vld [vmem:[%s3 + $0x90] sm:$0xff]
    %v1052 = vld [vmem:[%s3 + $0x98] sm:$0xff]
    %v1053 = vld [vmem:[%s3 + $0xa0] sm:$0xff]
    %v1054 = vld [vmem:[%s3 + $0xa8] sm:$0xff]
    %v1055 = vld [vmem:[%s3 + $0xb0] sm:$0xff]
    %v1056 = vld [vmem:[%s3 + $0xb8] sm:$0xff]
    %v1057 = vld [vmem:[%s3 + $0xc0] sm:$0xff]
    %v1058 = vld [vmem:[%s3 + $0xc8] sm:$0xff]
    %v1059 = vld [vmem:[%s3 + $0xd0] sm:$0xff]
    %v1060 = vld [vmem:[%s3 + $0xd8] sm:$0xff]
    %v1061 = vld [vmem:[%s3 + $0xe0] sm:$0xff]
    %v1062 = vld [vmem:[%s3 + $0xe8] sm:$0xff]
    %v1063 = vld [vmem:[%s3 + $0xf0] sm:$0xff]
    %v1064 = vld [vmem:[%s3 + $0xf8] sm:$0xff]
    %v1065 = vld [vmem:[%s3 + $0x100] sm:$0xff]
    %v1066 = vld [vmem:[%s3 + $0x108] sm:$0xff]
    %v1067 = vld [vmem:[%s3 + $0x110] sm:$0xff]
    %v1068 = vld [vmem:[%s3 + $0x118] sm:$0xff]
    %v1069 = vld [vmem:[%s3 + $0x120] sm:$0xff]
    %v1070 = vld [vmem:[%s3 + $0x128] sm:$0xff]
    %v1071 = vld [vmem:[%s3 + $0x130] sm:$0xff]
    %v1072 = vld [vmem:[%s3 + $0x138] sm:$0xff]
    %v1073 = vld [vmem:[%s3 + $0x140] sm:$0xff]
    %v1074 = vld [vmem:[%s3 + $0x148] sm:$0xff]
    %v1075 = vld [vmem:[%s3 + $0x150] sm:$0xff]
    %v1076 = vld [vmem:[%s3 + $0x158] sm:$0xff]
    %v1077 = vld [vmem:[%s3 + $0x160] sm:$0xff]
    %v1078 = vld [vmem:[%s3 + $0x168] sm:$0xff]
    %v1079 = vld [vmem:[%s3 + $0x170] sm:$0xff]
    %v1080 = vld [vmem:[%s3 + $0x178] sm:$0xff]
    %v1081 = vld [vmem:[%s3 + $0x180] sm:$0xff]
    %v1082 = vld [vmem:[%s3 + $0x188] sm:$0xff]
    %v1083 = vld [vmem:[%s3 + $0x190] sm:$0xff]
    %v1084 = vld [vmem:[%s3 + $0x198] sm:$0xff]
    %v1085 = vld [vmem:[%s3 + $0x1a0] sm:$0xff]
    %v1086 = vld [vmem:[%s3 + $0x1a8] sm:$0xff]
    %v1087 = vld [vmem:[%s3 + $0x1b0] sm:$0xff]
    %v1088 = vld [vmem:[%s3 + $0x1b8] sm:$0xff]
    %v1089 = vld [vmem:[%s3 + $0x1c0] sm:$0xff]
    %v1090 = vld [vmem:[%s3 + $0x1c8] sm:$0xff]
    %v1091 = vld [vmem:[%s3 + $0x1d0] sm:$0xff]
    %v1092 = vld [vmem:[%s3 + $0x1d8] sm:$0xff]
    %v1093 = vld [vmem:[%s3 + $0x1e0] sm:$0xff]
    %v1094 = vld [vmem:[%s3 + $0x1e8] sm:$0xff]
    %v1095 = vld [vmem:[%s3 + $0x1f0] sm:$0xff]
    %v1096 = vld [vmem:[%s3 + $0x1f8] sm:$0xff]
    %v1097 = vadd.f32 %v969, %v1033
    %v1098 = vadd.f32 %v970, %v1034
    %v1099 = vadd.f32 %v971, %v1035
    %v1100 = vadd.f32 %v972, %v1036
    %v1101 = vadd.f32 %v973, %v1037
    %v1102 = vadd.f32 %v974, %v1038
    %v1103 = vadd.f32 %v975, %v1039
    %v1104 = vadd.f32 %v976, %v1040
    %v1105 = vadd.f32 %v977, %v1041
    %v1106 = vadd.f32 %v978, %v1042
    %v1107 = vadd.f32 %v979, %v1043
    %v1108 = vadd.f32 %v980, %v1044
    %v1109 = vadd.f32 %v981, %v1045
    %v1110 = vadd.f32 %v982, %v1046
    %v1111 = vadd.f32 %v983, %v1047
    %v1112 = vadd.f32 %v984, %v1048
    %v1113 = vadd.f32 %v985, %v1049
    %v1114 = vadd.f32 %v986, %v1050
    %v1115 = vadd.f32 %v987, %v1051
    %v1116 = vadd.f32 %v988, %v1052
    %v1117 = vadd.f32 %v989, %v1053
    %v1118 = vadd.f32 %v990, %v1054
    %v1119 = vadd.f32 %v991, %v1055
    %v1120 = vadd.f32 %v992, %v1056
    %v1121 = vadd.f32 %v993, %v1057
    %v1122 = vadd.f32 %v994, %v1058
    %v1123 = vadd.f32 %v995, %v1059
    %v1124 = vadd.f32 %v996, %v1060
    %v1125 = vadd.f32 %v997, %v1061
    %v1126 = vadd.f32 %v998, %v1062
    %v1127 = vadd.f32 %v999, %v1063
    %v1128 = vadd.f32 %v1000, %v1064
    %v1129 = vadd.f32 %v1001, %v1065
    %v1130 = vadd.f32 %v1002, %v1066
    %v1131 = vadd.f32 %v1003, %v1067
    %v1132 = vadd.f32 %v1004, %v1068
    %v1133 = vadd.f32 %v1005, %v1069
    %v1134 = vadd.f32 %v1006, %v1070
    %v1135 = vadd.f32 %v1007, %v1071
    %v1136 = vadd.f32 %v1008, %v1072
    %v1137 = vadd.f32 %v1009, %v1073
    %v1138 = vadd.f32 %v1010, %v1074
    %v1139 = vadd.f32 %v1011, %v1075
    %v1140 = vadd.f32 %v1012, %v1076
    %v1141 = vadd.f32 %v1013, %v1077
    %v1142 = vadd.f32 %v1014, %v1078
    %v1143 = vadd.f32 %v1015, %v1079
    %v1144 = vadd.f32 %v1016, %v1080
    %v1145 = vadd.f32 %v1017, %v1081
    %v1146 = vadd.f32 %v1018, %v1082
    %v1147 = vadd.f32 %v1019, %v1083
    %v1148 = vadd.f32 %v1020, %v1084
    %v1149 = vadd.f32 %v1021, %v1085
    %v1150 = vadd.f32 %v1022, %v1086
    %v1151 = vadd.f32 %v1023, %v1087
    %v1152 = vadd.f32 %v1024, %v1088
    %v1153 = vadd.f32 %v1025, %v1089
    %v1154 = vadd.f32 %v1026, %v1090
    %v1155 = vadd.f32 %v1027, %v1091
    %v1156 = vadd.f32 %v1028, %v1092
    %v1157 = vadd.f32 %v1029, %v1093
    %v1158 = vadd.f32 %v1030, %v1094
    %v1159 = vadd.f32 %v1031, %v1095
    %v1160 = vadd.f32 %v1032, %v1096
    %v1161 = vmax.f32 %v1097, 0.0
    %v1162 = vmax.f32 %v1098, 0.0
    %v1163 = vmax.f32 %v1099, 0.0
    %v1164 = vmax.f32 %v1100, 0.0
    %v1165 = vmax.f32 %v1101, 0.0
    %v1166 = vmax.f32 %v1102, 0.0
    %v1167 = vmax.f32 %v1103, 0.0
    %v1168 = vmax.f32 %v1104, 0.0
    %v1169 = vmax.f32 %v1105, 0.0
    %v1170 = vmax.f32 %v1106, 0.0
    %v1171 = vmax.f32 %v1107, 0.0
    %v1172 = vmax.f32 %v1108, 0.0
    %v1173 = vmax.f32 %v1109, 0.0
    %v1174 = vmax.f32 %v1110, 0.0
    %v1175 = vmax.f32 %v1111, 0.0
    %v1176 = vmax.f32 %v1112, 0.0
    %v1177 = vmax.f32 %v1113, 0.0
    %v1178 = vmax.f32 %v1114, 0.0
    %v1179 = vmax.f32 %v1115, 0.0
    %v1180 = vmax.f32 %v1116, 0.0
    %v1181 = vmax.f32 %v1117, 0.0
    %v1182 = vmax.f32 %v1118, 0.0
    %v1183 = vmax.f32 %v1119, 0.0
    %v1184 = vmax.f32 %v1120, 0.0
    %v1185 = vmax.f32 %v1121, 0.0
    %v1186 = vmax.f32 %v1122, 0.0
    %v1187 = vmax.f32 %v1123, 0.0
    %v1188 = vmax.f32 %v1124, 0.0
    %v1189 = vmax.f32 %v1125, 0.0
    %v1190 = vmax.f32 %v1126, 0.0
    %v1191 = vmax.f32 %v1127, 0.0
    %v1192 = vmax.f32 %v1128, 0.0
    %v1193 = vmax.f32 %v1129, 0.0
    %v1194 = vmax.f32 %v1130, 0.0
    %v1195 = vmax.f32 %v1131, 0.0
    %v1196 = vmax.f32 %v1132, 0.0
    %v1197 = vmax.f32 %v1133, 0.0
    %v1198 = vmax.f32 %v1134, 0.0
    %v1199 = vmax.f32 %v1135, 0.0
    %v1200 = vmax.f32 %v1136, 0.0
    %v1201 = vmax.f32 %v1137, 0.0
    %v1202 = vmax.f32 %v1138, 0.0
    %v1203 = vmax.f32 %v1139, 0.0
    %v1204 = vmax.f32 %v1140, 0.0
    %v1205 = vmax.f32 %v1141, 0.0
    %v1206 = vmax.f32 %v1142, 0.0
    %v1207 = vmax.f32 %v1143, 0.0
    %v1208 = vmax.f32 %v1144, 0.0
    %v1209 = vmax.f32 %v1145, 0.0
    %v1210 = vmax.f32 %v1146, 0.0
    %v1211 = vmax.f32 %v1147, 0.0
    %v1212 = vmax.f32 %v1148, 0.0
    %v1213 = vmax.f32 %v1149, 0.0
    %v1214 = vmax.f32 %v1150, 0.0
    %v1215 = vmax.f32 %v1151, 0.0
    %v1216 = vmax.f32 %v1152, 0.0
    %v1217 = vmax.f32 %v1153, 0.0
    %v1218 = vmax.f32 %v1154, 0.0
    %v1219 = vmax.f32 %v1155, 0.0
    %v1220 = vmax.f32 %v1156, 0.0
    %v1221 = vmax.f32 %v1157, 0.0
    %v1222 = vmax.f32 %v1158, 0.0
    %v1223 = vmax.f32 %v1159, 0.0
    %v1224 = vmax.f32 %v1160, 0.0
    %1225 = vst.msk [vmem:[%s4] sm:$0xff] %vm830, %v1161
    %1226 = vst.msk [vmem:[%s4 + $0x8] sm:$0xff] %vm830, %v1162
    %1227 = vst.msk [vmem:[%s4 + $0x10] sm:$0xff] %vm830, %v1163
    %1228 = vst.msk [vmem:[%s4 + $0x18] sm:$0xff] %vm830, %v1164
    %1229 = vst.msk [vmem:[%s4 + $0x20] sm:$0xff] %vm830, %v1165
    %1230 = vst.msk [vmem:[%s4 + $0x28] sm:$0xff] %vm830, %v1166
    %1231 = vst.msk [vmem:[%s4 + $0x30] sm:$0xff] %vm830, %v1167
    %1232 = vst.msk [vmem:[%s4 + $0x38] sm:$0xff] %vm830, %v1168
    %1233 = vst.msk [vmem:[%s4 + $0x40] sm:$0xff] %vm830, %v1169
    %1234 = vst.msk [vmem:[%s4 + $0x48] sm:$0xff] %vm830, %v1170
    %1235 = vst.msk [vmem:[%s4 + $0x50] sm:$0xff] %vm830, %v1171
    %1236 = vst.msk [vmem:[%s4 + $0x58] sm:$0xff] %vm830, %v1172
    %1237 = vst.msk [vmem:[%s4 + $0x60] sm:$0xff] %vm830, %v1173
    %1238 = vst.msk [vmem:[%s4 + $0x68] sm:$0xff] %vm830, %v1174
    %1239 = vst.msk [vmem:[%s4 + $0x70] sm:$0xff] %vm830, %v1175
    %1240 = vst.msk [vmem:[%s4 + $0x78] sm:$0xff] %vm830, %v1176
    %1241 = vst.msk [vmem:[%s4 + $0x80] sm:$0xff] %vm830, %v1177
    %1242 = vst.msk [vmem:[%s4 + $0x88] sm:$0xff] %vm830, %v1178
    %1243 = vst.msk [vmem:[%s4 + $0x90] sm:$0xff] %vm830, %v1179
    %1244 = vst.msk [vmem:[%s4 + $0x98] sm:$0xff] %vm830, %v1180
    %1245 = vst.msk [vmem:[%s4 + $0xa0] sm:$0xff] %vm830, %v1181
    %1246 = vst.msk [vmem:[%s4 + $0xa8] sm:$0xff] %vm830, %v1182
    %1247 = vst.msk [vmem:[%s4 + $0xb0] sm:$0xff] %vm830, %v1183
    %1248 = vst.msk [vmem:[%s4 + $0xb8] sm:$0xff] %vm830, %v1184
    %1249 = vst.msk [vmem:[%s4 + $0xc0] sm:$0xff] %vm830, %v1185
    %1250 = vst.msk [vmem:[%s4 + $0xc8] sm:$0xff] %vm830, %v1186
    %1251 = vst.msk [vmem:[%s4 + $0xd0] sm:$0xff] %vm830, %v1187
    %1252 = vst.msk [vmem:[%s4 + $0xd8] sm:$0xff] %vm830, %v1188
    %1253 = vst.msk [vmem:[%s4 + $0xe0] sm:$0xff] %vm830, %v1189
    %1254 = vst.msk [vmem:[%s4 + $0xe8] sm:$0xff] %vm830, %v1190
    %1255 = vst.msk [vmem:[%s4 + $0xf0] sm:$0xff] %vm830, %v1191
    %1256 = vst.msk [vmem:[%s4 + $0xf8] sm:$0xff] %vm830, %v1192
    %1257 = vst.msk [vmem:[%s4 + $0x100] sm:$0xff] %vm830, %v1193
    %1258 = vst.msk [vmem:[%s4 + $0x108] sm:$0xff] %vm830, %v1194
    %1259 = vst.msk [vmem:[%s4 + $0x110] sm:$0xff] %vm830, %v1195
    %1260 = vst.msk [vmem:[%s4 + $0x118] sm:$0xff] %vm830, %v1196
    %1261 = vst.msk [vmem:[%s4 + $0x120] sm:$0xff] %vm830, %v1197
    %1262 = vst.msk [vmem:[%s4 + $0x128] sm:$0xff] %vm830, %v1198
    %1263 = vst.msk [vmem:[%s4 + $0x130] sm:$0xff] %vm830, %v1199
    %1264 = vst.msk [vmem:[%s4 + $0x138] sm:$0xff] %vm830, %v1200
    %1265 = vst.msk [vmem:[%s4 + $0x140] sm:$0xff] %vm830, %v1201
    %1266 = vst.msk [vmem:[%s4 + $0x148] sm:$0xff] %vm830, %v1202
    %1267 = vst.msk [vmem:[%s4 + $0x150] sm:$0xff] %vm830, %v1203
    %1268 = vst.msk [vmem:[%s4 + $0x158] sm:$0xff] %vm830, %v1204
    %1269 = vst.msk [vmem:[%s4 + $0x160] sm:$0xff] %vm830, %v1205
    %1270 = vst.msk [vmem:[%s4 + $0x168] sm:$0xff] %vm830, %v1206
    %1271 = vst.msk [vmem:[%s4 + $0x170] sm:$0xff] %vm830, %v1207
    %1272 = vst.msk [vmem:[%s4 + $0x178] sm:$0xff] %vm830, %v1208
    %1273 = vst.msk [vmem:[%s4 + $0x180] sm:$0xff] %vm830, %v1209
    %1274 = vst.msk [vmem:[%s4 + $0x188] sm:$0xff] %vm830, %v1210
    %1275 = vst.msk [vmem:[%s4 + $0x190] sm:$0xff] %vm830, %v1211
    %1276 = vst.msk [vmem:[%s4 + $0x198] sm:$0xff] %vm830, %v1212
    %1277 = vst.msk [vmem:[%s4 + $0x1a0] sm:$0xff] %vm830, %v1213
    %1278 = vst.msk [vmem:[%s4 + $0x1a8] sm:$0xff] %vm830, %v1214
    %1279 = vst.msk [vmem:[%s4 + $0x1b0] sm:$0xff] %vm830, %v1215
    %1280 = vst.msk [vmem:[%s4 + $0x1b8] sm:$0xff] %vm830, %v1216
    %1281 = vst.msk [vmem:[%s4 + $0x1c0] sm:$0xff] %vm830, %v1217
    %1282 = vst.msk [vmem:[%s4 + $0x1c8] sm:$0xff] %vm830, %v1218
    %1283 = vst.msk [vmem:[%s4 + $0x1d0] sm:$0xff] %vm830, %v1219
    %1284 = vst.msk [vmem:[%s4 + $0x1d8] sm:$0xff] %vm830, %v1220
    %1285 = vst.msk [vmem:[%s4 + $0x1e0] sm:$0xff] %vm830, %v1221
    %1286 = vst.msk [vmem:[%s4 + $0x1e8] sm:$0xff] %vm830, %v1222
    %1287 = vst.msk [vmem:[%s4 + $0x1f0] sm:$0xff] %vm830, %v1223
    %1288 = vst.msk [vmem:[%s4 + $0x1f8] sm:$0xff] %vm830, %v1224
  $region25: #{bottleneck1_forward.5} parent=0 // pred_fallthru
    _
  // Predicated region
  $region26: #{bottleneck1_forward.5} parent=0 // pred_check
    _
  $region27: #{bottleneck1_forward.5} parent=0 // pred_check_branch
    %1290 = sbr.rel (0) target = $region29
  $region28: #{bottleneck1_forward.5} parent=0 // pred_region
    _
  $region29: #{bottleneck1_forward.5} parent=0 // pred_fallthru
    _
  // Predicated region
  $region30: #{bottleneck1_forward.5} parent=0 // pred_check
    _
  $region31: #{bottleneck1_forward.5} parent=0 // pred_check_branch
    %1292 = sbr.rel (0) target = $region33
  $region32: #{bottleneck1_forward.5} parent=0 // pred_region
    _
  $region33: #{bottleneck1_forward.5} parent=0 // pred_fallthru
    _

</llo_original>
